<compile_context>
chip_gen: v6e
topology: v6e:2x2x1
jax: 0.10.0
libtpu: 0.0.40
codegen_flags: <defaults>
</compile_context>

<pallas_src>
import functools
import math

import jax
import jax.numpy as jnp
from jax.experimental import pallas as pl
from jax.experimental.pallas import tpu as pltpu

LN_EPS = 1e-5          # torch.nn.LayerNorm default eps
LANE = 128             # TPU lane width
SUBLANE = 8            # f32 sublane tile
MAX_TILE_M = 256       # max batch tile

_SQRT_2_OVER_PI = 0.7978845608028654


def _round_up(x, m):
    return ((x + m - 1) // m) * m


def _cdiv(a, b):
    return -(-a // b)


def _default_elementwise_dtype():
    """bf16 LN/activation elementwise math on chips with bf16 VPU/EUP (v6e/v7x);
    f32 everywhere else (v5e and older have no bf16 VPU/EUP)."""
    try:
        kind = jax.devices()[0].device_kind.lower()
    except Exception:
        return jnp.float32
    if ("v6" in kind) or ("v7" in kind) or ("7x" in kind):
        return jnp.bfloat16
    return jnp.float32


# ----------------------------------------------------------------------------
# Shared LayerNorm + activation math (used by the kernel AND the reference)
# ----------------------------------------------------------------------------
def _ln_act(y, gamma, beta, d_true, activation, ew_dtype):
    """LayerNorm over the true (unpadded) width + activation.

    `y` is the f32 matmul accumulator (padded lanes exactly zero), so sum(y)
    and sum(y*y) are exact over the true width -> no mask needed.  Padded
    lanes of the normalized tensor become nonzero but are killed by
    gamma = beta = 0 in the padded lanes, so the zero-lane invariant holds."""
    inv_d = 1.0 / float(d_true)
    mean = jnp.sum(y, axis=-1, keepdims=True) * inv_d
    var = jnp.sum(y * y, axis=-1, keepdims=True) * inv_d - mean * mean
    inv_std = jax.lax.rsqrt(jnp.maximum(var, 0.0) + LN_EPS)
    # Elementwise chain in ew_dtype (bf16 on v6e/v7x): normalize, scale-shift, act.
    h = (y.astype(ew_dtype) - mean.astype(ew_dtype)) * inv_std.astype(ew_dtype)
    h = h * gamma.astype(ew_dtype) + beta.astype(ew_dtype)
    if activation == "relu":
        return jnp.maximum(h, 0.0)
    # tanh-approximate GELU -> tanh runs on the EUP slot (erf would be a long
    # VALU polynomial).  ~1e-3 deviation vs torch exact GELU.
    inner = _SQRT_2_OVER_PI * (h + 0.044715 * (h * h * h))
    return 0.5 * h * (1.0 + jnp.tanh(inner))


# ----------------------------------------------------------------------------
# Fused kernel
# ----------------------------------------------------------------------------
def _fused_forward_kernel(*refs, n_solver, n_enc, n_dec,
                          solver_meta, enc_meta, dec_meta, last_meta,
                          activation, compute_dtype, ew_dtype):
    it = iter(refs)
    par_ref = next(it)
    out_ref = next(it)
    solver_w = [next(it) for _ in range(n_solver)]
    enc_w = [next(it) for _ in range(n_enc)]
    dec_w = [next(it) for _ in range(n_dec)]
    w_last_ref = next(it)
    vecs_ref = next(it)          # packed (rows, max_pad) bias / gamma / beta
    solver_o_ref = next(it)
    enc_o_ref = next(it)
    dec_o_ref = next(it)

    def vec_row(row, d_pad):
        # Static (1, d_pad) slice of the packed vector table.
        return vecs_ref[row:row + 1, :d_pad]

    def mlp(h, w_refs, layer_meta):
        for w_ref, (row, d_true) in zip(w_refs, layer_meta):
            d_pad = w_ref.shape[1]
            y = jnp.dot(h.astype(compute_dtype), w_ref[...],
                        preferred_element_type=jnp.float32)
            y = y + vec_row(row, d_pad)                          # bias (f32)
            h = _ln_act(y, vec_row(row + 1, d_pad), vec_row(row + 2, d_pad),
                        d_true, activation, ew_dtype)
        return h

    # --- Solver branch -------------------------------------------------------
    h = mlp(par_ref[...].astype(jnp.float32), solver_w, solver_meta)
    solver_o_ref[...] = h.astype(solver_o_ref.dtype)

    # --- Encoder -------------------------------------------------------------
    h = mlp(out_ref[...].astype(jnp.float32), enc_w, enc_meta)
    enc_o_ref[...] = h.astype(enc_o_ref.dtype)

    # --- Decoder (reuses on-chip encoder output) -----------------------------
    h = mlp(h, dec_w, dec_meta)
    row_last, d_last_pad = last_meta
    y = jnp.dot(h.astype(compute_dtype), w_last_ref[...],
                preferred_element_type=jnp.float32)
    y = y + vec_row(row_last, d_last_pad)
    dec_o_ref[...] = y.astype(dec_o_ref.dtype)


# ----------------------------------------------------------------------------
# Parameters (torch.nn.Linear / LayerNorm init), pre-padded / transposed /
# packed so the kernel sees 9 weight matrices + 1 packed vector table.
# ----------------------------------------------------------------------------
def make_params(key, *, activation, L_enc_dec=2, L_l=4, dim_reduced=128, K=256,
                dim_1=39, dim_2=16, compute_dtype=jnp.bfloat16):
    d_flat = dim_1 * dim_2
    r = (dim_reduced / d_flat) ** (1.0 / L_enc_dec)
    ae_dims = [round(d_flat * r ** i) for i in range(L_enc_dec)] + [dim_reduced]

    solver_shapes = [((3 if i == 0 else K), K) for i in range(L_l)] + [(K, dim_reduced)]
    enc_shapes = [(ae_dims[i], ae_dims[i + 1]) for i in range(L_enc_dec)]
    dec_ln_shapes = [(ae_dims[L_enc_dec - i], ae_dims[L_enc_dec - i - 1])
                     for i in range(L_enc_dec - 1)]
    dec_last_shape = (ae_dims[1], ae_dims[0])

    ln_shapes = solver_shapes + enc_shapes + dec_ln_shapes
    max_pad = max(_round_up(do, LANE) for _, do in ln_shapes + [dec_last_shape])

    def linear(key, d_in, d_out):
        """torch.nn.Linear uniform init, stored transposed (d_in_pad, d_out_pad),
        zero-padded; weight cast to the MXU compute dtype, bias kept f32."""
        kw, kb = jax.random.split(key)
        bound = 1.0 / math.sqrt(d_in)
        di, do = _round_up(d_in, LANE), _round_up(d_out, LANE)
        w = jnp.zeros((di, do), jnp.float32).at[:d_in, :d_out].set(
            jax.random.uniform(kw, (d_in, d_out), jnp.float32, -bound, bound))
        b = jnp.zeros((max_pad,), jnp.float32).at[:d_out].set(
            jax.random.uniform(kb, (d_out,), jnp.float32, -bound, bound))
        return w.astype(compute_dtype), b

    weights = []      # 9 padded weight matrices
    vec_rows = []     # packed rows: [b, gamma, beta] per LN layer, + final bias
    meta_rows = []    # (row_base, d_out_true) per LN layer

    for d_in, d_out in ln_shapes:
        key, sub = jax.random.split(key)
        w, b = linear(sub, d_in, d_out)
        weights.append(w)
        meta_rows.append((len(vec_rows), d_out))
        gamma = jnp.zeros((max_pad,), jnp.float32).at[:d_out].set(1.0)
        beta = jnp.zeros((max_pad,), jnp.float32)
        vec_rows.extend([b, gamma, beta])

    key, sub = jax.random.split(key)
    w_last, b_last = linear(sub, *dec_last_shape)
    weights.append(w_last)
    last_row = len(vec_rows)
    vec_rows.append(b_last)

    n_rows_pad = _round_up(len(vec_rows), SUBLANE)
    vecs = jnp.zeros((n_rows_pad, max_pad), jnp.float32)
    vecs = vecs.at[:len(vec_rows), :].set(jnp.stack(vec_rows))

    n_sol, n_enc = len(solver_shapes), len(enc_shapes)
    meta = dict(
        solver_shapes=solver_shapes, enc_shapes=enc_shapes,
        dec_ln_shapes=dec_ln_shapes, dec_last_shape=dec_last_shape,
        solver_meta=tuple(meta_rows[:n_sol]),
        enc_meta=tuple(meta_rows[n_sol:n_sol + n_enc]),
        dec_meta=tuple(meta_rows[n_sol + n_enc:]),
        last_meta=(last_row, _round_up(dec_last_shape[1], LANE)),
        dim_1=dim_1, dim_2=dim_2, dim_reduced=dim_reduced,
        activation=activation, compute_dtype=compute_dtype)
    return dict(meta=meta, weights=weights, vecs=vecs)


# ----------------------------------------------------------------------------
# Forward pass wrapper (single fused pallas_call)
# ----------------------------------------------------------------------------
def fused_forward(par, out, params, *, elementwise_dtype=None):
    meta = params["meta"]
    dim_1, dim_2 = meta["dim_1"], meta["dim_2"]
    dim_reduced = meta["dim_reduced"]
    d_flat = dim_1 * dim_2
    d_flat_pad = _round_up(d_flat, LANE)
    d_par = meta["solver_shapes"][0][0]
    d_par_pad = _round_up(d_par, LANE)
    dr_pad = _round_up(dim_reduced, LANE)
    ew_dtype = elementwise_dtype or _default_elementwise_dtype()

    B = par.shape[0]
    # Batch tiling: minimal padding waste, and >=2 tiles whenever B_pad >= 16
    # so the "parallel" axis can shard across v7x's two TensorCores.
    B_pad = _round_up(max(B, SUBLANE), SUBLANE)
    n_m = _cdiv(B_pad, MAX_TILE_M)
    if B_pad >= 2 * SUBLANE:
        n_m = max(n_m, 2)
    tile_m = _round_up(_cdiv(B_pad, n_m), SUBLANE)
    B_pad = n_m * tile_m

    # Zero-pad batch to the tile boundary and features to lane multiples.
    par_p = jnp.zeros((B_pad, d_par_pad), jnp.float32).at[:B, :d_par].set(
        par.astype(jnp.float32))
    out_p = jnp.zeros((B_pad, d_flat_pad), jnp.float32).at[:B, :d_flat].set(
        out.reshape(B, d_flat).astype(jnp.float32))          # torch.nn.Flatten()

    flat_inputs = [par_p, out_p] + list(params["weights"]) + [params["vecs"]]

    kernel = functools.partial(
        _fused_forward_kernel,
        n_solver=len(meta["solver_shapes"]),
        n_enc=len(meta["enc_shapes"]),
        n_dec=len(meta["dec_ln_shapes"]),
        solver_meta=meta["solver_meta"], enc_meta=meta["enc_meta"],
        dec_meta=meta["dec_meta"], last_meta=meta["last_meta"],
        activation=meta["activation"],
        compute_dtype=meta["compute_dtype"],
        ew_dtype=ew_dtype)

    # Weights / packed vectors: constant block index -> DMA'd once, VMEM-resident
    # across batch tiles (Pallas skips re-fetch when the block index is unchanged).
    def _const_spec(a):
        return pl.BlockSpec(tuple(a.shape), lambda i: (0, 0))

    in_specs = [
        pl.BlockSpec((tile_m, d_par_pad), lambda i: (i, 0)),
        pl.BlockSpec((tile_m, d_flat_pad), lambda i: (i, 0)),
    ] + [_const_spec(a) for a in flat_inputs[2:]]

    out_specs = (
        pl.BlockSpec((tile_m, dr_pad), lambda i: (i, 0)),
        pl.BlockSpec((tile_m, dr_pad), lambda i: (i, 0)),
        pl.BlockSpec((tile_m, d_flat_pad), lambda i: (i, 0)),
    )
    out_shapes = (
        jax.ShapeDtypeStruct((B_pad, dr_pad), jnp.float32),      # solver output
        jax.ShapeDtypeStruct((B_pad, dr_pad), jnp.float32),      # encoder output
        jax.ShapeDtypeStruct((B_pad, d_flat_pad), jnp.float32),  # decoder output
    )

    # Advisory cost estimate for the XLA scheduler.
    all_shapes = (meta["solver_shapes"] + meta["enc_shapes"]
                  + meta["dec_ln_shapes"] + [meta["dec_last_shape"]])
    flops = 2 * B_pad * sum(_round_up(di, LANE) * _round_up(do, LANE)
                            for di, do in all_shapes)
    transc = B_pad * sum(_round_up(do, LANE) for _, do in all_shapes[:-1])
    in_bytes = sum(a.size * a.dtype.itemsize for a in flat_inputs)
    out_bytes = sum(math.prod(s.shape) * 4 for s in out_shapes)

    solver_o, enc_o, dec_o = pl.pallas_call(
        kernel,
        out_shape=out_shapes,
        grid=(n_m,),
        in_specs=in_specs,
        out_specs=out_specs,
        compiler_params=pltpu.CompilerParams(
            dimension_semantics=("parallel",)),   # batch tiles shard across TCs (v7x)
        cost_estimate=pl.CostEstimate(flops=flops, transcendentals=transc,
                                      bytes_accessed=in_bytes + out_bytes),
    )(*flat_inputs)

    # Strip padding; Unflatten(1, (dim_1, dim_2)) on the decoder output.
    solver_o = solver_o[:B, :dim_reduced]
    enc_o = enc_o[:B, :dim_reduced]
    dec_o = dec_o[:B, :d_flat].reshape(B, dim_1, dim_2)
    return solver_o, enc_o, dec_o


# ----------------------------------------------------------------------------
# Pure-JAX reference with identical math (same dtypes, tanh GELU, E[y^2] var)
# ----------------------------------------------------------------------------
def reference_forward(par, out, params, *, elementwise_dtype=None):
    meta = params["meta"]
    act = meta["activation"]
    cdt = meta["compute_dtype"]
    ew = elementwise_dtype or _default_elementwise_dtype()
    weights = params["weights"]
    vecs = params["vecs"]

    n_sol = len(meta["solver_shapes"])
    n_enc = len(meta["enc_shapes"])
    n_dec = len(meta["dec_ln_shapes"])
    w_sol = weights[:n_sol]
    w_enc = weights[n_sol:n_sol + n_enc]
    w_dec = weights[n_sol + n_enc:n_sol + n_enc + n_dec]
    w_last = weights[-1]

    def run(h, w_list, shapes, metas):
        for w, (d_in, d_out), (row, d_true) in zip(w_list, shapes, metas):
            y = jnp.dot(h.astype(cdt), w[:d_in, :d_out],
                        preferred_element_type=jnp.float32)
            y = y + vecs[row:row + 1, :d_out]
            h = _ln_act(y, vecs[row + 1:row + 2, :d_out],
                        vecs[row + 2:row + 3, :d_out], d_true, act, ew)
        return h

    B = par.shape[0]
    d_flat = meta["dim_1"] * meta["dim_2"]
    s = run(par.astype(jnp.float32), w_sol, meta["solver_shapes"], meta["solver_meta"])
    e = run(out.reshape(B, d_flat).astype(jnp.float32),
            w_enc, meta["enc_shapes"], meta["enc_meta"])
    h = run(e, w_dec, meta["dec_ln_shapes"], meta["dec_meta"])
    di, do = meta["dec_last_shape"]
    row_last, _ = meta["last_meta"]
    d = jnp.dot(h.astype(cdt), w_last[:di, :do],
                preferred_element_type=jnp.float32) + vecs[row_last:row_last + 1, :do]
    return (s.astype(jnp.float32), e.astype(jnp.float32),
            d.reshape(B, meta["dim_1"], meta["dim_2"]))


if __name__ == "__main__":
    # Module hyper-parameters (PyTorch defaults of SolverPlusMLPAutoencoder).
    ACTIVATION = "gelu"
    L_ENC_DEC = 2
    L_L = 4
    DIM_REDUCED = 128
    K = 256
    DIM_1, DIM_2 = 39, 16
    BATCH = 4

    key = jax.random.PRNGKey(0)
    k_params, k_par, k_out = jax.random.split(key, 3)

    params = make_params(k_params, activation=ACTIVATION, L_enc_dec=L_ENC_DEC,
                         L_l=L_L, dim_reduced=DIM_REDUCED, K=K,
                         dim_1=DIM_1, dim_2=DIM_2)

    par = jax.random.normal(k_par, (BATCH, 3), jnp.float32)             # solver input
    out = jax.random.normal(k_out, (BATCH, DIM_1, DIM_2), jnp.float32)  # AE input

    fwd = jax.jit(lambda p, o: fused_forward(p, o, params))
    solver_o, enc_o, dec_o = fwd(par, out)
    jax.block_until_ready((solver_o, enc_o, dec_o))

    assert solver_o.shape == (BATCH, DIM_REDUCED)
    assert enc_o.shape == (BATCH, DIM_REDUCED)
    assert dec_o.shape == (BATCH, DIM_1, DIM_2)

    # Numerical sanity check against a pure-JAX reference with identical math.
    ref_s, ref_e, ref_d = reference_forward(par, out, params)
    for got, ref in ((solver_o, ref_s), (enc_o, ref_e), (dec_o, ref_d)):
        err = float(jnp.max(jnp.abs(got.astype(jnp.float32) - ref)))
        assert err < 5e-2, f"max abs error {err}"

    print("KERNEL_OK")
</pallas_src>

<mosaic_0001>
module attributes {stable_mosaic.version = 11 : i64} {
  func.func @_fused_forward_kernel(%arg0: i32, %arg1: memref<8x128xf32, #tpu.memory_space<vmem>>, %arg2: memref<8x640xf32, #tpu.memory_space<vmem>>, %arg3: memref<128x256xbf16, #tpu.memory_space<vmem>>, %arg4: memref<256x256xbf16, #tpu.memory_space<vmem>>, %arg5: memref<256x256xbf16, #tpu.memory_space<vmem>>, %arg6: memref<256x256xbf16, #tpu.memory_space<vmem>>, %arg7: memref<256x128xbf16, #tpu.memory_space<vmem>>, %arg8: memref<640x384xbf16, #tpu.memory_space<vmem>>, %arg9: memref<384x128xbf16, #tpu.memory_space<vmem>>, %arg10: memref<128x384xbf16, #tpu.memory_space<vmem>>, %arg11: memref<384x640xbf16, #tpu.memory_space<vmem>>, %arg12: memref<32x640xf32, #tpu.memory_space<vmem>>, %arg13: memref<8x128xf32, #tpu.memory_space<vmem>>, %arg14: memref<8x128xf32, #tpu.memory_space<vmem>>, %arg15: memref<8x640xf32, #tpu.memory_space<vmem>>) attributes {dimension_semantics = [#tpu.dimension_semantics<parallel>], iteration_bounds = array<i64: 1>, scalar_prefetch = 0 : i64, scratch_operands = 0 : i64, tpu.core_type = #tpu.core_type<tc>, window_params = [{transform_indices = @transform_0, window_bounds = array<i64: 8, 128>}, {transform_indices = @transform_1, window_bounds = array<i64: 8, 640>}, {pipeline_mode = #tpu.pipeline_mode<synchronous>, transform_indices = @transform_2, window_bounds = array<i64: 128, 256>}, {pipeline_mode = #tpu.pipeline_mode<synchronous>, transform_indices = @transform_3, window_bounds = array<i64: 256, 256>}, {pipeline_mode = #tpu.pipeline_mode<synchronous>, transform_indices = @transform_4, window_bounds = array<i64: 256, 256>}, {pipeline_mode = #tpu.pipeline_mode<synchronous>, transform_indices = @transform_5, window_bounds = array<i64: 256, 256>}, {pipeline_mode = #tpu.pipeline_mode<synchronous>, transform_indices = @transform_6, window_bounds = array<i64: 256, 128>}, {pipeline_mode = #tpu.pipeline_mode<synchronous>, transform_indices = @transform_7, window_bounds = array<i64: 640, 384>}, {pipeline_mode = #tpu.pipeline_mode<synchronous>, transform_indices = @transform_8, window_bounds = array<i64: 384, 128>}, {pipeline_mode = #tpu.pipeline_mode<synchronous>, transform_indices = @transform_9, window_bounds = array<i64: 128, 384>}, {pipeline_mode = #tpu.pipeline_mode<synchronous>, transform_indices = @transform_10, window_bounds = array<i64: 384, 640>}, {pipeline_mode = #tpu.pipeline_mode<synchronous>, transform_indices = @transform_11, window_bounds = array<i64: 32, 640>}, {transform_indices = @transform_12, window_bounds = array<i64: 8, 128>}, {transform_indices = @transform_13, window_bounds = array<i64: 8, 128>}, {transform_indices = @transform_14, window_bounds = array<i64: 8, 640>}]} {
    %c0 = arith.constant 0 : index
    %c0_0 = arith.constant 0 : index
    %0 = vector.load %arg1[%c0, %c0_0] : memref<8x128xf32, #tpu.memory_space<vmem>>, vector<8x128xf32>
    %1 = arith.truncf %0 : vector<8x128xf32> to vector<8x128xbf16>
    %c0_1 = arith.constant 0 : index
    %c0_2 = arith.constant 0 : index
    %2 = vector.load %arg3[%c0_1, %c0_2] : memref<128x256xbf16, #tpu.memory_space<vmem>>, vector<128x256xbf16>
    %cst = arith.constant dense<0.000000e+00> : vector<8x256xf32>
    %3 = tpu.matmul %1, %2, %cst {dimension_numbers = #tpu.dot_dimension_numbers<[1], [0], [0], [1], [0, 0, 1, 1], [], []>} : vector<8x128xbf16>, vector<128x256xbf16>, vector<8x256xf32> -> vector<8x256xf32>
    %c0_3 = arith.constant 0 : index
    %c0_4 = arith.constant 0 : index
    %4 = vector.load %arg12[%c0_3, %c0_4] : memref<32x640xf32, #tpu.memory_space<vmem>>, vector<1x256xf32>
    %5 = vector.broadcast %4 : vector<1x256xf32> to vector<8x256xf32>
    %6 = arith.addf %3, %5 : vector<8x256xf32>
    %c1 = arith.constant 1 : index
    %c0_5 = arith.constant 0 : index
    %7 = vector.load %arg12[%c1, %c0_5] : memref<32x640xf32, #tpu.memory_space<vmem>>, vector<1x256xf32>
    %c2 = arith.constant 2 : index
    %c0_6 = arith.constant 0 : index
    %8 = vector.load %arg12[%c2, %c0_6] : memref<32x640xf32, #tpu.memory_space<vmem>>, vector<1x256xf32>
    %cst_7 = arith.constant dense<0.000000e+00> : vector<8xf32>
    %9 = vector.multi_reduction <add>, %6, %cst_7 [1] : vector<8x256xf32> to vector<8xf32>
    %10 = vector.shape_cast %9 : vector<8xf32> to vector<8x1xf32>
    %cst_8 = arith.constant 3.906250e-03 : f32
    %11 = vector.broadcast %cst_8 : f32 to vector<8x1xf32>
    %12 = arith.mulf %10, %11 : vector<8x1xf32>
    %13 = arith.mulf %6, %6 : vector<8x256xf32>
    %cst_9 = arith.constant dense<0.000000e+00> : vector<8xf32>
    %14 = vector.multi_reduction <add>, %13, %cst_9 [1] : vector<8x256xf32> to vector<8xf32>
    %15 = vector.shape_cast %14 : vector<8xf32> to vector<8x1xf32>
    %cst_10 = arith.constant 3.906250e-03 : f32
    %16 = vector.broadcast %cst_10 : f32 to vector<8x1xf32>
    %17 = arith.mulf %15, %16 : vector<8x1xf32>
    %18 = arith.mulf %12, %12 : vector<8x1xf32>
    %19 = arith.subf %17, %18 : vector<8x1xf32>
    %cst_11 = arith.constant 0.000000e+00 : f32
    %20 = vector.broadcast %cst_11 : f32 to vector<8x1xf32>
    %21 = arith.maximumf %19, %20 : vector<8x1xf32>
    %cst_12 = arith.constant 9.99999974E-6 : f32
    %22 = vector.broadcast %cst_12 : f32 to vector<8x1xf32>
    %23 = arith.addf %21, %22 : vector<8x1xf32>
    %24 = math.rsqrt %23 : vector<8x1xf32>
    %25 = vector.broadcast %12 : vector<8x1xf32> to vector<8x256xf32>
    %26 = arith.subf %6, %25 : vector<8x256xf32>
    %27 = vector.broadcast %24 : vector<8x1xf32> to vector<8x256xf32>
    %28 = arith.mulf %26, %27 : vector<8x256xf32>
    %29 = vector.broadcast %7 : vector<1x256xf32> to vector<8x256xf32>
    %30 = arith.mulf %28, %29 : vector<8x256xf32>
    %31 = vector.broadcast %8 : vector<1x256xf32> to vector<8x256xf32>
    %32 = arith.addf %30, %31 : vector<8x256xf32>
    %33 = arith.mulf %32, %32 : vector<8x256xf32>
    %34 = arith.mulf %33, %32 : vector<8x256xf32>
    %cst_13 = arith.constant 4.471500e-02 : f32
    %35 = vector.broadcast %cst_13 : f32 to vector<8x256xf32>
    %36 = arith.mulf %35, %34 : vector<8x256xf32>
    %37 = arith.addf %32, %36 : vector<8x256xf32>
    %cst_14 = arith.constant 0.797884583 : f32
    %38 = vector.broadcast %cst_14 : f32 to vector<8x256xf32>
    %39 = arith.mulf %38, %37 : vector<8x256xf32>
    %cst_15 = arith.constant 5.000000e-01 : f32
    %40 = vector.broadcast %cst_15 : f32 to vector<8x256xf32>
    %41 = arith.mulf %40, %32 : vector<8x256xf32>
    %42 = math.tanh %39 : vector<8x256xf32>
    %cst_16 = arith.constant 1.000000e+00 : f32
    %43 = vector.broadcast %cst_16 : f32 to vector<8x256xf32>
    %44 = arith.addf %43, %42 : vector<8x256xf32>
    %45 = arith.mulf %41, %44 : vector<8x256xf32>
    %46 = arith.truncf %45 : vector<8x256xf32> to vector<8x256xbf16>
    %c0_17 = arith.constant 0 : index
    %c0_18 = arith.constant 0 : index
    %47 = vector.load %arg4[%c0_17, %c0_18] : memref<256x256xbf16, #tpu.memory_space<vmem>>, vector<256x256xbf16>
    %cst_19 = arith.constant dense<0.000000e+00> : vector<8x256xf32>
    %48 = tpu.matmul %46, %47, %cst_19 {dimension_numbers = #tpu.dot_dimension_numbers<[1], [0], [0], [1], [0, 0, 1, 1], [], []>} : vector<8x256xbf16>, vector<256x256xbf16>, vector<8x256xf32> -> vector<8x256xf32>
    %c3 = arith.constant 3 : index
    %c0_20 = arith.constant 0 : index
    %49 = vector.load %arg12[%c3, %c0_20] : memref<32x640xf32, #tpu.memory_space<vmem>>, vector<1x256xf32>
    %50 = vector.broadcast %49 : vector<1x256xf32> to vector<8x256xf32>
    %51 = arith.addf %48, %50 : vector<8x256xf32>
    %c4 = arith.constant 4 : index
    %c0_21 = arith.constant 0 : index
    %52 = vector.load %arg12[%c4, %c0_21] : memref<32x640xf32, #tpu.memory_space<vmem>>, vector<1x256xf32>
    %c5 = arith.constant 5 : index
    %c0_22 = arith.constant 0 : index
    %53 = vector.load %arg12[%c5, %c0_22] : memref<32x640xf32, #tpu.memory_space<vmem>>, vector<1x256xf32>
    %cst_23 = arith.constant dense<0.000000e+00> : vector<8xf32>
    %54 = vector.multi_reduction <add>, %51, %cst_23 [1] : vector<8x256xf32> to vector<8xf32>
    %55 = vector.shape_cast %54 : vector<8xf32> to vector<8x1xf32>
    %cst_24 = arith.constant 3.906250e-03 : f32
    %56 = vector.broadcast %cst_24 : f32 to vector<8x1xf32>
    %57 = arith.mulf %55, %56 : vector<8x1xf32>
    %58 = arith.mulf %51, %51 : vector<8x256xf32>
    %cst_25 = arith.constant dense<0.000000e+00> : vector<8xf32>
    %59 = vector.multi_reduction <add>, %58, %cst_25 [1] : vector<8x256xf32> to vector<8xf32>
    %60 = vector.shape_cast %59 : vector<8xf32> to vector<8x1xf32>
    %cst_26 = arith.constant 3.906250e-03 : f32
    %61 = vector.broadcast %cst_26 : f32 to vector<8x1xf32>
    %62 = arith.mulf %60, %61 : vector<8x1xf32>
    %63 = arith.mulf %57, %57 : vector<8x1xf32>
    %64 = arith.subf %62, %63 : vector<8x1xf32>
    %cst_27 = arith.constant 0.000000e+00 : f32
    %65 = vector.broadcast %cst_27 : f32 to vector<8x1xf32>
    %66 = arith.maximumf %64, %65 : vector<8x1xf32>
    %cst_28 = arith.constant 9.99999974E-6 : f32
    %67 = vector.broadcast %cst_28 : f32 to vector<8x1xf32>
    %68 = arith.addf %66, %67 : vector<8x1xf32>
    %69 = math.rsqrt %68 : vector<8x1xf32>
    %70 = vector.broadcast %57 : vector<8x1xf32> to vector<8x256xf32>
    %71 = arith.subf %51, %70 : vector<8x256xf32>
    %72 = vector.broadcast %69 : vector<8x1xf32> to vector<8x256xf32>
    %73 = arith.mulf %71, %72 : vector<8x256xf32>
    %74 = vector.broadcast %52 : vector<1x256xf32> to vector<8x256xf32>
    %75 = arith.mulf %73, %74 : vector<8x256xf32>
    %76 = vector.broadcast %53 : vector<1x256xf32> to vector<8x256xf32>
    %77 = arith.addf %75, %76 : vector<8x256xf32>
    %78 = arith.mulf %77, %77 : vector<8x256xf32>
    %79 = arith.mulf %78, %77 : vector<8x256xf32>
    %cst_29 = arith.constant 4.471500e-02 : f32
    %80 = vector.broadcast %cst_29 : f32 to vector<8x256xf32>
    %81 = arith.mulf %80, %79 : vector<8x256xf32>
    %82 = arith.addf %77, %81 : vector<8x256xf32>
    %cst_30 = arith.constant 0.797884583 : f32
    %83 = vector.broadcast %cst_30 : f32 to vector<8x256xf32>
    %84 = arith.mulf %83, %82 : vector<8x256xf32>
    %cst_31 = arith.constant 5.000000e-01 : f32
    %85 = vector.broadcast %cst_31 : f32 to vector<8x256xf32>
    %86 = arith.mulf %85, %77 : vector<8x256xf32>
    %87 = math.tanh %84 : vector<8x256xf32>
    %cst_32 = arith.constant 1.000000e+00 : f32
    %88 = vector.broadcast %cst_32 : f32 to vector<8x256xf32>
    %89 = arith.addf %88, %87 : vector<8x256xf32>
    %90 = arith.mulf %86, %89 : vector<8x256xf32>
    %91 = arith.truncf %90 : vector<8x256xf32> to vector<8x256xbf16>
    %c0_33 = arith.constant 0 : index
    %c0_34 = arith.constant 0 : index
    %92 = vector.load %arg5[%c0_33, %c0_34] : memref<256x256xbf16, #tpu.memory_space<vmem>>, vector<256x256xbf16>
    %cst_35 = arith.constant dense<0.000000e+00> : vector<8x256xf32>
    %93 = tpu.matmul %91, %92, %cst_35 {dimension_numbers = #tpu.dot_dimension_numbers<[1], [0], [0], [1], [0, 0, 1, 1], [], []>} : vector<8x256xbf16>, vector<256x256xbf16>, vector<8x256xf32> -> vector<8x256xf32>
    %c6 = arith.constant 6 : index
    %c0_36 = arith.constant 0 : index
    %94 = vector.load %arg12[%c6, %c0_36] : memref<32x640xf32, #tpu.memory_space<vmem>>, vector<1x256xf32>
    %95 = vector.broadcast %94 : vector<1x256xf32> to vector<8x256xf32>
    %96 = arith.addf %93, %95 : vector<8x256xf32>
    %c7 = arith.constant 7 : index
    %c0_37 = arith.constant 0 : index
    %97 = vector.load %arg12[%c7, %c0_37] : memref<32x640xf32, #tpu.memory_space<vmem>>, vector<1x256xf32>
    %c8 = arith.constant 8 : index
    %c0_38 = arith.constant 0 : index
    %98 = vector.load %arg12[%c8, %c0_38] : memref<32x640xf32, #tpu.memory_space<vmem>>, vector<1x256xf32>
    %cst_39 = arith.constant dense<0.000000e+00> : vector<8xf32>
    %99 = vector.multi_reduction <add>, %96, %cst_39 [1] : vector<8x256xf32> to vector<8xf32>
    %100 = vector.shape_cast %99 : vector<8xf32> to vector<8x1xf32>
    %cst_40 = arith.constant 3.906250e-03 : f32
    %101 = vector.broadcast %cst_40 : f32 to vector<8x1xf32>
    %102 = arith.mulf %100, %101 : vector<8x1xf32>
    %103 = arith.mulf %96, %96 : vector<8x256xf32>
    %cst_41 = arith.constant dense<0.000000e+00> : vector<8xf32>
    %104 = vector.multi_reduction <add>, %103, %cst_41 [1] : vector<8x256xf32> to vector<8xf32>
    %105 = vector.shape_cast %104 : vector<8xf32> to vector<8x1xf32>
    %cst_42 = arith.constant 3.906250e-03 : f32
    %106 = vector.broadcast %cst_42 : f32 to vector<8x1xf32>
    %107 = arith.mulf %105, %106 : vector<8x1xf32>
    %108 = arith.mulf %102, %102 : vector<8x1xf32>
    %109 = arith.subf %107, %108 : vector<8x1xf32>
    %cst_43 = arith.constant 0.000000e+00 : f32
    %110 = vector.broadcast %cst_43 : f32 to vector<8x1xf32>
    %111 = arith.maximumf %109, %110 : vector<8x1xf32>
    %cst_44 = arith.constant 9.99999974E-6 : f32
    %112 = vector.broadcast %cst_44 : f32 to vector<8x1xf32>
    %113 = arith.addf %111, %112 : vector<8x1xf32>
    %114 = math.rsqrt %113 : vector<8x1xf32>
    %115 = vector.broadcast %102 : vector<8x1xf32> to vector<8x256xf32>
    %116 = arith.subf %96, %115 : vector<8x256xf32>
    %117 = vector.broadcast %114 : vector<8x1xf32> to vector<8x256xf32>
    %118 = arith.mulf %116, %117 : vector<8x256xf32>
    %119 = vector.broadcast %97 : vector<1x256xf32> to vector<8x256xf32>
    %120 = arith.mulf %118, %119 : vector<8x256xf32>
    %121 = vector.broadcast %98 : vector<1x256xf32> to vector<8x256xf32>
    %122 = arith.addf %120, %121 : vector<8x256xf32>
    %123 = arith.mulf %122, %122 : vector<8x256xf32>
    %124 = arith.mulf %123, %122 : vector<8x256xf32>
    %cst_45 = arith.constant 4.471500e-02 : f32
    %125 = vector.broadcast %cst_45 : f32 to vector<8x256xf32>
    %126 = arith.mulf %125, %124 : vector<8x256xf32>
    %127 = arith.addf %122, %126 : vector<8x256xf32>
    %cst_46 = arith.constant 0.797884583 : f32
    %128 = vector.broadcast %cst_46 : f32 to vector<8x256xf32>
    %129 = arith.mulf %128, %127 : vector<8x256xf32>
    %cst_47 = arith.constant 5.000000e-01 : f32
    %130 = vector.broadcast %cst_47 : f32 to vector<8x256xf32>
    %131 = arith.mulf %130, %122 : vector<8x256xf32>
    %132 = math.tanh %129 : vector<8x256xf32>
    %cst_48 = arith.constant 1.000000e+00 : f32
    %133 = vector.broadcast %cst_48 : f32 to vector<8x256xf32>
    %134 = arith.addf %133, %132 : vector<8x256xf32>
    %135 = arith.mulf %131, %134 : vector<8x256xf32>
    %136 = arith.truncf %135 : vector<8x256xf32> to vector<8x256xbf16>
    %c0_49 = arith.constant 0 : index
    %c0_50 = arith.constant 0 : index
    %137 = vector.load %arg6[%c0_49, %c0_50] : memref<256x256xbf16, #tpu.memory_space<vmem>>, vector<256x256xbf16>
    %cst_51 = arith.constant dense<0.000000e+00> : vector<8x256xf32>
    %138 = tpu.matmul %136, %137, %cst_51 {dimension_numbers = #tpu.dot_dimension_numbers<[1], [0], [0], [1], [0, 0, 1, 1], [], []>} : vector<8x256xbf16>, vector<256x256xbf16>, vector<8x256xf32> -> vector<8x256xf32>
    %c9 = arith.constant 9 : index
    %c0_52 = arith.constant 0 : index
    %139 = vector.load %arg12[%c9, %c0_52] : memref<32x640xf32, #tpu.memory_space<vmem>>, vector<1x256xf32>
    %140 = vector.broadcast %139 : vector<1x256xf32> to vector<8x256xf32>
    %141 = arith.addf %138, %140 : vector<8x256xf32>
    %c10 = arith.constant 10 : index
    %c0_53 = arith.constant 0 : index
    %142 = vector.load %arg12[%c10, %c0_53] : memref<32x640xf32, #tpu.memory_space<vmem>>, vector<1x256xf32>
    %c11 = arith.constant 11 : index
    %c0_54 = arith.constant 0 : index
    %143 = vector.load %arg12[%c11, %c0_54] : memref<32x640xf32, #tpu.memory_space<vmem>>, vector<1x256xf32>
    %cst_55 = arith.constant dense<0.000000e+00> : vector<8xf32>
    %144 = vector.multi_reduction <add>, %141, %cst_55 [1] : vector<8x256xf32> to vector<8xf32>
    %145 = vector.shape_cast %144 : vector<8xf32> to vector<8x1xf32>
    %cst_56 = arith.constant 3.906250e-03 : f32
    %146 = vector.broadcast %cst_56 : f32 to vector<8x1xf32>
    %147 = arith.mulf %145, %146 : vector<8x1xf32>
    %148 = arith.mulf %141, %141 : vector<8x256xf32>
    %cst_57 = arith.constant dense<0.000000e+00> : vector<8xf32>
    %149 = vector.multi_reduction <add>, %148, %cst_57 [1] : vector<8x256xf32> to vector<8xf32>
    %150 = vector.shape_cast %149 : vector<8xf32> to vector<8x1xf32>
    %cst_58 = arith.constant 3.906250e-03 : f32
    %151 = vector.broadcast %cst_58 : f32 to vector<8x1xf32>
    %152 = arith.mulf %150, %151 : vector<8x1xf32>
    %153 = arith.mulf %147, %147 : vector<8x1xf32>
    %154 = arith.subf %152, %153 : vector<8x1xf32>
    %cst_59 = arith.constant 0.000000e+00 : f32
    %155 = vector.broadcast %cst_59 : f32 to vector<8x1xf32>
    %156 = arith.maximumf %154, %155 : vector<8x1xf32>
    %cst_60 = arith.constant 9.99999974E-6 : f32
    %157 = vector.broadcast %cst_60 : f32 to vector<8x1xf32>
    %158 = arith.addf %156, %157 : vector<8x1xf32>
    %159 = math.rsqrt %158 : vector<8x1xf32>
    %160 = vector.broadcast %147 : vector<8x1xf32> to vector<8x256xf32>
    %161 = arith.subf %141, %160 : vector<8x256xf32>
    %162 = vector.broadcast %159 : vector<8x1xf32> to vector<8x256xf32>
    %163 = arith.mulf %161, %162 : vector<8x256xf32>
    %164 = vector.broadcast %142 : vector<1x256xf32> to vector<8x256xf32>
    %165 = arith.mulf %163, %164 : vector<8x256xf32>
    %166 = vector.broadcast %143 : vector<1x256xf32> to vector<8x256xf32>
    %167 = arith.addf %165, %166 : vector<8x256xf32>
    %168 = arith.mulf %167, %167 : vector<8x256xf32>
    %169 = arith.mulf %168, %167 : vector<8x256xf32>
    %cst_61 = arith.constant 4.471500e-02 : f32
    %170 = vector.broadcast %cst_61 : f32 to vector<8x256xf32>
    %171 = arith.mulf %170, %169 : vector<8x256xf32>
    %172 = arith.addf %167, %171 : vector<8x256xf32>
    %cst_62 = arith.constant 0.797884583 : f32
    %173 = vector.broadcast %cst_62 : f32 to vector<8x256xf32>
    %174 = arith.mulf %173, %172 : vector<8x256xf32>
    %cst_63 = arith.constant 5.000000e-01 : f32
    %175 = vector.broadcast %cst_63 : f32 to vector<8x256xf32>
    %176 = arith.mulf %175, %167 : vector<8x256xf32>
    %177 = math.tanh %174 : vector<8x256xf32>
    %cst_64 = arith.constant 1.000000e+00 : f32
    %178 = vector.broadcast %cst_64 : f32 to vector<8x256xf32>
    %179 = arith.addf %178, %177 : vector<8x256xf32>
    %180 = arith.mulf %176, %179 : vector<8x256xf32>
    %181 = arith.truncf %180 : vector<8x256xf32> to vector<8x256xbf16>
    %c0_65 = arith.constant 0 : index
    %c0_66 = arith.constant 0 : index
    %182 = vector.load %arg7[%c0_65, %c0_66] : memref<256x128xbf16, #tpu.memory_space<vmem>>, vector<256x128xbf16>
    %cst_67 = arith.constant dense<0.000000e+00> : vector<8x128xf32>
    %183 = tpu.matmul %181, %182, %cst_67 {dimension_numbers = #tpu.dot_dimension_numbers<[1], [0], [0], [1], [0, 0, 1, 1], [], []>} : vector<8x256xbf16>, vector<256x128xbf16>, vector<8x128xf32> -> vector<8x128xf32>
    %c12 = arith.constant 12 : index
    %c0_68 = arith.constant 0 : index
    %184 = vector.load %arg12[%c12, %c0_68] : memref<32x640xf32, #tpu.memory_space<vmem>>, vector<1x128xf32>
    %185 = vector.broadcast %184 : vector<1x128xf32> to vector<8x128xf32>
    %186 = arith.addf %183, %185 : vector<8x128xf32>
    %c13 = arith.constant 13 : index
    %c0_69 = arith.constant 0 : index
    %187 = vector.load %arg12[%c13, %c0_69] : memref<32x640xf32, #tpu.memory_space<vmem>>, vector<1x128xf32>
    %c14 = arith.constant 14 : index
    %c0_70 = arith.constant 0 : index
    %188 = vector.load %arg12[%c14, %c0_70] : memref<32x640xf32, #tpu.memory_space<vmem>>, vector<1x128xf32>
    %cst_71 = arith.constant dense<0.000000e+00> : vector<8xf32>
    %189 = vector.multi_reduction <add>, %186, %cst_71 [1] : vector<8x128xf32> to vector<8xf32>
    %190 = vector.shape_cast %189 : vector<8xf32> to vector<8x1xf32>
    %cst_72 = arith.constant 7.812500e-03 : f32
    %191 = vector.broadcast %cst_72 : f32 to vector<8x1xf32>
    %192 = arith.mulf %190, %191 : vector<8x1xf32>
    %193 = arith.mulf %186, %186 : vector<8x128xf32>
    %cst_73 = arith.constant dense<0.000000e+00> : vector<8xf32>
    %194 = vector.multi_reduction <add>, %193, %cst_73 [1] : vector<8x128xf32> to vector<8xf32>
    %195 = vector.shape_cast %194 : vector<8xf32> to vector<8x1xf32>
    %cst_74 = arith.constant 7.812500e-03 : f32
    %196 = vector.broadcast %cst_74 : f32 to vector<8x1xf32>
    %197 = arith.mulf %195, %196 : vector<8x1xf32>
    %198 = arith.mulf %192, %192 : vector<8x1xf32>
    %199 = arith.subf %197, %198 : vector<8x1xf32>
    %cst_75 = arith.constant 0.000000e+00 : f32
    %200 = vector.broadcast %cst_75 : f32 to vector<8x1xf32>
    %201 = arith.maximumf %199, %200 : vector<8x1xf32>
    %cst_76 = arith.constant 9.99999974E-6 : f32
    %202 = vector.broadcast %cst_76 : f32 to vector<8x1xf32>
    %203 = arith.addf %201, %202 : vector<8x1xf32>
    %204 = math.rsqrt %203 : vector<8x1xf32>
    %205 = vector.broadcast %192 : vector<8x1xf32> to vector<8x128xf32>
    %206 = arith.subf %186, %205 : vector<8x128xf32>
    %207 = vector.broadcast %204 : vector<8x1xf32> to vector<8x128xf32>
    %208 = arith.mulf %206, %207 : vector<8x128xf32>
    %209 = vector.broadcast %187 : vector<1x128xf32> to vector<8x128xf32>
    %210 = arith.mulf %208, %209 : vector<8x128xf32>
    %211 = vector.broadcast %188 : vector<1x128xf32> to vector<8x128xf32>
    %212 = arith.addf %210, %211 : vector<8x128xf32>
    %213 = arith.mulf %212, %212 : vector<8x128xf32>
    %214 = arith.mulf %213, %212 : vector<8x128xf32>
    %cst_77 = arith.constant 4.471500e-02 : f32
    %215 = vector.broadcast %cst_77 : f32 to vector<8x128xf32>
    %216 = arith.mulf %215, %214 : vector<8x128xf32>
    %217 = arith.addf %212, %216 : vector<8x128xf32>
    %cst_78 = arith.constant 0.797884583 : f32
    %218 = vector.broadcast %cst_78 : f32 to vector<8x128xf32>
    %219 = arith.mulf %218, %217 : vector<8x128xf32>
    %cst_79 = arith.constant 5.000000e-01 : f32
    %220 = vector.broadcast %cst_79 : f32 to vector<8x128xf32>
    %221 = arith.mulf %220, %212 : vector<8x128xf32>
    %222 = math.tanh %219 : vector<8x128xf32>
    %cst_80 = arith.constant 1.000000e+00 : f32
    %223 = vector.broadcast %cst_80 : f32 to vector<8x128xf32>
    %224 = arith.addf %223, %222 : vector<8x128xf32>
    %225 = arith.mulf %221, %224 : vector<8x128xf32>
    %c0_81 = arith.constant 0 : index
    %c0_82 = arith.constant 0 : index
    %226 = vector.load %arg13[%c0_81, %c0_82] : memref<8x128xf32, #tpu.memory_space<vmem>>, vector<8x128xf32>
    tpu.vector_store %arg13[%c0_81, %c0_82], %225 {strides = array<i32>} : memref<8x128xf32, #tpu.memory_space<vmem>>, vector<8x128xf32>,
    %c0_83 = arith.constant 0 : index
    %c0_84 = arith.constant 0 : index
    %227 = vector.load %arg2[%c0_83, %c0_84] : memref<8x640xf32, #tpu.memory_space<vmem>>, vector<8x640xf32>
    %228 = arith.truncf %227 : vector<8x640xf32> to vector<8x640xbf16>
    %c0_85 = arith.constant 0 : index
    %c0_86 = arith.constant 0 : index
    %229 = vector.load %arg8[%c0_85, %c0_86] : memref<640x384xbf16, #tpu.memory_space<vmem>>, vector<640x384xbf16>
    %cst_87 = arith.constant dense<0.000000e+00> : vector<8x384xf32>
    %230 = tpu.matmul %228, %229, %cst_87 {dimension_numbers = #tpu.dot_dimension_numbers<[1], [0], [0], [1], [0, 0, 1, 1], [], []>} : vector<8x640xbf16>, vector<640x384xbf16>, vector<8x384xf32> -> vector<8x384xf32>
    %c15 = arith.constant 15 : index
    %c0_88 = arith.constant 0 : index
    %231 = vector.load %arg12[%c15, %c0_88] : memref<32x640xf32, #tpu.memory_space<vmem>>, vector<1x384xf32>
    %232 = vector.broadcast %231 : vector<1x384xf32> to vector<8x384xf32>
    %233 = arith.addf %230, %232 : vector<8x384xf32>
    %c16 = arith.constant 16 : index
    %c0_89 = arith.constant 0 : index
    %234 = vector.load %arg12[%c16, %c0_89] : memref<32x640xf32, #tpu.memory_space<vmem>>, vector<1x384xf32>
    %c17 = arith.constant 17 : index
    %c0_90 = arith.constant 0 : index
    %235 = vector.load %arg12[%c17, %c0_90] : memref<32x640xf32, #tpu.memory_space<vmem>>, vector<1x384xf32>
    %cst_91 = arith.constant dense<0.000000e+00> : vector<8xf32>
    %236 = vector.multi_reduction <add>, %233, %cst_91 [1] : vector<8x384xf32> to vector<8xf32>
    %237 = vector.shape_cast %236 : vector<8xf32> to vector<8x1xf32>
    %cst_92 = arith.constant 0.00353356893 : f32
    %238 = vector.broadcast %cst_92 : f32 to vector<8x1xf32>
    %239 = arith.mulf %237, %238 : vector<8x1xf32>
    %240 = arith.mulf %233, %233 : vector<8x384xf32>
    %cst_93 = arith.constant dense<0.000000e+00> : vector<8xf32>
    %241 = vector.multi_reduction <add>, %240, %cst_93 [1] : vector<8x384xf32> to vector<8xf32>
    %242 = vector.shape_cast %241 : vector<8xf32> to vector<8x1xf32>
    %cst_94 = arith.constant 0.00353356893 : f32
    %243 = vector.broadcast %cst_94 : f32 to vector<8x1xf32>
    %244 = arith.mulf %242, %243 : vector<8x1xf32>
    %245 = arith.mulf %239, %239 : vector<8x1xf32>
    %246 = arith.subf %244, %245 : vector<8x1xf32>
    %cst_95 = arith.constant 0.000000e+00 : f32
    %247 = vector.broadcast %cst_95 : f32 to vector<8x1xf32>
    %248 = arith.maximumf %246, %247 : vector<8x1xf32>
    %cst_96 = arith.constant 9.99999974E-6 : f32
    %249 = vector.broadcast %cst_96 : f32 to vector<8x1xf32>
    %250 = arith.addf %248, %249 : vector<8x1xf32>
    %251 = math.rsqrt %250 : vector<8x1xf32>
    %252 = vector.broadcast %239 : vector<8x1xf32> to vector<8x384xf32>
    %253 = arith.subf %233, %252 : vector<8x384xf32>
    %254 = vector.broadcast %251 : vector<8x1xf32> to vector<8x384xf32>
    %255 = arith.mulf %253, %254 : vector<8x384xf32>
    %256 = vector.broadcast %234 : vector<1x384xf32> to vector<8x384xf32>
    %257 = arith.mulf %255, %256 : vector<8x384xf32>
    %258 = vector.broadcast %235 : vector<1x384xf32> to vector<8x384xf32>
    %259 = arith.addf %257, %258 : vector<8x384xf32>
    %260 = arith.mulf %259, %259 : vector<8x384xf32>
    %261 = arith.mulf %260, %259 : vector<8x384xf32>
    %cst_97 = arith.constant 4.471500e-02 : f32
    %262 = vector.broadcast %cst_97 : f32 to vector<8x384xf32>
    %263 = arith.mulf %262, %261 : vector<8x384xf32>
    %264 = arith.addf %259, %263 : vector<8x384xf32>
    %cst_98 = arith.constant 0.797884583 : f32
    %265 = vector.broadcast %cst_98 : f32 to vector<8x384xf32>
    %266 = arith.mulf %265, %264 : vector<8x384xf32>
    %cst_99 = arith.constant 5.000000e-01 : f32
    %267 = vector.broadcast %cst_99 : f32 to vector<8x384xf32>
    %268 = arith.mulf %267, %259 : vector<8x384xf32>
    %269 = math.tanh %266 : vector<8x384xf32>
    %cst_100 = arith.constant 1.000000e+00 : f32
    %270 = vector.broadcast %cst_100 : f32 to vector<8x384xf32>
    %271 = arith.addf %270, %269 : vector<8x384xf32>
    %272 = arith.mulf %268, %271 : vector<8x384xf32>
    %273 = arith.truncf %272 : vector<8x384xf32> to vector<8x384xbf16>
    %c0_101 = arith.constant 0 : index
    %c0_102 = arith.constant 0 : index
    %274 = vector.load %arg9[%c0_101, %c0_102] : memref<384x128xbf16, #tpu.memory_space<vmem>>, vector<384x128xbf16>
    %cst_103 = arith.constant dense<0.000000e+00> : vector<8x128xf32>
    %275 = tpu.matmul %273, %274, %cst_103 {dimension_numbers = #tpu.dot_dimension_numbers<[1], [0], [0], [1], [0, 0, 1, 1], [], []>} : vector<8x384xbf16>, vector<384x128xbf16>, vector<8x128xf32> -> vector<8x128xf32>
    %c18 = arith.constant 18 : index
    %c0_104 = arith.constant 0 : index
    %276 = vector.load %arg12[%c18, %c0_104] : memref<32x640xf32, #tpu.memory_space<vmem>>, vector<1x128xf32>
    %277 = vector.broadcast %276 : vector<1x128xf32> to vector<8x128xf32>
    %278 = arith.addf %275, %277 : vector<8x128xf32>
    %c19 = arith.constant 19 : index
    %c0_105 = arith.constant 0 : index
    %279 = vector.load %arg12[%c19, %c0_105] : memref<32x640xf32, #tpu.memory_space<vmem>>, vector<1x128xf32>
    %c20 = arith.constant 20 : index
    %c0_106 = arith.constant 0 : index
    %280 = vector.load %arg12[%c20, %c0_106] : memref<32x640xf32, #tpu.memory_space<vmem>>, vector<1x128xf32>
    %cst_107 = arith.constant dense<0.000000e+00> : vector<8xf32>
    %281 = vector.multi_reduction <add>, %278, %cst_107 [1] : vector<8x128xf32> to vector<8xf32>
    %282 = vector.shape_cast %281 : vector<8xf32> to vector<8x1xf32>
    %cst_108 = arith.constant 7.812500e-03 : f32
    %283 = vector.broadcast %cst_108 : f32 to vector<8x1xf32>
    %284 = arith.mulf %282, %283 : vector<8x1xf32>
    %285 = arith.mulf %278, %278 : vector<8x128xf32>
    %cst_109 = arith.constant dense<0.000000e+00> : vector<8xf32>
    %286 = vector.multi_reduction <add>, %285, %cst_109 [1] : vector<8x128xf32> to vector<8xf32>
    %287 = vector.shape_cast %286 : vector<8xf32> to vector<8x1xf32>
    %cst_110 = arith.constant 7.812500e-03 : f32
    %288 = vector.broadcast %cst_110 : f32 to vector<8x1xf32>
    %289 = arith.mulf %287, %288 : vector<8x1xf32>
    %290 = arith.mulf %284, %284 : vector<8x1xf32>
    %291 = arith.subf %289, %290 : vector<8x1xf32>
    %cst_111 = arith.constant 0.000000e+00 : f32
    %292 = vector.broadcast %cst_111 : f32 to vector<8x1xf32>
    %293 = arith.maximumf %291, %292 : vector<8x1xf32>
    %cst_112 = arith.constant 9.99999974E-6 : f32
    %294 = vector.broadcast %cst_112 : f32 to vector<8x1xf32>
    %295 = arith.addf %293, %294 : vector<8x1xf32>
    %296 = math.rsqrt %295 : vector<8x1xf32>
    %297 = vector.broadcast %284 : vector<8x1xf32> to vector<8x128xf32>
    %298 = arith.subf %278, %297 : vector<8x128xf32>
    %299 = vector.broadcast %296 : vector<8x1xf32> to vector<8x128xf32>
    %300 = arith.mulf %298, %299 : vector<8x128xf32>
    %301 = vector.broadcast %279 : vector<1x128xf32> to vector<8x128xf32>
    %302 = arith.mulf %300, %301 : vector<8x128xf32>
    %303 = vector.broadcast %280 : vector<1x128xf32> to vector<8x128xf32>
    %304 = arith.addf %302, %303 : vector<8x128xf32>
    %305 = arith.mulf %304, %304 : vector<8x128xf32>
    %306 = arith.mulf %305, %304 : vector<8x128xf32>
    %cst_113 = arith.constant 4.471500e-02 : f32
    %307 = vector.broadcast %cst_113 : f32 to vector<8x128xf32>
    %308 = arith.mulf %307, %306 : vector<8x128xf32>
    %309 = arith.addf %304, %308 : vector<8x128xf32>
    %cst_114 = arith.constant 0.797884583 : f32
    %310 = vector.broadcast %cst_114 : f32 to vector<8x128xf32>
    %311 = arith.mulf %310, %309 : vector<8x128xf32>
    %cst_115 = arith.constant 5.000000e-01 : f32
    %312 = vector.broadcast %cst_115 : f32 to vector<8x128xf32>
    %313 = arith.mulf %312, %304 : vector<8x128xf32>
    %314 = math.tanh %311 : vector<8x128xf32>
    %cst_116 = arith.constant 1.000000e+00 : f32
    %315 = vector.broadcast %cst_116 : f32 to vector<8x128xf32>
    %316 = arith.addf %315, %314 : vector<8x128xf32>
    %317 = arith.mulf %313, %316 : vector<8x128xf32>
    %c0_117 = arith.constant 0 : index
    %c0_118 = arith.constant 0 : index
    %318 = vector.load %arg14[%c0_117, %c0_118] : memref<8x128xf32, #tpu.memory_space<vmem>>, vector<8x128xf32>
    tpu.vector_store %arg14[%c0_117, %c0_118], %317 {strides = array<i32>} : memref<8x128xf32, #tpu.memory_space<vmem>>, vector<8x128xf32>,
    %319 = arith.truncf %317 : vector<8x128xf32> to vector<8x128xbf16>
    %c0_119 = arith.constant 0 : index
    %c0_120 = arith.constant 0 : index
    %320 = vector.load %arg10[%c0_119, %c0_120] : memref<128x384xbf16, #tpu.memory_space<vmem>>, vector<128x384xbf16>
    %cst_121 = arith.constant dense<0.000000e+00> : vector<8x384xf32>
    %321 = tpu.matmul %319, %320, %cst_121 {dimension_numbers = #tpu.dot_dimension_numbers<[1], [0], [0], [1], [0, 0, 1, 1], [], []>} : vector<8x128xbf16>, vector<128x384xbf16>, vector<8x384xf32> -> vector<8x384xf32>
    %c21 = arith.constant 21 : index
    %c0_122 = arith.constant 0 : index
    %322 = vector.load %arg12[%c21, %c0_122] : memref<32x640xf32, #tpu.memory_space<vmem>>, vector<1x384xf32>
    %323 = vector.broadcast %322 : vector<1x384xf32> to vector<8x384xf32>
    %324 = arith.addf %321, %323 : vector<8x384xf32>
    %c22 = arith.constant 22 : index
    %c0_123 = arith.constant 0 : index
    %325 = vector.load %arg12[%c22, %c0_123] : memref<32x640xf32, #tpu.memory_space<vmem>>, vector<1x384xf32>
    %c23 = arith.constant 23 : index
    %c0_124 = arith.constant 0 : index
    %326 = vector.load %arg12[%c23, %c0_124] : memref<32x640xf32, #tpu.memory_space<vmem>>, vector<1x384xf32>
    %cst_125 = arith.constant dense<0.000000e+00> : vector<8xf32>
    %327 = vector.multi_reduction <add>, %324, %cst_125 [1] : vector<8x384xf32> to vector<8xf32>
    %328 = vector.shape_cast %327 : vector<8xf32> to vector<8x1xf32>
    %cst_126 = arith.constant 0.00353356893 : f32
    %329 = vector.broadcast %cst_126 : f32 to vector<8x1xf32>
    %330 = arith.mulf %328, %329 : vector<8x1xf32>
    %331 = arith.mulf %324, %324 : vector<8x384xf32>
    %cst_127 = arith.constant dense<0.000000e+00> : vector<8xf32>
    %332 = vector.multi_reduction <add>, %331, %cst_127 [1] : vector<8x384xf32> to vector<8xf32>
    %333 = vector.shape_cast %332 : vector<8xf32> to vector<8x1xf32>
    %cst_128 = arith.constant 0.00353356893 : f32
    %334 = vector.broadcast %cst_128 : f32 to vector<8x1xf32>
    %335 = arith.mulf %333, %334 : vector<8x1xf32>
    %336 = arith.mulf %330, %330 : vector<8x1xf32>
    %337 = arith.subf %335, %336 : vector<8x1xf32>
    %cst_129 = arith.constant 0.000000e+00 : f32
    %338 = vector.broadcast %cst_129 : f32 to vector<8x1xf32>
    %339 = arith.maximumf %337, %338 : vector<8x1xf32>
    %cst_130 = arith.constant 9.99999974E-6 : f32
    %340 = vector.broadcast %cst_130 : f32 to vector<8x1xf32>
    %341 = arith.addf %339, %340 : vector<8x1xf32>
    %342 = math.rsqrt %341 : vector<8x1xf32>
    %343 = vector.broadcast %330 : vector<8x1xf32> to vector<8x384xf32>
    %344 = arith.subf %324, %343 : vector<8x384xf32>
    %345 = vector.broadcast %342 : vector<8x1xf32> to vector<8x384xf32>
    %346 = arith.mulf %344, %345 : vector<8x384xf32>
    %347 = vector.broadcast %325 : vector<1x384xf32> to vector<8x384xf32>
    %348 = arith.mulf %346, %347 : vector<8x384xf32>
    %349 = vector.broadcast %326 : vector<1x384xf32> to vector<8x384xf32>
    %350 = arith.addf %348, %349 : vector<8x384xf32>
    %351 = arith.mulf %350, %350 : vector<8x384xf32>
    %352 = arith.mulf %351, %350 : vector<8x384xf32>
    %cst_131 = arith.constant 4.471500e-02 : f32
    %353 = vector.broadcast %cst_131 : f32 to vector<8x384xf32>
    %354 = arith.mulf %353, %352 : vector<8x384xf32>
    %355 = arith.addf %350, %354 : vector<8x384xf32>
    %cst_132 = arith.constant 0.797884583 : f32
    %356 = vector.broadcast %cst_132 : f32 to vector<8x384xf32>
    %357 = arith.mulf %356, %355 : vector<8x384xf32>
    %cst_133 = arith.constant 5.000000e-01 : f32
    %358 = vector.broadcast %cst_133 : f32 to vector<8x384xf32>
    %359 = arith.mulf %358, %350 : vector<8x384xf32>
    %360 = math.tanh %357 : vector<8x384xf32>
    %cst_134 = arith.constant 1.000000e+00 : f32
    %361 = vector.broadcast %cst_134 : f32 to vector<8x384xf32>
    %362 = arith.addf %361, %360 : vector<8x384xf32>
    %363 = arith.mulf %359, %362 : vector<8x384xf32>
    %364 = arith.truncf %363 : vector<8x384xf32> to vector<8x384xbf16>
    %c0_135 = arith.constant 0 : index
    %c0_136 = arith.constant 0 : index
    %365 = vector.load %arg11[%c0_135, %c0_136] : memref<384x640xbf16, #tpu.memory_space<vmem>>, vector<384x640xbf16>
    %cst_137 = arith.constant dense<0.000000e+00> : vector<8x640xf32>
    %366 = tpu.matmul %364, %365, %cst_137 {dimension_numbers = #tpu.dot_dimension_numbers<[1], [0], [0], [1], [0, 0, 1, 1], [], []>} : vector<8x384xbf16>, vector<384x640xbf16>, vector<8x640xf32> -> vector<8x640xf32>
    %c24 = arith.constant 24 : index
    %c0_138 = arith.constant 0 : index
    %367 = vector.load %arg12[%c24, %c0_138] : memref<32x640xf32, #tpu.memory_space<vmem>>, vector<1x640xf32>
    %368 = vector.broadcast %367 : vector<1x640xf32> to vector<8x640xf32>
    %369 = arith.addf %366, %368 : vector<8x640xf32>
    %c0_139 = arith.constant 0 : index
    %c0_140 = arith.constant 0 : index
    %370 = vector.load %arg15[%c0_139, %c0_140] : memref<8x640xf32, #tpu.memory_space<vmem>>, vector<8x640xf32>
    tpu.vector_store %arg15[%c0_139, %c0_140], %369 {strides = array<i32>} : memref<8x640xf32, #tpu.memory_space<vmem>>, vector<8x640xf32>,
    return
  }
  func.func @transform_0(%arg0: i32) -> (i32, i32) {
    %c0_i32 = arith.constant 0 : i32
    %c0_i32_0 = arith.constant 0 : i32
    return %arg0, %c0_i32 : i32, i32
  }
  func.func @transform_1(%arg0: i32) -> (i32, i32) {
    %c0_i32 = arith.constant 0 : i32
    %c0_i32_0 = arith.constant 0 : i32
    return %arg0, %c0_i32 : i32, i32
  }
  func.func @transform_2(%arg0: i32) -> (i32, i32) {
    %c0_i32 = arith.constant 0 : i32
    %c0_i32_0 = arith.constant 0 : i32
    %c0_i32_1 = arith.constant 0 : i32
    return %c0_i32, %c0_i32_0 : i32, i32
  }
  func.func @transform_3(%arg0: i32) -> (i32, i32) {
    %c0_i32 = arith.constant 0 : i32
    %c0_i32_0 = arith.constant 0 : i32
    %c0_i32_1 = arith.constant 0 : i32
    return %c0_i32, %c0_i32_0 : i32, i32
  }
  func.func @transform_4(%arg0: i32) -> (i32, i32) {
    %c0_i32 = arith.constant 0 : i32
    %c0_i32_0 = arith.constant 0 : i32
    %c0_i32_1 = arith.constant 0 : i32
    return %c0_i32, %c0_i32_0 : i32, i32
  }
  func.func @transform_5(%arg0: i32) -> (i32, i32) {
    %c0_i32 = arith.constant 0 : i32
    %c0_i32_0 = arith.constant 0 : i32
    %c0_i32_1 = arith.constant 0 : i32
    return %c0_i32, %c0_i32_0 : i32, i32
  }
  func.func @transform_6(%arg0: i32) -> (i32, i32) {
    %c0_i32 = arith.constant 0 : i32
    %c0_i32_0 = arith.constant 0 : i32
    %c0_i32_1 = arith.constant 0 : i32
    return %c0_i32, %c0_i32_0 : i32, i32
  }
  func.func @transform_7(%arg0: i32) -> (i32, i32) {
    %c0_i32 = arith.constant 0 : i32
    %c0_i32_0 = arith.constant 0 : i32
    %c0_i32_1 = arith.constant 0 : i32
    return %c0_i32, %c0_i32_0 : i32, i32
  }
  func.func @transform_8(%arg0: i32) -> (i32, i32) {
    %c0_i32 = arith.constant 0 : i32
    %c0_i32_0 = arith.constant 0 : i32
    %c0_i32_1 = arith.constant 0 : i32
    return %c0_i32, %c0_i32_0 : i32, i32
  }
  func.func @transform_9(%arg0: i32) -> (i32, i32) {
    %c0_i32 = arith.constant 0 : i32
    %c0_i32_0 = arith.constant 0 : i32
    %c0_i32_1 = arith.constant 0 : i32
    return %c0_i32, %c0_i32_0 : i32, i32
  }
  func.func @transform_10(%arg0: i32) -> (i32, i32) {
    %c0_i32 = arith.constant 0 : i32
    %c0_i32_0 = arith.constant 0 : i32
    %c0_i32_1 = arith.constant 0 : i32
    return %c0_i32, %c0_i32_0 : i32, i32
  }
  func.func @transform_11(%arg0: i32) -> (i32, i32) {
    %c0_i32 = arith.constant 0 : i32
    %c0_i32_0 = arith.constant 0 : i32
    %c0_i32_1 = arith.constant 0 : i32
    return %c0_i32, %c0_i32_0 : i32, i32
  }
  func.func @transform_12(%arg0: i32) -> (i32, i32) {
    %c0_i32 = arith.constant 0 : i32
    %c0_i32_0 = arith.constant 0 : i32
    return %arg0, %c0_i32 : i32, i32
  }
  func.func @transform_13(%arg0: i32) -> (i32, i32) {
    %c0_i32 = arith.constant 0 : i32
    %c0_i32_0 = arith.constant 0 : i32
    return %arg0, %c0_i32 : i32, i32
  }
  func.func @transform_14(%arg0: i32) -> (i32, i32) {
    %c0_i32 = arith.constant 0 : i32
    %c0_i32_0 = arith.constant 0 : i32
    return %arg0, %c0_i32 : i32, i32
  }
}

</mosaic_0001>

<llo_original>
// kernel: _lambda_.1
$region0: #{_lambda_.1}
  #allocation0 [shape = 'u32[]', space=smem, size = 0x4, offset = 0x4, fixed_abs, tag = 'smem constant byte address 0x4 - core index']
  #allocation1 [shape = 'u32[144,128]{1,0:T(1,128)}', space=vmem, size = 0x12000, scoped, tag = 'internal scratch']
  %s0 = inlined_call_operand.vmem [shape: f32[8,128], index: 0, kind: input, shape index: {}]
  %s1 = inlined_call_operand.vmem [shape: f32[8,640], index: 1, kind: input, shape index: {}]
  %s2 = inlined_call_operand.hbm [shape: bf16[128,256], index: 2, kind: input, shape index: {}]
  %s3 = inlined_call_operand.hbm [shape: bf16[256,256], index: 3, kind: input, shape index: {}]
  %s4 = inlined_call_operand.hbm [shape: bf16[256,256], index: 4, kind: input, shape index: {}]
  %s5 = inlined_call_operand.vmem [shape: bf16[256,256], index: 5, kind: input, shape index: {}]
  %s6 = inlined_call_operand.hbm [shape: bf16[256,128], index: 6, kind: input, shape index: {}]
  %s7 = inlined_call_operand.hbm [shape: bf16[640,384], index: 7, kind: input, shape index: {}]
  %s8 = inlined_call_operand.hbm [shape: bf16[384,128], index: 8, kind: input, shape index: {}]
  %s9 = inlined_call_operand.vmem [shape: bf16[128,384], index: 9, kind: input, shape index: {}]
  %s10 = inlined_call_operand.hbm [shape: bf16[384,640], index: 10, kind: input, shape index: {}]
  %s11 = inlined_call_operand.hbm [shape: f32[32,640], index: 11, kind: input, shape index: {}]
  %s12 = inlined_call_operand.vmem [shape: f32[8,128], index: 12, kind: output, shape index: {0}]
  %s13 = inlined_call_operand.vmem [shape: f32[8,128], index: 13, kind: output, shape index: {1}]
  %s14 = inlined_call_operand.vmem [shape: f32[8,640], index: 14, kind: output, shape index: {2}]
  %15 = xla_tuple %s12, %s13, %s14
  %s16 = sld [smem:[#allocation0]]
  $region106: #{_lambda_.1} parent=0
    _
  %s18 = ssub.s32 1, %s16
  %s19 = scalar_select 0, %s18, %s16
  $region1: #{_lambda_.1} parent=0
    #allocation2 [shape = 'u8[65536]{0}', space=vmem, size = 0x10000, scoped, tag = 'input window, operand 2, single buffered']
    #allocation3 [shape = 's32[1]{0}', space=sflag, size = 0x4, scoped, tag = 'scoped memory for _lambda_.1']
    #allocation4 [shape = 'u8[131072]{0}', space=vmem, size = 0x20000, scoped, tag = 'input window, operand 3, single buffered']
    #allocation5 [shape = 's32[1]{0}', space=sflag, size = 0x4, scoped, tag = 'scoped memory for _lambda_.1']
    #allocation6 [shape = 'u8[131072]{0}', space=vmem, size = 0x20000, scoped, tag = 'input window, operand 4, single buffered']
    #allocation7 [shape = 'u8[65536]{0}', space=vmem, size = 0x10000, scoped, tag = 'input window, operand 6, single buffered']
    #allocation8 [shape = 's32[1]{0}', space=sflag, size = 0x4, scoped, tag = 'scoped memory for _lambda_.1']
    #allocation9 [shape = 'u8[491520]{0}', space=vmem, size = 0x78000, scoped, tag = 'input window, operand 7, single buffered']
    #allocation10 [shape = 'u8[98304]{0}', space=vmem, size = 0x18000, scoped, tag = 'input window, operand 8, single buffered']
    #allocation11 [shape = 's32[1]{0}', space=sflag, size = 0x4, scoped, tag = 'scoped memory for _lambda_.1']
    #allocation12 [shape = 'u8[491520]{0}', space=vmem, size = 0x78000, scoped, tag = 'input window, operand 10, single buffered']
    #allocation13 [shape = 'u8[81920]{0}', space=vmem, size = 0x14000, scoped, tag = 'input window, operand 11, single buffered']
    #allocation14 [shape = 's32[1]{0}', space=sflag, size = 0x4, scoped, tag = 'scoped memory for _lambda_.1']
    %20 = vsyncpa [#allocation3], 0
    %21 = vsyncpa [#allocation5], 0
    %22 = vsyncpa [#allocation8], 0
    %23 = vsyncpa [#allocation11], 0
    %24 = vsyncpa [#allocation14], 0
    // Predicated region
    $region2: #{_lambda_.1} parent=1 // pred_check
      _
    $region3: #{_lambda_.1} parent=1 // pred_check_branch
      %26 = sbr.rel (0) target = $region5
    $region4: #{_lambda_.1} parent=1 // pred_region
      _
    $region5: #{_lambda_.1} parent=1 // pred_fallthru
      _
    // Predicated region
    $region6: #{_lambda_.1} parent=1 // pred_check
      _
    $region7: #{_lambda_.1} parent=1 // pred_check_branch
      %28 = sbr.rel (0) target = $region9
    $region8: #{_lambda_.1} parent=1 // pred_region
      _
    $region9: #{_lambda_.1} parent=1 // pred_fallthru
      _
    // Predicated region
    $region10: #{_lambda_.1} parent=1 // pred_check
      _
    $region11: #{_lambda_.1} parent=1 // pred_check_branch
      %30 = sbr.rel (0) target = $region13
    $region12: #{_lambda_.1} parent=1 // pred_region
      %s32 = ssub.s32 2048, 2048
      %33 = vsyncadd [#allocation3], %s32
      %s34 = sshll.u32 [#allocation2], 4
      %s35 = int_to_ptr.vmem [resolvable:$true] %s34
      %40 = dma.hbm_to_vmem [thread:$0]  %s2, 2048, %s35, [#allocation3], 128, 128, 8
    $region13: #{_lambda_.1} parent=1 // pred_fallthru
      _
    // Predicated region
    $region14: #{_lambda_.1} parent=1 // pred_check
      _
    $region15: #{_lambda_.1} parent=1 // pred_check_branch
      %42 = sbr.rel (0) target = $region17
    $region16: #{_lambda_.1} parent=1 // pred_region
      %s44 = ssub.s32 4096, 4096
      %45 = vsyncadd [#allocation5], %s44
      %s46 = sshll.u32 [#allocation4], 4
      %s47 = int_to_ptr.vmem [resolvable:$true] %s46
      %52 = dma.hbm_to_vmem [thread:$0]  %s3, 4096, %s47, [#allocation5], 128, 128, 8
    $region17: #{_lambda_.1} parent=1 // pred_fallthru
      _
    // Predicated region
    $region18: #{_lambda_.1} parent=1 // pred_check
      _
    $region19: #{_lambda_.1} parent=1 // pred_check_branch
      %54 = sbr.rel (0) target = $region21
    $region20: #{_lambda_.1} parent=1 // pred_region
      %s56 = ssub.s32 4096, 4096
      %57 = vsyncadd [#allocation5], %s56
      %s58 = sshll.u32 [#allocation6], 4
      %s59 = int_to_ptr.vmem [resolvable:$true] %s58
      %64 = dma.hbm_to_vmem [thread:$0]  %s4, 4096, %s59, [#allocation5], 128, 128, 8
    $region21: #{_lambda_.1} parent=1 // pred_fallthru
      _
    // Predicated region
    $region22: #{_lambda_.1} parent=1 // pred_check
      _
    $region23: #{_lambda_.1} parent=1 // pred_check_branch
      %66 = sbr.rel (0) target = $region25
    $region24: #{_lambda_.1} parent=1 // pred_region
      _
    $region25: #{_lambda_.1} parent=1 // pred_fallthru
      _
    // Predicated region
    $region26: #{_lambda_.1} parent=1 // pred_check
      _
    $region27: #{_lambda_.1} parent=1 // pred_check_branch
      %68 = sbr.rel (0) target = $region29
    $region28: #{_lambda_.1} parent=1 // pred_region
      %s70 = ssub.s32 2048, 2048
      %71 = vsyncadd [#allocation8], %s70
      %s72 = sshll.u32 [#allocation7], 4
      %s73 = int_to_ptr.vmem [resolvable:$true] %s72
      %78 = dma.hbm_to_vmem [thread:$0]  %s6, 2048, %s73, [#allocation8], 64, 64, 4
    $region29: #{_lambda_.1} parent=1 // pred_fallthru
      _
    // Predicated region
    $region30: #{_lambda_.1} parent=1 // pred_check
      _
    $region31: #{_lambda_.1} parent=1 // pred_check_branch
      %80 = sbr.rel (0) target = $region33
    $region32: #{_lambda_.1} parent=1 // pred_region
      %s82 = ssub.s32 15360, 15360
      %83 = vsyncadd [#allocation8], %s82
      %s84 = sshll.u32 [#allocation9], 4
      %s85 = int_to_ptr.vmem [resolvable:$true] %s84
      %90 = dma.hbm_to_vmem [thread:$0]  %s7, 15360, %s85, [#allocation8], 192, 192, 12
    $region33: #{_lambda_.1} parent=1 // pred_fallthru
      _
    // Predicated region
    $region34: #{_lambda_.1} parent=1 // pred_check
      _
    $region35: #{_lambda_.1} parent=1 // pred_check_branch
      %92 = sbr.rel (0) target = $region37
    $region36: #{_lambda_.1} parent=1 // pred_region
      %s94 = ssub.s32 3072, 3072
      %95 = vsyncadd [#allocation11], %s94
      %s96 = sshll.u32 [#allocation10], 4
      %s97 = int_to_ptr.vmem [resolvable:$true] %s96
      %102 = dma.hbm_to_vmem [thread:$0]  %s8, 3072, %s97, [#allocation11], 64, 64, 4
    $region37: #{_lambda_.1} parent=1 // pred_fallthru
      _
    // Predicated region
    $region38: #{_lambda_.1} parent=1 // pred_check
      _
    $region39: #{_lambda_.1} parent=1 // pred_check_branch
      %104 = sbr.rel (0) target = $region41
    $region40: #{_lambda_.1} parent=1 // pred_region
      _
    $region41: #{_lambda_.1} parent=1 // pred_fallthru
      _
    // Predicated region
    $region42: #{_lambda_.1} parent=1 // pred_check
      _
    $region43: #{_lambda_.1} parent=1 // pred_check_branch
      %106 = sbr.rel (0) target = $region45
    $region44: #{_lambda_.1} parent=1 // pred_region
      %s108 = ssub.s32 15360, 15360
      %109 = vsyncadd [#allocation11], %s108
      %s110 = sshll.u32 [#allocation12], 4
      %s111 = int_to_ptr.vmem [resolvable:$true] %s110
      %116 = dma.hbm_to_vmem [thread:$0]  %s10, 15360, %s111, [#allocation11], 320, 320, 20
    $region45: #{_lambda_.1} parent=1 // pred_fallthru
      _
    // Predicated region
    $region46: #{_lambda_.1} parent=1 // pred_check
      _
    $region47: #{_lambda_.1} parent=1 // pred_check_branch
      %118 = sbr.rel (0) target = $region49
    $region48: #{_lambda_.1} parent=1 // pred_region
      %s120 = ssub.s32 2560, 2560
      %121 = vsyncadd [#allocation14], %s120
      %s122 = sshll.u32 [#allocation13], 4
      %s123 = int_to_ptr.vmem [resolvable:$true] %s122
      %128 = dma.hbm_to_vmem [thread:$0]  %s11, 2560, %s123, [#allocation14], 640, 640, 40
    $region49: #{_lambda_.1} parent=1 // pred_fallthru
      _
    // Predicated region
    $region50: #{_lambda_.1} parent=1 // pred_check
      _
    $region51: #{_lambda_.1} parent=1 // pred_check_branch
      %130 = sbr.rel (0) target = $region53
    $region52: #{_lambda_.1} parent=1 // pred_region
      %131 = dma.done [#allocation3], 2048
    $region53: #{_lambda_.1} parent=1 // pred_fallthru
      _
    // Predicated region
    $region54: #{_lambda_.1} parent=1 // pred_check
      _
    $region55: #{_lambda_.1} parent=1 // pred_check_branch
      %133 = sbr.rel (0) target = $region57
    $region56: #{_lambda_.1} parent=1 // pred_region
      %134 = dma.done [#allocation5], 4096
    $region57: #{_lambda_.1} parent=1 // pred_fallthru
      _
    // Predicated region
    $region58: #{_lambda_.1} parent=1 // pred_check
      _
    $region59: #{_lambda_.1} parent=1 // pred_check_branch
      %136 = sbr.rel (0) target = $region61
    $region60: #{_lambda_.1} parent=1 // pred_region
      %137 = dma.done [#allocation5], 4096
    $region61: #{_lambda_.1} parent=1 // pred_fallthru
      _
    // Predicated region
    $region62: #{_lambda_.1} parent=1 // pred_check
      _
    $region63: #{_lambda_.1} parent=1 // pred_check_branch
      %139 = sbr.rel (0) target = $region65
    $region64: #{_lambda_.1} parent=1 // pred_region
      %140 = dma.done [#allocation8], 2048
    $region65: #{_lambda_.1} parent=1 // pred_fallthru
      _
    // Predicated region
    $region66: #{_lambda_.1} parent=1 // pred_check
      _
    $region67: #{_lambda_.1} parent=1 // pred_check_branch
      %142 = sbr.rel (0) target = $region69
    $region68: #{_lambda_.1} parent=1 // pred_region
      %143 = dma.done [#allocation8], 15360
    $region69: #{_lambda_.1} parent=1 // pred_fallthru
      _
    // Predicated region
    $region70: #{_lambda_.1} parent=1 // pred_check
      _
    $region71: #{_lambda_.1} parent=1 // pred_check_branch
      %145 = sbr.rel (0) target = $region73
    $region72: #{_lambda_.1} parent=1 // pred_region
      %146 = dma.done [#allocation11], 3072
    $region73: #{_lambda_.1} parent=1 // pred_fallthru
      _
    // Predicated region
    $region74: #{_lambda_.1} parent=1 // pred_check
      _
    $region75: #{_lambda_.1} parent=1 // pred_check_branch
      %148 = sbr.rel (0) target = $region77
    $region76: #{_lambda_.1} parent=1 // pred_region
      %149 = dma.done [#allocation11], 15360
    $region77: #{_lambda_.1} parent=1 // pred_fallthru
      _
    // Predicated region
    $region78: #{_lambda_.1} parent=1 // pred_check
      _
    $region79: #{_lambda_.1} parent=1 // pred_check_branch
      %151 = sbr.rel (0) target = $region81
    $region80: #{_lambda_.1} parent=1 // pred_region
      %152 = dma.done [#allocation14], 2560
    $region81: #{_lambda_.1} parent=1 // pred_fallthru
      _
    %v154 = vld [vmem:[%s0] sm:$0xff]
    %v155 = vpack.c.bf16 %v154, %v154
    %v156 = vld [vmem:[#allocation2] sm:$0xff]
    %v157 = vld [vmem:[#allocation2 + $0x8] sm:$0xff]
    %v158 = vld [vmem:[#allocation2 + $0x10] sm:$0xff]
    %v159 = vld [vmem:[#allocation2 + $0x18] sm:$0xff]
    %v160 = vld [vmem:[#allocation2 + $0x20] sm:$0xff]
    %v161 = vld [vmem:[#allocation2 + $0x28] sm:$0xff]
    %v162 = vld [vmem:[#allocation2 + $0x30] sm:$0xff]
    %v163 = vld [vmem:[#allocation2 + $0x38] sm:$0xff]
    %v164 = vld [vmem:[#allocation2 + $0x40] sm:$0xff]
    %v165 = vld [vmem:[#allocation2 + $0x48] sm:$0xff]
    %v166 = vld [vmem:[#allocation2 + $0x50] sm:$0xff]
    %v167 = vld [vmem:[#allocation2 + $0x58] sm:$0xff]
    %v168 = vld [vmem:[#allocation2 + $0x60] sm:$0xff]
    %v169 = vld [vmem:[#allocation2 + $0x68] sm:$0xff]
    %v170 = vld [vmem:[#allocation2 + $0x70] sm:$0xff]
    %v171 = vld [vmem:[#allocation2 + $0x78] sm:$0xff]
    %v172 = vld [vmem:[#allocation13] ss:$8 sm:$0x3]
    %v174 = vlaneseq
    %v175 = vshrl.u32 %v174, 7
    %v176 = vsub.s32 0, %v175
    %v177 = vrot.slane %v172, %v176
    %v178 = vlaneseq
    %v179 = vshrl.u32 %v178, 7
    %v180 = vsub.s32 1, %v179
    %v181 = vrot.slane %v172, %v180
    %v200 = vunpack.c.l.b16 %v156
    %v201 = vunpack.c.h.b16 %v156
    %v202 = vunpack.c.l.b16 %v157
    %v203 = vunpack.c.h.b16 %v157
    %v204 = vunpack.c.l.b16 %v158
    %v205 = vunpack.c.h.b16 %v158
    %v206 = vunpack.c.l.b16 %v159
    %v207 = vunpack.c.h.b16 %v159
    %v208 = vunpack.c.l.b16 %v160
    %v209 = vunpack.c.h.b16 %v160
    %v210 = vunpack.c.l.b16 %v161
    %v211 = vunpack.c.h.b16 %v161
    %v212 = vunpack.c.l.b16 %v162
    %v213 = vunpack.c.h.b16 %v162
    %v214 = vunpack.c.l.b16 %v163
    %v215 = vunpack.c.h.b16 %v163
    %v216 = vunpack.c.l.b16 %v164
    %v217 = vunpack.c.h.b16 %v164
    %v218 = vunpack.c.l.b16 %v165
    %v219 = vunpack.c.h.b16 %v165
    %v220 = vunpack.c.l.b16 %v166
    %v221 = vunpack.c.h.b16 %v166
    %v222 = vunpack.c.l.b16 %v167
    %v223 = vunpack.c.h.b16 %v167
    %v224 = vunpack.c.l.b16 %v168
    %v225 = vunpack.c.h.b16 %v168
    %v226 = vunpack.c.l.b16 %v169
    %v227 = vunpack.c.h.b16 %v169
    %v228 = vunpack.c.l.b16 %v170
    %v229 = vunpack.c.h.b16 %v170
    %v230 = vunpack.c.l.b16 %v171
    %v231 = vunpack.c.h.b16 %v171
    %v232 = vpack.c.b16 %v202, %v200
    %v233 = vpack.c.b16 %v203, %v201
    %v234 = vpack.c.b16 %v206, %v204
    %v235 = vpack.c.b16 %v207, %v205
    %v236 = vpack.c.b16 %v210, %v208
    %v237 = vpack.c.b16 %v211, %v209
    %v238 = vpack.c.b16 %v214, %v212
    %v239 = vpack.c.b16 %v215, %v213
    %v240 = vpack.c.b16 %v218, %v216
    %v241 = vpack.c.b16 %v219, %v217
    %v242 = vpack.c.b16 %v222, %v220
    %v243 = vpack.c.b16 %v223, %v221
    %v244 = vpack.c.b16 %v226, %v224
    %v245 = vpack.c.b16 %v227, %v225
    %v246 = vpack.c.b16 %v230, %v228
    %v247 = vpack.c.b16 %v231, %v229
    %264 = vmatprep.subr.bf16.mxu0 %v247
    %265 = vmatpush1.bf16.msra.mxu0 %v246
    %266 = vmatprep.subr.bf16.mxu0 %v245
    %267 = vmatpush1.bf16.msra.mxu0 %v244
    %268 = vmatprep.subr.bf16.mxu0 %v243
    %269 = vmatpush1.bf16.msra.mxu0 %v242
    %270 = vmatprep.subr.bf16.mxu0 %v241
    %271 = vmatpush1.bf16.msra.mxu0 %v240
    %272 = vmatprep.subr.bf16.mxu0 %v239
    %273 = vmatpush1.bf16.msra.mxu0 %v238
    %274 = vmatprep.subr.bf16.mxu0 %v237
    %275 = vmatpush1.bf16.msra.mxu0 %v236
    %276 = vmatprep.subr.bf16.mxu0 %v235
    %277 = vmatpush1.bf16.msra.mxu0 %v234
    %278 = vmatprep.subr.bf16.mxu0 %v233
    %279 = vmatpush1.bf16.msra.mxu0 %v232
    %280 = vmatprep.subr.bf16.mxu0 0
    %281 = vmatpush2.bf16.msra.mxu0 0
    %282 = vmatprep.subr.bf16.mxu0 0
    %283 = vmatpush2.bf16.msra.mxu0 0
    %284 = vmatprep.subr.bf16.mxu0 0
    %285 = vmatpush2.bf16.msra.mxu0 0
    %286 = vmatprep.subr.bf16.mxu0 0
    %287 = vmatpush2.bf16.msra.mxu0 0
    %288 = vmatprep.subr.bf16.mxu0 0
    %289 = vmatpush2.bf16.msra.mxu0 0
    %290 = vmatprep.subr.bf16.mxu0 0
    %291 = vmatpush2.bf16.msra.mxu0 0
    %292 = vmatprep.subr.bf16.mxu0 0
    %293 = vmatpush2.bf16.msra.mxu0 0
    %294 = vmatprep.subr.bf16.mxu0 0
    %295 = vmatpush2.bf16.msra.mxu0 0
    %296 = vmatprep.mubr.bf16.mxu0 0
    %297 = vmatmul.mubr.bf16.gmra.mxu0 %v155
    %v298 = vpop.f32.mrf.mxu0
    %v299 = vadd.f32 %v177, %v298
    %v300 = vpop.f32.mrf.mxu0
    %v301 = vadd.f32 %v181, %v300
    %v302 = vpop.f32.mrf.mxu0
    %v303 = vpop.f32.mrf.mxu0
    %304 = vdwg.mxu0
    %s305 = scalar_lea.vmem [#allocation13], 1
    %v306 = vld [vmem:[%s305] ss:$8 sm:$0x3]
    %s307 = scalar_lea.vmem [#allocation13], 2
    %v308 = vld [vmem:[%s307] ss:$8 sm:$0x3]
    %v309 = vadd.f32 %v299, %v301
    %310 = vadd.xlane.f32.xlu0 %v309
    %v311 = vpop.xlane.xlu0 %310
    %v312 = vmul.f32 %v311, 0.00390625
    %v313 = vmul.f32 %v299, %v299
    %v314 = vmul.f32 %v301, %v301
    %v315 = vadd.f32 %v313, %v314
    %316 = vadd.xlane.f32.xlu0 %v315
    %v317 = vpop.xlane.xlu0 %316
    %v318 = vmul.f32 %v317, 0.00390625
    %v319 = vmul.f32 %v312, %v312
    %v320 = vsub.f32 %v318, %v319
    %v321 = vmax.f32 %v320, 0.0
    %v322 = vadd.f32 %v321, 1e-05
    %v323 = vrsqrt.pop %v322
    %v324 = vsub.f32 %v299, %v312
    %v325 = vsub.f32 %v301, %v312
    %v326 = vmul.f32 %v324, %v323
    %v327 = vmul.f32 %v325, %v323
    %v329 = vlaneseq
    %v330 = vshrl.u32 %v329, 7
    %v331 = vsub.s32 0, %v330
    %v332 = vrot.slane %v306, %v331
    %v333 = vlaneseq
    %v334 = vshrl.u32 %v333, 7
    %v335 = vsub.s32 1, %v334
    %v336 = vrot.slane %v306, %v335
    %v339 = vmul.f32 %v326, %v332
    %v340 = vmul.f32 %v327, %v336
    %v342 = vlaneseq
    %v343 = vshrl.u32 %v342, 7
    %v344 = vsub.s32 0, %v343
    %v345 = vrot.slane %v308, %v344
    %v346 = vlaneseq
    %v347 = vshrl.u32 %v346, 7
    %v348 = vsub.s32 1, %v347
    %v349 = vrot.slane %v308, %v348
    %v352 = vadd.f32 %v339, %v345
    %v353 = vadd.f32 %v340, %v349
    %v354 = vmul.f32 %v352, %v352
    %v355 = vmul.f32 %v353, %v353
    %v356 = vmul.f32 %v354, %v352
    %v357 = vmul.f32 %v355, %v353
    %v358 = vmul.f32 %v356, 0.044715
    %v359 = vmul.f32 %v357, 0.044715
    %v360 = vadd.f32 %v352, %v358
    %v361 = vadd.f32 %v353, %v359
    %v362 = vmul.f32 %v360, 0.7978846
    %v363 = vmul.f32 %v361, 0.7978846
    %v364 = vmul.f32 %v352, 0.5
    %v365 = vmul.f32 %v353, 0.5
    %v366 = vtanh.pop %v362
    %v367 = vtanh.pop %v363
    %v368 = vadd.f32 %v366, 1.0
    %v369 = vadd.f32 %v367, 1.0
    %v370 = vmul.f32 %v364, %v368
    %v371 = vmul.f32 %v365, %v369
    %v372 = vpack.c.bf16 %v370, %v370
    %v373 = vpack.c.bf16 %v371, %v371
    %v374 = vld [vmem:[#allocation4] sm:$0xff]
    %v375 = vld [vmem:[#allocation4 + $0x8] sm:$0xff]
    %v376 = vld [vmem:[#allocation4 + $0x10] sm:$0xff]
    %v377 = vld [vmem:[#allocation4 + $0x18] sm:$0xff]
    %v378 = vld [vmem:[#allocation4 + $0x20] sm:$0xff]
    %v379 = vld [vmem:[#allocation4 + $0x28] sm:$0xff]
    %v380 = vld [vmem:[#allocation4 + $0x30] sm:$0xff]
    %v381 = vld [vmem:[#allocation4 + $0x38] sm:$0xff]
    %v382 = vld [vmem:[#allocation4 + $0x40] sm:$0xff]
    %v383 = vld [vmem:[#allocation4 + $0x48] sm:$0xff]
    %v384 = vld [vmem:[#allocation4 + $0x50] sm:$0xff]
    %v385 = vld [vmem:[#allocation4 + $0x58] sm:$0xff]
    %v386 = vld [vmem:[#allocation4 + $0x60] sm:$0xff]
    %v387 = vld [vmem:[#allocation4 + $0x68] sm:$0xff]
    %v388 = vld [vmem:[#allocation4 + $0x70] sm:$0xff]
    %v389 = vld [vmem:[#allocation4 + $0x78] sm:$0xff]
    %v390 = vld [vmem:[#allocation4 + $0x80] sm:$0xff]
    %v391 = vld [vmem:[#allocation4 + $0x88] sm:$0xff]
    %v392 = vld [vmem:[#allocation4 + $0x90] sm:$0xff]
    %v393 = vld [vmem:[#allocation4 + $0x98] sm:$0xff]
    %v394 = vld [vmem:[#allocation4 + $0xa0] sm:$0xff]
    %v395 = vld [vmem:[#allocation4 + $0xa8] sm:$0xff]
    %v396 = vld [vmem:[#allocation4 + $0xb0] sm:$0xff]
    %v397 = vld [vmem:[#allocation4 + $0xb8] sm:$0xff]
    %v398 = vld [vmem:[#allocation4 + $0xc0] sm:$0xff]
    %v399 = vld [vmem:[#allocation4 + $0xc8] sm:$0xff]
    %v400 = vld [vmem:[#allocation4 + $0xd0] sm:$0xff]
    %v401 = vld [vmem:[#allocation4 + $0xd8] sm:$0xff]
    %v402 = vld [vmem:[#allocation4 + $0xe0] sm:$0xff]
    %v403 = vld [vmem:[#allocation4 + $0xe8] sm:$0xff]
    %v404 = vld [vmem:[#allocation4 + $0xf0] sm:$0xff]
    %v405 = vld [vmem:[#allocation4 + $0xf8] sm:$0xff]
    %s406 = scalar_lea.vmem [#allocation13], 3
    %v407 = vld [vmem:[%s406] ss:$8 sm:$0x3]
    %v409 = vlaneseq
    %v410 = vshrl.u32 %v409, 7
    %v411 = vsub.s32 0, %v410
    %v412 = vrot.slane %v407, %v411
    %v413 = vlaneseq
    %v414 = vshrl.u32 %v413, 7
    %v415 = vsub.s32 1, %v414
    %v416 = vrot.slane %v407, %v415
    %v451 = vunpack.c.l.b16 %v374
    %v452 = vunpack.c.h.b16 %v374
    %v453 = vunpack.c.l.b16 %v375
    %v454 = vunpack.c.h.b16 %v375
    %v455 = vunpack.c.l.b16 %v376
    %v456 = vunpack.c.h.b16 %v376
    %v457 = vunpack.c.l.b16 %v377
    %v458 = vunpack.c.h.b16 %v377
    %v459 = vunpack.c.l.b16 %v378
    %v460 = vunpack.c.h.b16 %v378
    %v461 = vunpack.c.l.b16 %v379
    %v462 = vunpack.c.h.b16 %v379
    %v463 = vunpack.c.l.b16 %v380
    %v464 = vunpack.c.h.b16 %v380
    %v465 = vunpack.c.l.b16 %v381
    %v466 = vunpack.c.h.b16 %v381
    %v467 = vunpack.c.l.b16 %v382
    %v468 = vunpack.c.h.b16 %v382
    %v469 = vunpack.c.l.b16 %v383
    %v470 = vunpack.c.h.b16 %v383
    %v471 = vunpack.c.l.b16 %v384
    %v472 = vunpack.c.h.b16 %v384
    %v473 = vunpack.c.l.b16 %v385
    %v474 = vunpack.c.h.b16 %v385
    %v475 = vunpack.c.l.b16 %v386
    %v476 = vunpack.c.h.b16 %v386
    %v477 = vunpack.c.l.b16 %v387
    %v478 = vunpack.c.h.b16 %v387
    %v479 = vunpack.c.l.b16 %v388
    %v480 = vunpack.c.h.b16 %v388
    %v481 = vunpack.c.l.b16 %v389
    %v482 = vunpack.c.h.b16 %v389
    %v483 = vunpack.c.l.b16 %v390
    %v484 = vunpack.c.h.b16 %v390
    %v485 = vunpack.c.l.b16 %v391
    %v486 = vunpack.c.h.b16 %v391
    %v487 = vunpack.c.l.b16 %v392
    %v488 = vunpack.c.h.b16 %v392
    %v489 = vunpack.c.l.b16 %v393
    %v490 = vunpack.c.h.b16 %v393
    %v491 = vunpack.c.l.b16 %v394
    %v492 = vunpack.c.h.b16 %v394
    %v493 = vunpack.c.l.b16 %v395
    %v494 = vunpack.c.h.b16 %v395
    %v495 = vunpack.c.l.b16 %v396
    %v496 = vunpack.c.h.b16 %v396
    %v497 = vunpack.c.l.b16 %v397
    %v498 = vunpack.c.h.b16 %v397
    %v499 = vunpack.c.l.b16 %v398
    %v500 = vunpack.c.h.b16 %v398
    %v501 = vunpack.c.l.b16 %v399
    %v502 = vunpack.c.h.b16 %v399
    %v503 = vunpack.c.l.b16 %v400
    %v504 = vunpack.c.h.b16 %v400
    %v505 = vunpack.c.l.b16 %v401
    %v506 = vunpack.c.h.b16 %v401
    %v507 = vunpack.c.l.b16 %v402
    %v508 = vunpack.c.h.b16 %v402
    %v509 = vunpack.c.l.b16 %v403
    %v510 = vunpack.c.h.b16 %v403
    %v511 = vunpack.c.l.b16 %v404
    %v512 = vunpack.c.h.b16 %v404
    %v513 = vunpack.c.l.b16 %v405
    %v514 = vunpack.c.h.b16 %v405
    %v515 = vpack.c.b16 %v453, %v451
    %v516 = vpack.c.b16 %v454, %v452
    %v517 = vpack.c.b16 %v457, %v455
    %v518 = vpack.c.b16 %v458, %v456
    %v519 = vpack.c.b16 %v461, %v459
    %v520 = vpack.c.b16 %v462, %v460
    %v521 = vpack.c.b16 %v465, %v463
    %v522 = vpack.c.b16 %v466, %v464
    %v523 = vpack.c.b16 %v469, %v467
    %v524 = vpack.c.b16 %v470, %v468
    %v525 = vpack.c.b16 %v473, %v471
    %v526 = vpack.c.b16 %v474, %v472
    %v527 = vpack.c.b16 %v477, %v475
    %v528 = vpack.c.b16 %v478, %v476
    %v529 = vpack.c.b16 %v481, %v479
    %v530 = vpack.c.b16 %v482, %v480
    %v531 = vpack.c.b16 %v485, %v483
    %v532 = vpack.c.b16 %v486, %v484
    %v533 = vpack.c.b16 %v489, %v487
    %v534 = vpack.c.b16 %v490, %v488
    %v535 = vpack.c.b16 %v493, %v491
    %v536 = vpack.c.b16 %v494, %v492
    %v537 = vpack.c.b16 %v497, %v495
    %v538 = vpack.c.b16 %v498, %v496
    %v539 = vpack.c.b16 %v501, %v499
    %v540 = vpack.c.b16 %v502, %v500
    %v541 = vpack.c.b16 %v505, %v503
    %v542 = vpack.c.b16 %v506, %v504
    %v543 = vpack.c.b16 %v509, %v507
    %v544 = vpack.c.b16 %v510, %v508
    %v545 = vpack.c.b16 %v513, %v511
    %v546 = vpack.c.b16 %v514, %v512
    %579 = vmatprep.subr.bf16.mxu0 %v530
    %580 = vmatpush1.bf16.msra.mxu0 %v529
    %581 = vmatprep.subr.bf16.mxu0 %v528
    %582 = vmatpush1.bf16.msra.mxu0 %v527
    %583 = vmatprep.subr.bf16.mxu0 %v526
    %584 = vmatpush1.bf16.msra.mxu0 %v525
    %585 = vmatprep.subr.bf16.mxu0 %v524
    %586 = vmatpush1.bf16.msra.mxu0 %v523
    %587 = vmatprep.subr.bf16.mxu0 %v522
    %588 = vmatpush1.bf16.msra.mxu0 %v521
    %589 = vmatprep.subr.bf16.mxu0 %v520
    %590 = vmatpush1.bf16.msra.mxu0 %v519
    %591 = vmatprep.subr.bf16.mxu0 %v518
    %592 = vmatpush1.bf16.msra.mxu0 %v517
    %593 = vmatprep.subr.bf16.mxu0 %v516
    %594 = vmatpush1.bf16.msra.mxu0 %v515
    %595 = vmatprep.subr.bf16.mxu0 %v546
    %596 = vmatpush2.bf16.msra.mxu0 %v545
    %597 = vmatprep.subr.bf16.mxu0 %v544
    %598 = vmatpush2.bf16.msra.mxu0 %v543
    %599 = vmatprep.subr.bf16.mxu0 %v542
    %600 = vmatpush2.bf16.msra.mxu0 %v541
    %601 = vmatprep.subr.bf16.mxu0 %v540
    %602 = vmatpush2.bf16.msra.mxu0 %v539
    %603 = vmatprep.subr.bf16.mxu0 %v538
    %604 = vmatpush2.bf16.msra.mxu0 %v537
    %605 = vmatprep.subr.bf16.mxu0 %v536
    %606 = vmatpush2.bf16.msra.mxu0 %v535
    %607 = vmatprep.subr.bf16.mxu0 %v534
    %608 = vmatpush2.bf16.msra.mxu0 %v533
    %609 = vmatprep.subr.bf16.mxu0 %v532
    %610 = vmatpush2.bf16.msra.mxu0 %v531
    %611 = vmatprep.mubr.bf16.mxu0 %v373
    %612 = vmatmul.mubr.bf16.gmra.mxu0 %v372
    %v613 = vpop.f32.mrf.mxu0
    %v614 = vadd.f32 %v412, %v613
    %v615 = vpop.f32.mrf.mxu0
    %v616 = vadd.f32 %v416, %v615
    %v617 = vpop.f32.mrf.mxu0
    %v618 = vpop.f32.mrf.mxu0
    %619 = vdwg.mxu0
    %s620 = scalar_lea.vmem [#allocation13], 4
    %v621 = vld [vmem:[%s620] ss:$8 sm:$0x3]
    %s622 = scalar_lea.vmem [#allocation13], 5
    %v623 = vld [vmem:[%s622] ss:$8 sm:$0x3]
    %v624 = vadd.f32 %v614, %v616
    %625 = vadd.xlane.f32.xlu0 %v624
    %v626 = vpop.xlane.xlu0 %625
    %v627 = vmul.f32 %v626, 0.00390625
    %v628 = vmul.f32 %v614, %v614
    %v629 = vmul.f32 %v616, %v616
    %v630 = vadd.f32 %v628, %v629
    %631 = vadd.xlane.f32.xlu0 %v630
    %v632 = vpop.xlane.xlu0 %631
    %v633 = vmul.f32 %v632, 0.00390625
    %v634 = vmul.f32 %v627, %v627
    %v635 = vsub.f32 %v633, %v634
    %v636 = vmax.f32 %v635, 0.0
    %v637 = vadd.f32 %v636, 1e-05
    %v638 = vrsqrt.pop %v637
    %v639 = vsub.f32 %v614, %v627
    %v640 = vsub.f32 %v616, %v627
    %v641 = vmul.f32 %v639, %v638
    %v642 = vmul.f32 %v640, %v638
    %v644 = vlaneseq
    %v645 = vshrl.u32 %v644, 7
    %v646 = vsub.s32 0, %v645
    %v647 = vrot.slane %v621, %v646
    %v648 = vlaneseq
    %v649 = vshrl.u32 %v648, 7
    %v650 = vsub.s32 1, %v649
    %v651 = vrot.slane %v621, %v650
    %v654 = vmul.f32 %v641, %v647
    %v655 = vmul.f32 %v642, %v651
    %v657 = vlaneseq
    %v658 = vshrl.u32 %v657, 7
    %v659 = vsub.s32 0, %v658
    %v660 = vrot.slane %v623, %v659
    %v661 = vlaneseq
    %v662 = vshrl.u32 %v661, 7
    %v663 = vsub.s32 1, %v662
    %v664 = vrot.slane %v623, %v663
    %v667 = vadd.f32 %v654, %v660
    %v668 = vadd.f32 %v655, %v664
    %v669 = vmul.f32 %v667, %v667
    %v670 = vmul.f32 %v668, %v668
    %v671 = vmul.f32 %v669, %v667
    %v672 = vmul.f32 %v670, %v668
    %v673 = vmul.f32 %v671, 0.044715
    %v674 = vmul.f32 %v672, 0.044715
    %v675 = vadd.f32 %v667, %v673
    %v676 = vadd.f32 %v668, %v674
    %v677 = vmul.f32 %v675, 0.7978846
    %v678 = vmul.f32 %v676, 0.7978846
    %v679 = vmul.f32 %v667, 0.5
    %v680 = vmul.f32 %v668, 0.5
    %v681 = vtanh.pop %v677
    %v682 = vtanh.pop %v678
    %v683 = vadd.f32 %v681, 1.0
    %v684 = vadd.f32 %v682, 1.0
    %v685 = vmul.f32 %v679, %v683
    %v686 = vmul.f32 %v680, %v684
    %v687 = vpack.c.bf16 %v685, %v685
    %v688 = vpack.c.bf16 %v686, %v686
    %v689 = vld [vmem:[#allocation6] sm:$0xff]
    %v690 = vld [vmem:[#allocation6 + $0x8] sm:$0xff]
    %v691 = vld [vmem:[#allocation6 + $0x10] sm:$0xff]
    %v692 = vld [vmem:[#allocation6 + $0x18] sm:$0xff]
    %v693 = vld [vmem:[#allocation6 + $0x20] sm:$0xff]
    %v694 = vld [vmem:[#allocation6 + $0x28] sm:$0xff]
    %v695 = vld [vmem:[#allocation6 + $0x30] sm:$0xff]
    %v696 = vld [vmem:[#allocation6 + $0x38] sm:$0xff]
    %v697 = vld [vmem:[#allocation6 + $0x40] sm:$0xff]
    %v698 = vld [vmem:[#allocation6 + $0x48] sm:$0xff]
    %v699 = vld [vmem:[#allocation6 + $0x50] sm:$0xff]
    %v700 = vld [vmem:[#allocation6 + $0x58] sm:$0xff]
    %v701 = vld [vmem:[#allocation6 + $0x60] sm:$0xff]
    %v702 = vld [vmem:[#allocation6 + $0x68] sm:$0xff]
    %v703 = vld [vmem:[#allocation6 + $0x70] sm:$0xff]
    %v704 = vld [vmem:[#allocation6 + $0x78] sm:$0xff]
    %v705 = vld [vmem:[#allocation6 + $0x80] sm:$0xff]
    %v706 = vld [vmem:[#allocation6 + $0x88] sm:$0xff]
    %v707 = vld [vmem:[#allocation6 + $0x90] sm:$0xff]
    %v708 = vld [vmem:[#allocation6 + $0x98] sm:$0xff]
    %v709 = vld [vmem:[#allocation6 + $0xa0] sm:$0xff]
    %v710 = vld [vmem:[#allocation6 + $0xa8] sm:$0xff]
    %v711 = vld [vmem:[#allocation6 + $0xb0] sm:$0xff]
    %v712 = vld [vmem:[#allocation6 + $0xb8] sm:$0xff]
    %v713 = vld [vmem:[#allocation6 + $0xc0] sm:$0xff]
    %v714 = vld [vmem:[#allocation6 + $0xc8] sm:$0xff]
    %v715 = vld [vmem:[#allocation6 + $0xd0] sm:$0xff]
    %v716 = vld [vmem:[#allocation6 + $0xd8] sm:$0xff]
    %v717 = vld [vmem:[#allocation6 + $0xe0] sm:$0xff]
    %v718 = vld [vmem:[#allocation6 + $0xe8] sm:$0xff]
    %v719 = vld [vmem:[#allocation6 + $0xf0] sm:$0xff]
    %v720 = vld [vmem:[#allocation6 + $0xf8] sm:$0xff]
    %s721 = scalar_lea.vmem [#allocation13], 6
    %v722 = vld [vmem:[%s721] ss:$8 sm:$0x3]
    %v724 = vlaneseq
    %v725 = vshrl.u32 %v724, 7
    %v726 = vsub.s32 0, %v725
    %v727 = vrot.slane %v722, %v726
    %v728 = vlaneseq
    %v729 = vshrl.u32 %v728, 7
    %v730 = vsub.s32 1, %v729
    %v731 = vrot.slane %v722, %v730
    %v766 = vunpack.c.l.b16 %v689
    %v767 = vunpack.c.h.b16 %v689
    %v768 = vunpack.c.l.b16 %v690
    %v769 = vunpack.c.h.b16 %v690
    %v770 = vunpack.c.l.b16 %v691
    %v771 = vunpack.c.h.b16 %v691
    %v772 = vunpack.c.l.b16 %v692
    %v773 = vunpack.c.h.b16 %v692
    %v774 = vunpack.c.l.b16 %v693
    %v775 = vunpack.c.h.b16 %v693
    %v776 = vunpack.c.l.b16 %v694
    %v777 = vunpack.c.h.b16 %v694
    %v778 = vunpack.c.l.b16 %v695
    %v779 = vunpack.c.h.b16 %v695
    %v780 = vunpack.c.l.b16 %v696
    %v781 = vunpack.c.h.b16 %v696
    %v782 = vunpack.c.l.b16 %v697
    %v783 = vunpack.c.h.b16 %v697
    %v784 = vunpack.c.l.b16 %v698
    %v785 = vunpack.c.h.b16 %v698
    %v786 = vunpack.c.l.b16 %v699
    %v787 = vunpack.c.h.b16 %v699
    %v788 = vunpack.c.l.b16 %v700
    %v789 = vunpack.c.h.b16 %v700
    %v790 = vunpack.c.l.b16 %v701
    %v791 = vunpack.c.h.b16 %v701
    %v792 = vunpack.c.l.b16 %v702
    %v793 = vunpack.c.h.b16 %v702
    %v794 = vunpack.c.l.b16 %v703
    %v795 = vunpack.c.h.b16 %v703
    %v796 = vunpack.c.l.b16 %v704
    %v797 = vunpack.c.h.b16 %v704
    %v798 = vunpack.c.l.b16 %v705
    %v799 = vunpack.c.h.b16 %v705
    %v800 = vunpack.c.l.b16 %v706
    %v801 = vunpack.c.h.b16 %v706
    %v802 = vunpack.c.l.b16 %v707
    %v803 = vunpack.c.h.b16 %v707
    %v804 = vunpack.c.l.b16 %v708
    %v805 = vunpack.c.h.b16 %v708
    %v806 = vunpack.c.l.b16 %v709
    %v807 = vunpack.c.h.b16 %v709
    %v808 = vunpack.c.l.b16 %v710
    %v809 = vunpack.c.h.b16 %v710
    %v810 = vunpack.c.l.b16 %v711
    %v811 = vunpack.c.h.b16 %v711
    %v812 = vunpack.c.l.b16 %v712
    %v813 = vunpack.c.h.b16 %v712
    %v814 = vunpack.c.l.b16 %v713
    %v815 = vunpack.c.h.b16 %v713
    %v816 = vunpack.c.l.b16 %v714
    %v817 = vunpack.c.h.b16 %v714
    %v818 = vunpack.c.l.b16 %v715
    %v819 = vunpack.c.h.b16 %v715
    %v820 = vunpack.c.l.b16 %v716
    %v821 = vunpack.c.h.b16 %v716
    %v822 = vunpack.c.l.b16 %v717
    %v823 = vunpack.c.h.b16 %v717
    %v824 = vunpack.c.l.b16 %v718
    %v825 = vunpack.c.h.b16 %v718
    %v826 = vunpack.c.l.b16 %v719
    %v827 = vunpack.c.h.b16 %v719
    %v828 = vunpack.c.l.b16 %v720
    %v829 = vunpack.c.h.b16 %v720
    %v830 = vpack.c.b16 %v768, %v766
    %v831 = vpack.c.b16 %v769, %v767
    %v832 = vpack.c.b16 %v772, %v770
    %v833 = vpack.c.b16 %v773, %v771
    %v834 = vpack.c.b16 %v776, %v774
    %v835 = vpack.c.b16 %v777, %v775
    %v836 = vpack.c.b16 %v780, %v778
    %v837 = vpack.c.b16 %v781, %v779
    %v838 = vpack.c.b16 %v784, %v782
    %v839 = vpack.c.b16 %v785, %v783
    %v840 = vpack.c.b16 %v788, %v786
    %v841 = vpack.c.b16 %v789, %v787
    %v842 = vpack.c.b16 %v792, %v790
    %v843 = vpack.c.b16 %v793, %v791
    %v844 = vpack.c.b16 %v796, %v794
    %v845 = vpack.c.b16 %v797, %v795
    %v846 = vpack.c.b16 %v800, %v798
    %v847 = vpack.c.b16 %v801, %v799
    %v848 = vpack.c.b16 %v804, %v802
    %v849 = vpack.c.b16 %v805, %v803
    %v850 = vpack.c.b16 %v808, %v806
    %v851 = vpack.c.b16 %v809, %v807
    %v852 = vpack.c.b16 %v812, %v810
    %v853 = vpack.c.b16 %v813, %v811
    %v854 = vpack.c.b16 %v816, %v814
    %v855 = vpack.c.b16 %v817, %v815
    %v856 = vpack.c.b16 %v820, %v818
    %v857 = vpack.c.b16 %v821, %v819
    %v858 = vpack.c.b16 %v824, %v822
    %v859 = vpack.c.b16 %v825, %v823
    %v860 = vpack.c.b16 %v828, %v826
    %v861 = vpack.c.b16 %v829, %v827
    %894 = vmatprep.subr.bf16.mxu0 %v845
    %895 = vmatpush1.bf16.msra.mxu0 %v844
    %896 = vmatprep.subr.bf16.mxu0 %v843
    %897 = vmatpush1.bf16.msra.mxu0 %v842
    %898 = vmatprep.subr.bf16.mxu0 %v841
    %899 = vmatpush1.bf16.msra.mxu0 %v840
    %900 = vmatprep.subr.bf16.mxu0 %v839
    %901 = vmatpush1.bf16.msra.mxu0 %v838
    %902 = vmatprep.subr.bf16.mxu0 %v837
    %903 = vmatpush1.bf16.msra.mxu0 %v836
    %904 = vmatprep.subr.bf16.mxu0 %v835
    %905 = vmatpush1.bf16.msra.mxu0 %v834
    %906 = vmatprep.subr.bf16.mxu0 %v833
    %907 = vmatpush1.bf16.msra.mxu0 %v832
    %908 = vmatprep.subr.bf16.mxu0 %v831
    %909 = vmatpush1.bf16.msra.mxu0 %v830
    %910 = vmatprep.subr.bf16.mxu0 %v861
    %911 = vmatpush2.bf16.msra.mxu0 %v860
    %912 = vmatprep.subr.bf16.mxu0 %v859
    %913 = vmatpush2.bf16.msra.mxu0 %v858
    %914 = vmatprep.subr.bf16.mxu0 %v857
    %915 = vmatpush2.bf16.msra.mxu0 %v856
    %916 = vmatprep.subr.bf16.mxu0 %v855
    %917 = vmatpush2.bf16.msra.mxu0 %v854
    %918 = vmatprep.subr.bf16.mxu0 %v853
    %919 = vmatpush2.bf16.msra.mxu0 %v852
    %920 = vmatprep.subr.bf16.mxu0 %v851
    %921 = vmatpush2.bf16.msra.mxu0 %v850
    %922 = vmatprep.subr.bf16.mxu0 %v849
    %923 = vmatpush2.bf16.msra.mxu0 %v848
    %924 = vmatprep.subr.bf16.mxu0 %v847
    %925 = vmatpush2.bf16.msra.mxu0 %v846
    %926 = vmatprep.mubr.bf16.mxu0 %v688
    %927 = vmatmul.mubr.bf16.gmra.mxu0 %v687
    %v928 = vpop.f32.mrf.mxu0
    %v929 = vadd.f32 %v727, %v928
    %v930 = vpop.f32.mrf.mxu0
    %v931 = vadd.f32 %v731, %v930
    %v932 = vpop.f32.mrf.mxu0
    %v933 = vpop.f32.mrf.mxu0
    %934 = vdwg.mxu0
    %s935 = scalar_lea.vmem [#allocation13], 7
    %v936 = vld [vmem:[%s935] ss:$8 sm:$0x3]
    %s937 = scalar_lea.vmem [#allocation13], 40
    %v938 = vld [vmem:[%s937] ss:$8 sm:$0x3]
    %v939 = vadd.f32 %v929, %v931
    %940 = vadd.xlane.f32.xlu0 %v939
    %v941 = vpop.xlane.xlu0 %940
    %v942 = vmul.f32 %v941, 0.00390625
    %v943 = vmul.f32 %v929, %v929
    %v944 = vmul.f32 %v931, %v931
    %v945 = vadd.f32 %v943, %v944
    %946 = vadd.xlane.f32.xlu0 %v945
    %v947 = vpop.xlane.xlu0 %946
    %v948 = vmul.f32 %v947, 0.00390625
    %v949 = vmul.f32 %v942, %v942
    %v950 = vsub.f32 %v948, %v949
    %v951 = vmax.f32 %v950, 0.0
    %v952 = vadd.f32 %v951, 1e-05
    %v953 = vrsqrt.pop %v952
    %v954 = vsub.f32 %v929, %v942
    %v955 = vsub.f32 %v931, %v942
    %v956 = vmul.f32 %v954, %v953
    %v957 = vmul.f32 %v955, %v953
    %v959 = vlaneseq
    %v960 = vshrl.u32 %v959, 7
    %v961 = vsub.s32 0, %v960
    %v962 = vrot.slane %v936, %v961
    %v963 = vlaneseq
    %v964 = vshrl.u32 %v963, 7
    %v965 = vsub.s32 1, %v964
    %v966 = vrot.slane %v936, %v965
    %v969 = vmul.f32 %v956, %v962
    %v970 = vmul.f32 %v957, %v966
    %v972 = vlaneseq
    %v973 = vshrl.u32 %v972, 7
    %v974 = vsub.s32 0, %v973
    %v975 = vrot.slane %v938, %v974
    %v976 = vlaneseq
    %v977 = vshrl.u32 %v976, 7
    %v978 = vsub.s32 1, %v977
    %v979 = vrot.slane %v938, %v978
    %v982 = vadd.f32 %v969, %v975
    %v983 = vadd.f32 %v970, %v979
    %v984 = vmul.f32 %v982, %v982
    %v985 = vmul.f32 %v983, %v983
    %v986 = vmul.f32 %v984, %v982
    %v987 = vmul.f32 %v985, %v983
    %v988 = vmul.f32 %v986, 0.044715
    %v989 = vmul.f32 %v987, 0.044715
    %v990 = vadd.f32 %v982, %v988
    %v991 = vadd.f32 %v983, %v989
    %v992 = vmul.f32 %v990, 0.7978846
    %v993 = vmul.f32 %v991, 0.7978846
    %v994 = vmul.f32 %v982, 0.5
    %v995 = vmul.f32 %v983, 0.5
    %v996 = vtanh.pop %v992
    %v997 = vtanh.pop %v993
    %v998 = vadd.f32 %v996, 1.0
    %v999 = vadd.f32 %v997, 1.0
    %v1000 = vmul.f32 %v994, %v998
    %v1001 = vmul.f32 %v995, %v999
    %v1002 = vpack.c.bf16 %v1000, %v1000
    %v1003 = vpack.c.bf16 %v1001, %v1001
    %v1004 = vld [vmem:[%s5] sm:$0xff]
    %v1005 = vld [vmem:[%s5 + $0x8] sm:$0xff]
    %v1006 = vld [vmem:[%s5 + $0x10] sm:$0xff]
    %v1007 = vld [vmem:[%s5 + $0x18] sm:$0xff]
    %v1008 = vld [vmem:[%s5 + $0x20] sm:$0xff]
    %v1009 = vld [vmem:[%s5 + $0x28] sm:$0xff]
    %v1010 = vld [vmem:[%s5 + $0x30] sm:$0xff]
    %v1011 = vld [vmem:[%s5 + $0x38] sm:$0xff]
    %v1012 = vld [vmem:[%s5 + $0x40] sm:$0xff]
    %v1013 = vld [vmem:[%s5 + $0x48] sm:$0xff]
    %v1014 = vld [vmem:[%s5 + $0x50] sm:$0xff]
    %v1015 = vld [vmem:[%s5 + $0x58] sm:$0xff]
    %v1016 = vld [vmem:[%s5 + $0x60] sm:$0xff]
    %v1017 = vld [vmem:[%s5 + $0x68] sm:$0xff]
    %v1018 = vld [vmem:[%s5 + $0x70] sm:$0xff]
    %v1019 = vld [vmem:[%s5 + $0x78] sm:$0xff]
    %v1020 = vld [vmem:[%s5 + $0x80] sm:$0xff]
    %v1021 = vld [vmem:[%s5 + $0x88] sm:$0xff]
    %v1022 = vld [vmem:[%s5 + $0x90] sm:$0xff]
    %v1023 = vld [vmem:[%s5 + $0x98] sm:$0xff]
    %v1024 = vld [vmem:[%s5 + $0xa0] sm:$0xff]
    %v1025 = vld [vmem:[%s5 + $0xa8] sm:$0xff]
    %v1026 = vld [vmem:[%s5 + $0xb0] sm:$0xff]
    %v1027 = vld [vmem:[%s5 + $0xb8] sm:$0xff]
    %v1028 = vld [vmem:[%s5 + $0xc0] sm:$0xff]
    %v1029 = vld [vmem:[%s5 + $0xc8] sm:$0xff]
    %v1030 = vld [vmem:[%s5 + $0xd0] sm:$0xff]
    %v1031 = vld [vmem:[%s5 + $0xd8] sm:$0xff]
    %v1032 = vld [vmem:[%s5 + $0xe0] sm:$0xff]
    %v1033 = vld [vmem:[%s5 + $0xe8] sm:$0xff]
    %v1034 = vld [vmem:[%s5 + $0xf0] sm:$0xff]
    %v1035 = vld [vmem:[%s5 + $0xf8] sm:$0xff]
    %s1036 = scalar_lea.vmem [#allocation13], 41
    %v1037 = vld [vmem:[%s1036] ss:$8 sm:$0x3]
    %v1039 = vlaneseq
    %v1040 = vshrl.u32 %v1039, 7
    %v1041 = vsub.s32 0, %v1040
    %v1042 = vrot.slane %v1037, %v1041
    %v1043 = vlaneseq
    %v1044 = vshrl.u32 %v1043, 7
    %v1045 = vsub.s32 1, %v1044
    %v1046 = vrot.slane %v1037, %v1045
    %v1081 = vunpack.c.l.b16 %v1004
    %v1082 = vunpack.c.h.b16 %v1004
    %v1083 = vunpack.c.l.b16 %v1005
    %v1084 = vunpack.c.h.b16 %v1005
    %v1085 = vunpack.c.l.b16 %v1006
    %v1086 = vunpack.c.h.b16 %v1006
    %v1087 = vunpack.c.l.b16 %v1007
    %v1088 = vunpack.c.h.b16 %v1007
    %v1089 = vunpack.c.l.b16 %v1008
    %v1090 = vunpack.c.h.b16 %v1008
    %v1091 = vunpack.c.l.b16 %v1009
    %v1092 = vunpack.c.h.b16 %v1009
    %v1093 = vunpack.c.l.b16 %v1010
    %v1094 = vunpack.c.h.b16 %v1010
    %v1095 = vunpack.c.l.b16 %v1011
    %v1096 = vunpack.c.h.b16 %v1011
    %v1097 = vunpack.c.l.b16 %v1012
    %v1098 = vunpack.c.h.b16 %v1012
    %v1099 = vunpack.c.l.b16 %v1013
    %v1100 = vunpack.c.h.b16 %v1013
    %v1101 = vunpack.c.l.b16 %v1014
    %v1102 = vunpack.c.h.b16 %v1014
    %v1103 = vunpack.c.l.b16 %v1015
    %v1104 = vunpack.c.h.b16 %v1015
    %v1105 = vunpack.c.l.b16 %v1016
    %v1106 = vunpack.c.h.b16 %v1016
    %v1107 = vunpack.c.l.b16 %v1017
    %v1108 = vunpack.c.h.b16 %v1017
    %v1109 = vunpack.c.l.b16 %v1018
    %v1110 = vunpack.c.h.b16 %v1018
    %v1111 = vunpack.c.l.b16 %v1019
    %v1112 = vunpack.c.h.b16 %v1019
    %v1113 = vunpack.c.l.b16 %v1020
    %v1114 = vunpack.c.h.b16 %v1020
    %v1115 = vunpack.c.l.b16 %v1021
    %v1116 = vunpack.c.h.b16 %v1021
    %v1117 = vunpack.c.l.b16 %v1022
    %v1118 = vunpack.c.h.b16 %v1022
    %v1119 = vunpack.c.l.b16 %v1023
    %v1120 = vunpack.c.h.b16 %v1023
    %v1121 = vunpack.c.l.b16 %v1024
    %v1122 = vunpack.c.h.b16 %v1024
    %v1123 = vunpack.c.l.b16 %v1025
    %v1124 = vunpack.c.h.b16 %v1025
    %v1125 = vunpack.c.l.b16 %v1026
    %v1126 = vunpack.c.h.b16 %v1026
    %v1127 = vunpack.c.l.b16 %v1027
    %v1128 = vunpack.c.h.b16 %v1027
    %v1129 = vunpack.c.l.b16 %v1028
    %v1130 = vunpack.c.h.b16 %v1028
    %v1131 = vunpack.c.l.b16 %v1029
    %v1132 = vunpack.c.h.b16 %v1029
    %v1133 = vunpack.c.l.b16 %v1030
    %v1134 = vunpack.c.h.b16 %v1030
    %v1135 = vunpack.c.l.b16 %v1031
    %v1136 = vunpack.c.h.b16 %v1031
    %v1137 = vunpack.c.l.b16 %v1032
    %v1138 = vunpack.c.h.b16 %v1032
    %v1139 = vunpack.c.l.b16 %v1033
    %v1140 = vunpack.c.h.b16 %v1033
    %v1141 = vunpack.c.l.b16 %v1034
    %v1142 = vunpack.c.h.b16 %v1034
    %v1143 = vunpack.c.l.b16 %v1035
    %v1144 = vunpack.c.h.b16 %v1035
    %v1145 = vpack.c.b16 %v1083, %v1081
    %v1146 = vpack.c.b16 %v1084, %v1082
    %v1147 = vpack.c.b16 %v1087, %v1085
    %v1148 = vpack.c.b16 %v1088, %v1086
    %v1149 = vpack.c.b16 %v1091, %v1089
    %v1150 = vpack.c.b16 %v1092, %v1090
    %v1151 = vpack.c.b16 %v1095, %v1093
    %v1152 = vpack.c.b16 %v1096, %v1094
    %v1153 = vpack.c.b16 %v1099, %v1097
    %v1154 = vpack.c.b16 %v1100, %v1098
    %v1155 = vpack.c.b16 %v1103, %v1101
    %v1156 = vpack.c.b16 %v1104, %v1102
    %v1157 = vpack.c.b16 %v1107, %v1105
    %v1158 = vpack.c.b16 %v1108, %v1106
    %v1159 = vpack.c.b16 %v1111, %v1109
    %v1160 = vpack.c.b16 %v1112, %v1110
    %v1161 = vpack.c.b16 %v1115, %v1113
    %v1162 = vpack.c.b16 %v1116, %v1114
    %v1163 = vpack.c.b16 %v1119, %v1117
    %v1164 = vpack.c.b16 %v1120, %v1118
    %v1165 = vpack.c.b16 %v1123, %v1121
    %v1166 = vpack.c.b16 %v1124, %v1122
    %v1167 = vpack.c.b16 %v1127, %v1125
    %v1168 = vpack.c.b16 %v1128, %v1126
    %v1169 = vpack.c.b16 %v1131, %v1129
    %v1170 = vpack.c.b16 %v1132, %v1130
    %v1171 = vpack.c.b16 %v1135, %v1133
    %v1172 = vpack.c.b16 %v1136, %v1134
    %v1173 = vpack.c.b16 %v1139, %v1137
    %v1174 = vpack.c.b16 %v1140, %v1138
    %v1175 = vpack.c.b16 %v1143, %v1141
    %v1176 = vpack.c.b16 %v1144, %v1142
    %1209 = vmatprep.subr.bf16.mxu0 %v1160
    %1210 = vmatpush1.bf16.msra.mxu0 %v1159
    %1211 = vmatprep.subr.bf16.mxu0 %v1158
    %1212 = vmatpush1.bf16.msra.mxu0 %v1157
    %1213 = vmatprep.subr.bf16.mxu0 %v1156
    %1214 = vmatpush1.bf16.msra.mxu0 %v1155
    %1215 = vmatprep.subr.bf16.mxu0 %v1154
    %1216 = vmatpush1.bf16.msra.mxu0 %v1153
    %1217 = vmatprep.subr.bf16.mxu0 %v1152
    %1218 = vmatpush1.bf16.msra.mxu0 %v1151
    %1219 = vmatprep.subr.bf16.mxu0 %v1150
    %1220 = vmatpush1.bf16.msra.mxu0 %v1149
    %1221 = vmatprep.subr.bf16.mxu0 %v1148
    %1222 = vmatpush1.bf16.msra.mxu0 %v1147
    %1223 = vmatprep.subr.bf16.mxu0 %v1146
    %1224 = vmatpush1.bf16.msra.mxu0 %v1145
    %1225 = vmatprep.subr.bf16.mxu0 %v1176
    %1226 = vmatpush2.bf16.msra.mxu0 %v1175
    %1227 = vmatprep.subr.bf16.mxu0 %v1174
    %1228 = vmatpush2.bf16.msra.mxu0 %v1173
    %1229 = vmatprep.subr.bf16.mxu0 %v1172
    %1230 = vmatpush2.bf16.msra.mxu0 %v1171
    %1231 = vmatprep.subr.bf16.mxu0 %v1170
    %1232 = vmatpush2.bf16.msra.mxu0 %v1169
    %1233 = vmatprep.subr.bf16.mxu0 %v1168
    %1234 = vmatpush2.bf16.msra.mxu0 %v1167
    %1235 = vmatprep.subr.bf16.mxu0 %v1166
    %1236 = vmatpush2.bf16.msra.mxu0 %v1165
    %1237 = vmatprep.subr.bf16.mxu0 %v1164
    %1238 = vmatpush2.bf16.msra.mxu0 %v1163
    %1239 = vmatprep.subr.bf16.mxu0 %v1162
    %1240 = vmatpush2.bf16.msra.mxu0 %v1161
    %1241 = vmatprep.mubr.bf16.mxu0 %v1003
    %1242 = vmatmul.mubr.bf16.gmra.mxu0 %v1002
    %v1243 = vpop.f32.mrf.mxu0
    %v1244 = vadd.f32 %v1042, %v1243
    %v1245 = vpop.f32.mrf.mxu0
    %v1246 = vadd.f32 %v1046, %v1245
    %v1247 = vpop.f32.mrf.mxu0
    %v1248 = vpop.f32.mrf.mxu0
    %1249 = vdwg.mxu0
    %s1250 = scalar_lea.vmem [#allocation13], 42
    %v1251 = vld [vmem:[%s1250] ss:$8 sm:$0x3]
    %s1252 = scalar_lea.vmem [#allocation13], 43
    %v1253 = vld [vmem:[%s1252] ss:$8 sm:$0x3]
    %v1254 = vadd.f32 %v1244, %v1246
    %1255 = vadd.xlane.f32.xlu0 %v1254
    %v1256 = vpop.xlane.xlu0 %1255
    %v1257 = vmul.f32 %v1256, 0.00390625
    %v1258 = vmul.f32 %v1244, %v1244
    %v1259 = vmul.f32 %v1246, %v1246
    %v1260 = vadd.f32 %v1258, %v1259
    %1261 = vadd.xlane.f32.xlu0 %v1260
    %v1262 = vpop.xlane.xlu0 %1261
    %v1263 = vmul.f32 %v1262, 0.00390625
    %v1264 = vmul.f32 %v1257, %v1257
    %v1265 = vsub.f32 %v1263, %v1264
    %v1266 = vmax.f32 %v1265, 0.0
    %v1267 = vadd.f32 %v1266, 1e-05
    %v1268 = vrsqrt.pop %v1267
    %v1269 = vsub.f32 %v1244, %v1257
    %v1270 = vsub.f32 %v1246, %v1257
    %v1271 = vmul.f32 %v1269, %v1268
    %v1272 = vmul.f32 %v1270, %v1268
    %v1274 = vlaneseq
    %v1275 = vshrl.u32 %v1274, 7
    %v1276 = vsub.s32 0, %v1275
    %v1277 = vrot.slane %v1251, %v1276
    %v1278 = vlaneseq
    %v1279 = vshrl.u32 %v1278, 7
    %v1280 = vsub.s32 1, %v1279
    %v1281 = vrot.slane %v1251, %v1280
    %v1284 = vmul.f32 %v1271, %v1277
    %v1285 = vmul.f32 %v1272, %v1281
    %v1287 = vlaneseq
    %v1288 = vshrl.u32 %v1287, 7
    %v1289 = vsub.s32 0, %v1288
    %v1290 = vrot.slane %v1253, %v1289
    %v1291 = vlaneseq
    %v1292 = vshrl.u32 %v1291, 7
    %v1293 = vsub.s32 1, %v1292
    %v1294 = vrot.slane %v1253, %v1293
    %v1297 = vadd.f32 %v1284, %v1290
    %v1298 = vadd.f32 %v1285, %v1294
    %v1299 = vmul.f32 %v1297, %v1297
    %v1300 = vmul.f32 %v1298, %v1298
    %v1301 = vmul.f32 %v1299, %v1297
    %v1302 = vmul.f32 %v1300, %v1298
    %v1303 = vmul.f32 %v1301, 0.044715
    %v1304 = vmul.f32 %v1302, 0.044715
    %v1305 = vadd.f32 %v1297, %v1303
    %v1306 = vadd.f32 %v1298, %v1304
    %v1307 = vmul.f32 %v1305, 0.7978846
    %v1308 = vmul.f32 %v1306, 0.7978846
    %v1309 = vmul.f32 %v1297, 0.5
    %v1310 = vmul.f32 %v1298, 0.5
    %v1311 = vtanh.pop %v1307
    %v1312 = vtanh.pop %v1308
    %v1313 = vadd.f32 %v1311, 1.0
    %v1314 = vadd.f32 %v1312, 1.0
    %v1315 = vmul.f32 %v1309, %v1313
    %v1316 = vmul.f32 %v1310, %v1314
    %v1317 = vpack.c.bf16 %v1315, %v1315
    %v1318 = vpack.c.bf16 %v1316, %v1316
    %v1319 = vld [vmem:[#allocation7] sm:$0xf]
    %v1320 = vld [vmem:[#allocation7 + $0x4] sm:$0xf]
    %v1321 = vld [vmem:[#allocation7 + $0x8] sm:$0xf]
    %v1322 = vld [vmem:[#allocation7 + $0xc] sm:$0xf]
    %v1323 = vld [vmem:[#allocation7 + $0x10] sm:$0xf]
    %v1324 = vld [vmem:[#allocation7 + $0x14] sm:$0xf]
    %v1325 = vld [vmem:[#allocation7 + $0x18] sm:$0xf]
    %v1326 = vld [vmem:[#allocation7 + $0x1c] sm:$0xf]
    %v1327 = vld [vmem:[#allocation7 + $0x20] sm:$0xf]
    %v1328 = vld [vmem:[#allocation7 + $0x24] sm:$0xf]
    %v1329 = vld [vmem:[#allocation7 + $0x28] sm:$0xf]
    %v1330 = vld [vmem:[#allocation7 + $0x2c] sm:$0xf]
    %v1331 = vld [vmem:[#allocation7 + $0x30] sm:$0xf]
    %v1332 = vld [vmem:[#allocation7 + $0x34] sm:$0xf]
    %v1333 = vld [vmem:[#allocation7 + $0x38] sm:$0xf]
    %v1334 = vld [vmem:[#allocation7 + $0x3c] sm:$0xf]
    %v1335 = vld [vmem:[#allocation7 + $0x40] sm:$0xf]
    %v1336 = vld [vmem:[#allocation7 + $0x44] sm:$0xf]
    %v1337 = vld [vmem:[#allocation7 + $0x48] sm:$0xf]
    %v1338 = vld [vmem:[#allocation7 + $0x4c] sm:$0xf]
    %v1339 = vld [vmem:[#allocation7 + $0x50] sm:$0xf]
    %v1340 = vld [vmem:[#allocation7 + $0x54] sm:$0xf]
    %v1341 = vld [vmem:[#allocation7 + $0x58] sm:$0xf]
    %v1342 = vld [vmem:[#allocation7 + $0x5c] sm:$0xf]
    %v1343 = vld [vmem:[#allocation7 + $0x60] sm:$0xf]
    %v1344 = vld [vmem:[#allocation7 + $0x64] sm:$0xf]
    %v1345 = vld [vmem:[#allocation7 + $0x68] sm:$0xf]
    %v1346 = vld [vmem:[#allocation7 + $0x6c] sm:$0xf]
    %v1347 = vld [vmem:[#allocation7 + $0x70] sm:$0xf]
    %v1348 = vld [vmem:[#allocation7 + $0x74] sm:$0xf]
    %v1349 = vld [vmem:[#allocation7 + $0x78] sm:$0xf]
    %v1350 = vld [vmem:[#allocation7 + $0x7c] sm:$0xf]
    %v1351 = vld [vmem:[#allocation13 + $0x2c] ss:$0 sm:$0xff]
    %v1384 = vunpack.c.l.b16 %v1319
    %v1385 = vunpack.c.l.b16 %v1320
    %v1386 = vunpack.c.l.b16 %v1321
    %v1387 = vunpack.c.l.b16 %v1322
    %v1388 = vunpack.c.l.b16 %v1323
    %v1389 = vunpack.c.l.b16 %v1324
    %v1390 = vunpack.c.l.b16 %v1325
    %v1391 = vunpack.c.l.b16 %v1326
    %v1392 = vunpack.c.l.b16 %v1327
    %v1393 = vunpack.c.l.b16 %v1328
    %v1394 = vunpack.c.l.b16 %v1329
    %v1395 = vunpack.c.l.b16 %v1330
    %v1396 = vunpack.c.l.b16 %v1331
    %v1397 = vunpack.c.l.b16 %v1332
    %v1398 = vunpack.c.l.b16 %v1333
    %v1399 = vunpack.c.l.b16 %v1334
    %v1400 = vunpack.c.l.b16 %v1335
    %v1401 = vunpack.c.l.b16 %v1336
    %v1402 = vunpack.c.l.b16 %v1337
    %v1403 = vunpack.c.l.b16 %v1338
    %v1404 = vunpack.c.l.b16 %v1339
    %v1405 = vunpack.c.l.b16 %v1340
    %v1406 = vunpack.c.l.b16 %v1341
    %v1407 = vunpack.c.l.b16 %v1342
    %v1408 = vunpack.c.l.b16 %v1343
    %v1409 = vunpack.c.l.b16 %v1344
    %v1410 = vunpack.c.l.b16 %v1345
    %v1411 = vunpack.c.l.b16 %v1346
    %v1412 = vunpack.c.l.b16 %v1347
    %v1413 = vunpack.c.l.b16 %v1348
    %v1414 = vunpack.c.l.b16 %v1349
    %v1415 = vunpack.c.l.b16 %v1350
    %v1416 = vpack.c.b16 %v1385, %v1384
    %v1417 = vpack.c.b16 %v1387, %v1386
    %v1418 = vpack.c.b16 %v1389, %v1388
    %v1419 = vpack.c.b16 %v1391, %v1390
    %v1420 = vpack.c.b16 %v1393, %v1392
    %v1421 = vpack.c.b16 %v1395, %v1394
    %v1422 = vpack.c.b16 %v1397, %v1396
    %v1423 = vpack.c.b16 %v1399, %v1398
    %v1424 = vpack.c.b16 %v1401, %v1400
    %v1425 = vpack.c.b16 %v1403, %v1402
    %v1426 = vpack.c.b16 %v1405, %v1404
    %v1427 = vpack.c.b16 %v1407, %v1406
    %v1428 = vpack.c.b16 %v1409, %v1408
    %v1429 = vpack.c.b16 %v1411, %v1410
    %v1430 = vpack.c.b16 %v1413, %v1412
    %v1431 = vpack.c.b16 %v1415, %v1414
    %1448 = vmatprep.subr.bf16.mxu0 0
    %1449 = vmatpush1.bf16.msra.mxu0 %v1423
    %1450 = vmatprep.subr.bf16.mxu0 0
    %1451 = vmatpush1.bf16.msra.mxu0 %v1422
    %1452 = vmatprep.subr.bf16.mxu0 0
    %1453 = vmatpush1.bf16.msra.mxu0 %v1421
    %1454 = vmatprep.subr.bf16.mxu0 0
    %1455 = vmatpush1.bf16.msra.mxu0 %v1420
    %1456 = vmatprep.subr.bf16.mxu0 0
    %1457 = vmatpush1.bf16.msra.mxu0 %v1419
    %1458 = vmatprep.subr.bf16.mxu0 0
    %1459 = vmatpush1.bf16.msra.mxu0 %v1418
    %1460 = vmatprep.subr.bf16.mxu0 0
    %1461 = vmatpush1.bf16.msra.mxu0 %v1417
    %1462 = vmatprep.subr.bf16.mxu0 0
    %1463 = vmatpush1.bf16.msra.mxu0 %v1416
    %1464 = vmatprep.subr.bf16.mxu0 0
    %1465 = vmatpush2.bf16.msra.mxu0 %v1431
    %1466 = vmatprep.subr.bf16.mxu0 0
    %1467 = vmatpush2.bf16.msra.mxu0 %v1430
    %1468 = vmatprep.subr.bf16.mxu0 0
    %1469 = vmatpush2.bf16.msra.mxu0 %v1429
    %1470 = vmatprep.subr.bf16.mxu0 0
    %1471 = vmatpush2.bf16.msra.mxu0 %v1428
    %1472 = vmatprep.subr.bf16.mxu0 0
    %1473 = vmatpush2.bf16.msra.mxu0 %v1427
    %1474 = vmatprep.subr.bf16.mxu0 0
    %1475 = vmatpush2.bf16.msra.mxu0 %v1426
    %1476 = vmatprep.subr.bf16.mxu0 0
    %1477 = vmatpush2.bf16.msra.mxu0 %v1425
    %1478 = vmatprep.subr.bf16.mxu0 0
    %1479 = vmatpush2.bf16.msra.mxu0 %v1424
    %1480 = vmatprep.mubr.bf16.mxu0 %v1318
    %1481 = vmatmul.mubr.bf16.gmra.mxu0 %v1317
    %v1482 = vpop.f32.mrf.mxu0
    %v1483 = vadd.f32 %v1351, %v1482
    %v1484 = vpop.f32.mrf.mxu0
    %v1485 = vpop.f32.mrf.mxu0
    %v1486 = vpop.f32.mrf.mxu0
    %1487 = vdwg.mxu0
    %v1488 = vld [vmem:[#allocation13 + $0x2d] ss:$0 sm:$0xff]
    %v1489 = vld [vmem:[#allocation13 + $0x2e] ss:$0 sm:$0xff]
    %1490 = vadd.xlane.f32.xlu0 %v1483
    %v1491 = vpop.xlane.xlu0 %1490
    %v1492 = vmul.f32 %v1491, 0.0078125
    %v1493 = vmul.f32 %v1483, %v1483
    %1494 = vadd.xlane.f32.xlu0 %v1493
    %v1495 = vpop.xlane.xlu0 %1494
    %v1496 = vmul.f32 %v1495, 0.0078125
    %v1497 = vmul.f32 %v1492, %v1492
    %v1498 = vsub.f32 %v1496, %v1497
    %v1499 = vmax.f32 %v1498, 0.0
    %v1500 = vadd.f32 %v1499, 1e-05
    %v1501 = vrsqrt.pop %v1500
    %v1502 = vsub.f32 %v1483, %v1492
    %v1503 = vmul.f32 %v1502, %v1501
    %v1504 = vmul.f32 %v1503, %v1488
    %v1505 = vadd.f32 %v1504, %v1489
    %v1506 = vmul.f32 %v1505, %v1505
    %v1507 = vmul.f32 %v1506, %v1505
    %v1508 = vmul.f32 %v1507, 0.044715
    %v1509 = vadd.f32 %v1505, %v1508
    %v1510 = vmul.f32 %v1509, 0.7978846
    %v1511 = vmul.f32 %v1505, 0.5
    %v1512 = vtanh.pop %v1510
    %v1513 = vadd.f32 %v1512, 1.0
    %v1514 = vmul.f32 %v1511, %v1513
    %1515 = vst [vmem:[%s12] sm:$0xff] %v1514
    %v1516 = vld [vmem:[%s1] sm:$0xff]
    %v1517 = vld [vmem:[%s1 + $0x8] sm:$0xff]
    %v1518 = vld [vmem:[%s1 + $0x10] sm:$0xff]
    %v1519 = vld [vmem:[%s1 + $0x18] sm:$0xff]
    %v1520 = vld [vmem:[%s1 + $0x20] sm:$0xff]
    %v1521 = vpack.c.bf16 %v1516, %v1516
    %v1522 = vpack.c.bf16 %v1517, %v1517
    %v1523 = vpack.c.bf16 %v1518, %v1518
    %v1524 = vpack.c.bf16 %v1519, %v1519
    %v1525 = vpack.c.bf16 %v1520, %v1520
    %v1526 = vld [vmem:[#allocation9] sm:$0xff]
    %v1527 = vld [vmem:[#allocation9 + $0x8] sm:$0xf]
    %v1528 = vld [vmem:[#allocation9 + $0xc] sm:$0xff]
    %v1529 = vld [vmem:[#allocation9 + $0x14] sm:$0xf]
    %v1530 = vld [vmem:[#allocation9 + $0x18] sm:$0xff]
    %v1531 = vld [vmem:[#allocation9 + $0x20] sm:$0xf]
    %v1532 = vld [vmem:[#allocation9 + $0x24] sm:$0xff]
    %v1533 = vld [vmem:[#allocation9 + $0x2c] sm:$0xf]
    %v1534 = vld [vmem:[#allocation9 + $0x30] sm:$0xff]
    %v1535 = vld [vmem:[#allocation9 + $0x38] sm:$0xf]
    %v1536 = vld [vmem:[#allocation9 + $0x3c] sm:$0xff]
    %v1537 = vld [vmem:[#allocation9 + $0x44] sm:$0xf]
    %v1538 = vld [vmem:[#allocation9 + $0x48] sm:$0xff]
    %v1539 = vld [vmem:[#allocation9 + $0x50] sm:$0xf]
    %v1540 = vld [vmem:[#allocation9 + $0x54] sm:$0xff]
    %v1541 = vld [vmem:[#allocation9 + $0x5c] sm:$0xf]
    %v1542 = vld [vmem:[#allocation9 + $0x60] sm:$0xff]
    %v1543 = vld [vmem:[#allocation9 + $0x68] sm:$0xf]
    %v1544 = vld [vmem:[#allocation9 + $0x6c] sm:$0xff]
    %v1545 = vld [vmem:[#allocation9 + $0x74] sm:$0xf]
    %v1546 = vld [vmem:[#allocation9 + $0x78] sm:$0xff]
    %v1547 = vld [vmem:[#allocation9 + $0x80] sm:$0xf]
    %v1548 = vld [vmem:[#allocation9 + $0x84] sm:$0xff]
    %v1549 = vld [vmem:[#allocation9 + $0x8c] sm:$0xf]
    %v1550 = vld [vmem:[#allocation9 + $0x90] sm:$0xff]
    %v1551 = vld [vmem:[#allocation9 + $0x98] sm:$0xf]
    %v1552 = vld [vmem:[#allocation9 + $0x9c] sm:$0xff]
    %v1553 = vld [vmem:[#allocation9 + $0xa4] sm:$0xf]
    %v1554 = vld [vmem:[#allocation9 + $0xa8] sm:$0xff]
    %v1555 = vld [vmem:[#allocation9 + $0xb0] sm:$0xf]
    %v1556 = vld [vmem:[#allocation9 + $0xb4] sm:$0xff]
    %v1557 = vld [vmem:[#allocation9 + $0xbc] sm:$0xf]
    %v1558 = vld [vmem:[#allocation9 + $0xc0] sm:$0xff]
    %v1559 = vld [vmem:[#allocation9 + $0xc8] sm:$0xf]
    %v1560 = vld [vmem:[#allocation9 + $0xcc] sm:$0xff]
    %v1561 = vld [vmem:[#allocation9 + $0xd4] sm:$0xf]
    %v1562 = vld [vmem:[#allocation9 + $0xd8] sm:$0xff]
    %v1563 = vld [vmem:[#allocation9 + $0xe0] sm:$0xf]
    %v1564 = vld [vmem:[#allocation9 + $0xe4] sm:$0xff]
    %v1565 = vld [vmem:[#allocation9 + $0xec] sm:$0xf]
    %v1566 = vld [vmem:[#allocation9 + $0xf0] sm:$0xff]
    %v1567 = vld [vmem:[#allocation9 + $0xf8] sm:$0xf]
    %v1568 = vld [vmem:[#allocation9 + $0xfc] sm:$0xff]
    %v1569 = vld [vmem:[#allocation9 + $0x104] sm:$0xf]
    %v1570 = vld [vmem:[#allocation9 + $0x108] sm:$0xff]
    %v1571 = vld [vmem:[#allocation9 + $0x110] sm:$0xf]
    %v1572 = vld [vmem:[#allocation9 + $0x114] sm:$0xff]
    %v1573 = vld [vmem:[#allocation9 + $0x11c] sm:$0xf]
    %v1574 = vld [vmem:[#allocation9 + $0x120] sm:$0xff]
    %v1575 = vld [vmem:[#allocation9 + $0x128] sm:$0xf]
    %v1576 = vld [vmem:[#allocation9 + $0x12c] sm:$0xff]
    %v1577 = vld [vmem:[#allocation9 + $0x134] sm:$0xf]
    %v1578 = vld [vmem:[#allocation9 + $0x138] sm:$0xff]
    %v1579 = vld [vmem:[#allocation9 + $0x140] sm:$0xf]
    %v1580 = vld [vmem:[#allocation9 + $0x144] sm:$0xff]
    %v1581 = vld [vmem:[#allocation9 + $0x14c] sm:$0xf]
    %v1582 = vld [vmem:[#allocation9 + $0x150] sm:$0xff]
    %v1583 = vld [vmem:[#allocation9 + $0x158] sm:$0xf]
    %v1584 = vld [vmem:[#allocation9 + $0x15c] sm:$0xff]
    %v1585 = vld [vmem:[#allocation9 + $0x164] sm:$0xf]
    %v1586 = vld [vmem:[#allocation9 + $0x168] sm:$0xff]
    %v1587 = vld [vmem:[#allocation9 + $0x170] sm:$0xf]
    %v1588 = vld [vmem:[#allocation9 + $0x174] sm:$0xff]
    %v1589 = vld [vmem:[#allocation9 + $0x17c] sm:$0xf]
    %v1590 = vld [vmem:[#allocation9 + $0x180] sm:$0xff]
    %v1591 = vld [vmem:[#allocation9 + $0x188] sm:$0xf]
    %v1592 = vld [vmem:[#allocation9 + $0x18c] sm:$0xff]
    %v1593 = vld [vmem:[#allocation9 + $0x194] sm:$0xf]
    %v1594 = vld [vmem:[#allocation9 + $0x198] sm:$0xff]
    %v1595 = vld [vmem:[#allocation9 + $0x1a0] sm:$0xf]
    %v1596 = vld [vmem:[#allocation9 + $0x1a4] sm:$0xff]
    %v1597 = vld [vmem:[#allocation9 + $0x1ac] sm:$0xf]
    %v1598 = vld [vmem:[#allocation9 + $0x1b0] sm:$0xff]
    %v1599 = vld [vmem:[#allocation9 + $0x1b8] sm:$0xf]
    %v1600 = vld [vmem:[#allocation9 + $0x1bc] sm:$0xff]
    %v1601 = vld [vmem:[#allocation9 + $0x1c4] sm:$0xf]
    %v1602 = vld [vmem:[#allocation9 + $0x1c8] sm:$0xff]
    %v1603 = vld [vmem:[#allocation9 + $0x1d0] sm:$0xf]
    %v1604 = vld [vmem:[#allocation9 + $0x1d4] sm:$0xff]
    %v1605 = vld [vmem:[#allocation9 + $0x1dc] sm:$0xf]
    %v1606 = vld [vmem:[#allocation9 + $0x1e0] sm:$0xff]
    %v1607 = vld [vmem:[#allocation9 + $0x1e8] sm:$0xf]
    %v1608 = vld [vmem:[#allocation9 + $0x1ec] sm:$0xff]
    %v1609 = vld [vmem:[#allocation9 + $0x1f4] sm:$0xf]
    %v1610 = vld [vmem:[#allocation9 + $0x1f8] sm:$0xff]
    %v1611 = vld [vmem:[#allocation9 + $0x200] sm:$0xf]
    %v1612 = vld [vmem:[#allocation9 + $0x204] sm:$0xff]
    %v1613 = vld [vmem:[#allocation9 + $0x20c] sm:$0xf]
    %v1614 = vld [vmem:[#allocation9 + $0x210] sm:$0xff]
    %v1615 = vld [vmem:[#allocation9 + $0x218] sm:$0xf]
    %v1616 = vld [vmem:[#allocation9 + $0x21c] sm:$0xff]
    %v1617 = vld [vmem:[#allocation9 + $0x224] sm:$0xf]
    %v1618 = vld [vmem:[#allocation9 + $0x228] sm:$0xff]
    %v1619 = vld [vmem:[#allocation9 + $0x230] sm:$0xf]
    %v1620 = vld [vmem:[#allocation9 + $0x234] sm:$0xff]
    %v1621 = vld [vmem:[#allocation9 + $0x23c] sm:$0xf]
    %v1622 = vld [vmem:[#allocation9 + $0x240] sm:$0xff]
    %v1623 = vld [vmem:[#allocation9 + $0x248] sm:$0xf]
    %v1624 = vld [vmem:[#allocation9 + $0x24c] sm:$0xff]
    %v1625 = vld [vmem:[#allocation9 + $0x254] sm:$0xf]
    %v1626 = vld [vmem:[#allocation9 + $0x258] sm:$0xff]
    %v1627 = vld [vmem:[#allocation9 + $0x260] sm:$0xf]
    %v1628 = vld [vmem:[#allocation9 + $0x264] sm:$0xff]
    %v1629 = vld [vmem:[#allocation9 + $0x26c] sm:$0xf]
    %v1630 = vld [vmem:[#allocation9 + $0x270] sm:$0xff]
    %v1631 = vld [vmem:[#allocation9 + $0x278] sm:$0xf]
    %v1632 = vld [vmem:[#allocation9 + $0x27c] sm:$0xff]
    %v1633 = vld [vmem:[#allocation9 + $0x284] sm:$0xf]
    %v1634 = vld [vmem:[#allocation9 + $0x288] sm:$0xff]
    %v1635 = vld [vmem:[#allocation9 + $0x290] sm:$0xf]
    %v1636 = vld [vmem:[#allocation9 + $0x294] sm:$0xff]
    %v1637 = vld [vmem:[#allocation9 + $0x29c] sm:$0xf]
    %v1638 = vld [vmem:[#allocation9 + $0x2a0] sm:$0xff]
    %v1639 = vld [vmem:[#allocation9 + $0x2a8] sm:$0xf]
    %v1640 = vld [vmem:[#allocation9 + $0x2ac] sm:$0xff]
    %v1641 = vld [vmem:[#allocation9 + $0x2b4] sm:$0xf]
    %v1642 = vld [vmem:[#allocation9 + $0x2b8] sm:$0xff]
    %v1643 = vld [vmem:[#allocation9 + $0x2c0] sm:$0xf]
    %v1644 = vld [vmem:[#allocation9 + $0x2c4] sm:$0xff]
    %v1645 = vld [vmem:[#allocation9 + $0x2cc] sm:$0xf]
    %v1646 = vld [vmem:[#allocation9 + $0x2d0] sm:$0xff]
    %v1647 = vld [vmem:[#allocation9 + $0x2d8] sm:$0xf]
    %v1648 = vld [vmem:[#allocation9 + $0x2dc] sm:$0xff]
    %v1649 = vld [vmem:[#allocation9 + $0x2e4] sm:$0xf]
    %v1650 = vld [vmem:[#allocation9 + $0x2e8] sm:$0xff]
    %v1651 = vld [vmem:[#allocation9 + $0x2f0] sm:$0xf]
    %v1652 = vld [vmem:[#allocation9 + $0x2f4] sm:$0xff]
    %v1653 = vld [vmem:[#allocation9 + $0x2fc] sm:$0xf]
    %v1654 = vld [vmem:[#allocation9 + $0x300] sm:$0xff]
    %v1655 = vld [vmem:[#allocation9 + $0x308] sm:$0xf]
    %v1656 = vld [vmem:[#allocation9 + $0x30c] sm:$0xff]
    %v1657 = vld [vmem:[#allocation9 + $0x314] sm:$0xf]
    %v1658 = vld [vmem:[#allocation9 + $0x318] sm:$0xff]
    %v1659 = vld [vmem:[#allocation9 + $0x320] sm:$0xf]
    %v1660 = vld [vmem:[#allocation9 + $0x324] sm:$0xff]
    %v1661 = vld [vmem:[#allocation9 + $0x32c] sm:$0xf]
    %v1662 = vld [vmem:[#allocation9 + $0x330] sm:$0xff]
    %v1663 = vld [vmem:[#allocation9 + $0x338] sm:$0xf]
    %v1664 = vld [vmem:[#allocation9 + $0x33c] sm:$0xff]
    %v1665 = vld [vmem:[#allocation9 + $0x344] sm:$0xf]
    %v1666 = vld [vmem:[#allocation9 + $0x348] sm:$0xff]
    %v1667 = vld [vmem:[#allocation9 + $0x350] sm:$0xf]
    %v1668 = vld [vmem:[#allocation9 + $0x354] sm:$0xff]
    %v1669 = vld [vmem:[#allocation9 + $0x35c] sm:$0xf]
    %v1670 = vld [vmem:[#allocation9 + $0x360] sm:$0xff]
    %v1671 = vld [vmem:[#allocation9 + $0x368] sm:$0xf]
    %v1672 = vld [vmem:[#allocation9 + $0x36c] sm:$0xff]
    %v1673 = vld [vmem:[#allocation9 + $0x374] sm:$0xf]
    %v1674 = vld [vmem:[#allocation9 + $0x378] sm:$0xff]
    %v1675 = vld [vmem:[#allocation9 + $0x380] sm:$0xf]
    %v1676 = vld [vmem:[#allocation9 + $0x384] sm:$0xff]
    %v1677 = vld [vmem:[#allocation9 + $0x38c] sm:$0xf]
    %v1678 = vld [vmem:[#allocation9 + $0x390] sm:$0xff]
    %v1679 = vld [vmem:[#allocation9 + $0x398] sm:$0xf]
    %v1680 = vld [vmem:[#allocation9 + $0x39c] sm:$0xff]
    %v1681 = vld [vmem:[#allocation9 + $0x3a4] sm:$0xf]
    %v1682 = vld [vmem:[#allocation9 + $0x3a8] sm:$0xff]
    %v1683 = vld [vmem:[#allocation9 + $0x3b0] sm:$0xf]
    %v1684 = vld [vmem:[#allocation9 + $0x3b4] sm:$0xff]
    %v1685 = vld [vmem:[#allocation9 + $0x3bc] sm:$0xf]
    %s1686 = scalar_lea.vmem [#allocation13], 47
    %v1687 = vld [vmem:[%s1686] ss:$8 sm:$0x7]
    %v1689 = vlaneseq
    %v1690 = vshrl.u32 %v1689, 7
    %v1691 = vsub.s32 0, %v1690
    %v1692 = vrot.slane %v1687, %v1691
    %v1693 = vlaneseq
    %v1694 = vshrl.u32 %v1693, 7
    %v1695 = vsub.s32 1, %v1694
    %v1696 = vrot.slane %v1687, %v1695
    %v1697 = vlaneseq
    %v1698 = vshrl.u32 %v1697, 7
    %v1699 = vsub.s32 2, %v1698
    %v1700 = vrot.slane %v1687, %v1699
    %v1864 = vunpack.c.l.b16 %v1526
    %v1865 = vunpack.c.h.b16 %v1526
    %v1866 = vunpack.c.l.b16 %v1527
    %v1867 = vunpack.c.l.b16 %v1528
    %v1868 = vunpack.c.h.b16 %v1528
    %v1869 = vunpack.c.l.b16 %v1529
    %v1870 = vunpack.c.l.b16 %v1530
    %v1871 = vunpack.c.h.b16 %v1530
    %v1872 = vunpack.c.l.b16 %v1531
    %v1873 = vunpack.c.l.b16 %v1532
    %v1874 = vunpack.c.h.b16 %v1532
    %v1875 = vunpack.c.l.b16 %v1533
    %v1876 = vunpack.c.l.b16 %v1534
    %v1877 = vunpack.c.h.b16 %v1534
    %v1878 = vunpack.c.l.b16 %v1535
    %v1879 = vunpack.c.l.b16 %v1536
    %v1880 = vunpack.c.h.b16 %v1536
    %v1881 = vunpack.c.l.b16 %v1537
    %v1882 = vunpack.c.l.b16 %v1538
    %v1883 = vunpack.c.h.b16 %v1538
    %v1884 = vunpack.c.l.b16 %v1539
    %v1885 = vunpack.c.l.b16 %v1540
    %v1886 = vunpack.c.h.b16 %v1540
    %v1887 = vunpack.c.l.b16 %v1541
    %v1888 = vunpack.c.l.b16 %v1542
    %v1889 = vunpack.c.h.b16 %v1542
    %v1890 = vunpack.c.l.b16 %v1543
    %v1891 = vunpack.c.l.b16 %v1544
    %v1892 = vunpack.c.h.b16 %v1544
    %v1893 = vunpack.c.l.b16 %v1545
    %v1894 = vunpack.c.l.b16 %v1546
    %v1895 = vunpack.c.h.b16 %v1546
    %v1896 = vunpack.c.l.b16 %v1547
    %v1897 = vunpack.c.l.b16 %v1548
    %v1898 = vunpack.c.h.b16 %v1548
    %v1899 = vunpack.c.l.b16 %v1549
    %v1900 = vunpack.c.l.b16 %v1550
    %v1901 = vunpack.c.h.b16 %v1550
    %v1902 = vunpack.c.l.b16 %v1551
    %v1903 = vunpack.c.l.b16 %v1552
    %v1904 = vunpack.c.h.b16 %v1552
    %v1905 = vunpack.c.l.b16 %v1553
    %v1906 = vunpack.c.l.b16 %v1554
    %v1907 = vunpack.c.h.b16 %v1554
    %v1908 = vunpack.c.l.b16 %v1555
    %v1909 = vunpack.c.l.b16 %v1556
    %v1910 = vunpack.c.h.b16 %v1556
    %v1911 = vunpack.c.l.b16 %v1557
    %v1912 = vunpack.c.l.b16 %v1558
    %v1913 = vunpack.c.h.b16 %v1558
    %v1914 = vunpack.c.l.b16 %v1559
    %v1915 = vunpack.c.l.b16 %v1560
    %v1916 = vunpack.c.h.b16 %v1560
    %v1917 = vunpack.c.l.b16 %v1561
    %v1918 = vunpack.c.l.b16 %v1562
    %v1919 = vunpack.c.h.b16 %v1562
    %v1920 = vunpack.c.l.b16 %v1563
    %v1921 = vunpack.c.l.b16 %v1564
    %v1922 = vunpack.c.h.b16 %v1564
    %v1923 = vunpack.c.l.b16 %v1565
    %v1924 = vunpack.c.l.b16 %v1566
    %v1925 = vunpack.c.h.b16 %v1566
    %v1926 = vunpack.c.l.b16 %v1567
    %v1927 = vunpack.c.l.b16 %v1568
    %v1928 = vunpack.c.h.b16 %v1568
    %v1929 = vunpack.c.l.b16 %v1569
    %v1930 = vunpack.c.l.b16 %v1570
    %v1931 = vunpack.c.h.b16 %v1570
    %v1932 = vunpack.c.l.b16 %v1571
    %v1933 = vunpack.c.l.b16 %v1572
    %v1934 = vunpack.c.h.b16 %v1572
    %v1935 = vunpack.c.l.b16 %v1573
    %v1936 = vunpack.c.l.b16 %v1574
    %v1937 = vunpack.c.h.b16 %v1574
    %v1938 = vunpack.c.l.b16 %v1575
    %v1939 = vunpack.c.l.b16 %v1576
    %v1940 = vunpack.c.h.b16 %v1576
    %v1941 = vunpack.c.l.b16 %v1577
    %v1942 = vunpack.c.l.b16 %v1578
    %v1943 = vunpack.c.h.b16 %v1578
    %v1944 = vunpack.c.l.b16 %v1579
    %v1945 = vunpack.c.l.b16 %v1580
    %v1946 = vunpack.c.h.b16 %v1580
    %v1947 = vunpack.c.l.b16 %v1581
    %v1948 = vunpack.c.l.b16 %v1582
    %v1949 = vunpack.c.h.b16 %v1582
    %v1950 = vunpack.c.l.b16 %v1583
    %v1951 = vunpack.c.l.b16 %v1584
    %v1952 = vunpack.c.h.b16 %v1584
    %v1953 = vunpack.c.l.b16 %v1585
    %v1954 = vunpack.c.l.b16 %v1586
    %v1955 = vunpack.c.h.b16 %v1586
    %v1956 = vunpack.c.l.b16 %v1587
    %v1957 = vunpack.c.l.b16 %v1588
    %v1958 = vunpack.c.h.b16 %v1588
    %v1959 = vunpack.c.l.b16 %v1589
    %v1960 = vunpack.c.l.b16 %v1590
    %v1961 = vunpack.c.h.b16 %v1590
    %v1962 = vunpack.c.l.b16 %v1591
    %v1963 = vunpack.c.l.b16 %v1592
    %v1964 = vunpack.c.h.b16 %v1592
    %v1965 = vunpack.c.l.b16 %v1593
    %v1966 = vunpack.c.l.b16 %v1594
    %v1967 = vunpack.c.h.b16 %v1594
    %v1968 = vunpack.c.l.b16 %v1595
    %v1969 = vunpack.c.l.b16 %v1596
    %v1970 = vunpack.c.h.b16 %v1596
    %v1971 = vunpack.c.l.b16 %v1597
    %v1972 = vunpack.c.l.b16 %v1598
    %v1973 = vunpack.c.h.b16 %v1598
    %v1974 = vunpack.c.l.b16 %v1599
    %v1975 = vunpack.c.l.b16 %v1600
    %v1976 = vunpack.c.h.b16 %v1600
    %v1977 = vunpack.c.l.b16 %v1601
    %v1978 = vunpack.c.l.b16 %v1602
    %v1979 = vunpack.c.h.b16 %v1602
    %v1980 = vunpack.c.l.b16 %v1603
    %v1981 = vunpack.c.l.b16 %v1604
    %v1982 = vunpack.c.h.b16 %v1604
    %v1983 = vunpack.c.l.b16 %v1605
    %v1984 = vunpack.c.l.b16 %v1606
    %v1985 = vunpack.c.h.b16 %v1606
    %v1986 = vunpack.c.l.b16 %v1607
    %v1987 = vunpack.c.l.b16 %v1608
    %v1988 = vunpack.c.h.b16 %v1608
    %v1989 = vunpack.c.l.b16 %v1609
    %v1990 = vunpack.c.l.b16 %v1610
    %v1991 = vunpack.c.h.b16 %v1610
    %v1992 = vunpack.c.l.b16 %v1611
    %v1993 = vunpack.c.l.b16 %v1612
    %v1994 = vunpack.c.h.b16 %v1612
    %v1995 = vunpack.c.l.b16 %v1613
    %v1996 = vunpack.c.l.b16 %v1614
    %v1997 = vunpack.c.h.b16 %v1614
    %v1998 = vunpack.c.l.b16 %v1615
    %v1999 = vunpack.c.l.b16 %v1616
    %v2000 = vunpack.c.h.b16 %v1616
    %v2001 = vunpack.c.l.b16 %v1617
    %v2002 = vunpack.c.l.b16 %v1618
    %v2003 = vunpack.c.h.b16 %v1618
    %v2004 = vunpack.c.l.b16 %v1619
    %v2005 = vunpack.c.l.b16 %v1620
    %v2006 = vunpack.c.h.b16 %v1620
    %v2007 = vunpack.c.l.b16 %v1621
    %v2008 = vunpack.c.l.b16 %v1622
    %v2009 = vunpack.c.h.b16 %v1622
    %v2010 = vunpack.c.l.b16 %v1623
    %v2011 = vunpack.c.l.b16 %v1624
    %v2012 = vunpack.c.h.b16 %v1624
    %v2013 = vunpack.c.l.b16 %v1625
    %v2014 = vunpack.c.l.b16 %v1626
    %v2015 = vunpack.c.h.b16 %v1626
    %v2016 = vunpack.c.l.b16 %v1627
    %v2017 = vunpack.c.l.b16 %v1628
    %v2018 = vunpack.c.h.b16 %v1628
    %v2019 = vunpack.c.l.b16 %v1629
    %v2020 = vunpack.c.l.b16 %v1630
    %v2021 = vunpack.c.h.b16 %v1630
    %v2022 = vunpack.c.l.b16 %v1631
    %v2023 = vunpack.c.l.b16 %v1632
    %v2024 = vunpack.c.h.b16 %v1632
    %v2025 = vunpack.c.l.b16 %v1633
    %v2026 = vunpack.c.l.b16 %v1634
    %v2027 = vunpack.c.h.b16 %v1634
    %v2028 = vunpack.c.l.b16 %v1635
    %v2029 = vunpack.c.l.b16 %v1636
    %v2030 = vunpack.c.h.b16 %v1636
    %v2031 = vunpack.c.l.b16 %v1637
    %v2032 = vunpack.c.l.b16 %v1638
    %v2033 = vunpack.c.h.b16 %v1638
    %v2034 = vunpack.c.l.b16 %v1639
    %v2035 = vunpack.c.l.b16 %v1640
    %v2036 = vunpack.c.h.b16 %v1640
    %v2037 = vunpack.c.l.b16 %v1641
    %v2038 = vunpack.c.l.b16 %v1642
    %v2039 = vunpack.c.h.b16 %v1642
    %v2040 = vunpack.c.l.b16 %v1643
    %v2041 = vunpack.c.l.b16 %v1644
    %v2042 = vunpack.c.h.b16 %v1644
    %v2043 = vunpack.c.l.b16 %v1645
    %v2044 = vunpack.c.l.b16 %v1646
    %v2045 = vunpack.c.h.b16 %v1646
    %v2046 = vunpack.c.l.b16 %v1647
    %v2047 = vunpack.c.l.b16 %v1648
    %v2048 = vunpack.c.h.b16 %v1648
    %v2049 = vunpack.c.l.b16 %v1649
    %v2050 = vunpack.c.l.b16 %v1650
    %v2051 = vunpack.c.h.b16 %v1650
    %v2052 = vunpack.c.l.b16 %v1651
    %v2053 = vunpack.c.l.b16 %v1652
    %v2054 = vunpack.c.h.b16 %v1652
    %v2055 = vunpack.c.l.b16 %v1653
    %v2056 = vunpack.c.l.b16 %v1654
    %v2057 = vunpack.c.h.b16 %v1654
    %v2058 = vunpack.c.l.b16 %v1655
    %v2059 = vunpack.c.l.b16 %v1656
    %v2060 = vunpack.c.h.b16 %v1656
    %v2061 = vunpack.c.l.b16 %v1657
    %v2062 = vunpack.c.l.b16 %v1658
    %v2063 = vunpack.c.h.b16 %v1658
    %v2064 = vunpack.c.l.b16 %v1659
    %v2065 = vunpack.c.l.b16 %v1660
    %v2066 = vunpack.c.h.b16 %v1660
    %v2067 = vunpack.c.l.b16 %v1661
    %v2068 = vunpack.c.l.b16 %v1662
    %v2069 = vunpack.c.h.b16 %v1662
    %v2070 = vunpack.c.l.b16 %v1663
    %v2071 = vunpack.c.l.b16 %v1664
    %v2072 = vunpack.c.h.b16 %v1664
    %v2073 = vunpack.c.l.b16 %v1665
    %v2074 = vunpack.c.l.b16 %v1666
    %v2075 = vunpack.c.h.b16 %v1666
    %v2076 = vunpack.c.l.b16 %v1667
    %v2077 = vunpack.c.l.b16 %v1668
    %v2078 = vunpack.c.h.b16 %v1668
    %v2079 = vunpack.c.l.b16 %v1669
    %v2080 = vunpack.c.l.b16 %v1670
    %v2081 = vunpack.c.h.b16 %v1670
    %v2082 = vunpack.c.l.b16 %v1671
    %v2083 = vunpack.c.l.b16 %v1672
    %v2084 = vunpack.c.h.b16 %v1672
    %v2085 = vunpack.c.l.b16 %v1673
    %v2086 = vunpack.c.l.b16 %v1674
    %v2087 = vunpack.c.h.b16 %v1674
    %v2088 = vunpack.c.l.b16 %v1675
    %v2089 = vunpack.c.l.b16 %v1676
    %v2090 = vunpack.c.h.b16 %v1676
    %v2091 = vunpack.c.l.b16 %v1677
    %v2092 = vunpack.c.l.b16 %v1678
    %v2093 = vunpack.c.h.b16 %v1678
    %v2094 = vunpack.c.l.b16 %v1679
    %v2095 = vunpack.c.l.b16 %v1680
    %v2096 = vunpack.c.h.b16 %v1680
    %v2097 = vunpack.c.l.b16 %v1681
    %v2098 = vunpack.c.l.b16 %v1682
    %v2099 = vunpack.c.h.b16 %v1682
    %v2100 = vunpack.c.l.b16 %v1683
    %v2101 = vunpack.c.l.b16 %v1684
    %v2102 = vunpack.c.h.b16 %v1684
    %v2103 = vunpack.c.l.b16 %v1685
    %v2104 = vpack.c.b16 %v1867, %v1864
    %v2105 = vpack.c.b16 %v1868, %v1865
    %v2106 = vpack.c.b16 %v1869, %v1866
    %v2107 = vpack.c.b16 %v1873, %v1870
    %v2108 = vpack.c.b16 %v1874, %v1871
    %v2109 = vpack.c.b16 %v1875, %v1872
    %v2110 = vpack.c.b16 %v1879, %v1876
    %v2111 = vpack.c.b16 %v1880, %v1877
    %v2112 = vpack.c.b16 %v1881, %v1878
    %v2113 = vpack.c.b16 %v1885, %v1882
    %v2114 = vpack.c.b16 %v1886, %v1883
    %v2115 = vpack.c.b16 %v1887, %v1884
    %v2116 = vpack.c.b16 %v1891, %v1888
    %v2117 = vpack.c.b16 %v1892, %v1889
    %v2118 = vpack.c.b16 %v1893, %v1890
    %v2119 = vpack.c.b16 %v1897, %v1894
    %v2120 = vpack.c.b16 %v1898, %v1895
    %v2121 = vpack.c.b16 %v1899, %v1896
    %v2122 = vpack.c.b16 %v1903, %v1900
    %v2123 = vpack.c.b16 %v1904, %v1901
    %v2124 = vpack.c.b16 %v1905, %v1902
    %v2125 = vpack.c.b16 %v1909, %v1906
    %v2126 = vpack.c.b16 %v1910, %v1907
    %v2127 = vpack.c.b16 %v1911, %v1908
    %v2128 = vpack.c.b16 %v1915, %v1912
    %v2129 = vpack.c.b16 %v1916, %v1913
    %v2130 = vpack.c.b16 %v1917, %v1914
    %v2131 = vpack.c.b16 %v1921, %v1918
    %v2132 = vpack.c.b16 %v1922, %v1919
    %v2133 = vpack.c.b16 %v1923, %v1920
    %v2134 = vpack.c.b16 %v1927, %v1924
    %v2135 = vpack.c.b16 %v1928, %v1925
    %v2136 = vpack.c.b16 %v1929, %v1926
    %v2137 = vpack.c.b16 %v1933, %v1930
    %v2138 = vpack.c.b16 %v1934, %v1931
    %v2139 = vpack.c.b16 %v1935, %v1932
    %v2140 = vpack.c.b16 %v1939, %v1936
    %v2141 = vpack.c.b16 %v1940, %v1937
    %v2142 = vpack.c.b16 %v1941, %v1938
    %v2143 = vpack.c.b16 %v1945, %v1942
    %v2144 = vpack.c.b16 %v1946, %v1943
    %v2145 = vpack.c.b16 %v1947, %v1944
    %v2146 = vpack.c.b16 %v1951, %v1948
    %v2147 = vpack.c.b16 %v1952, %v1949
    %v2148 = vpack.c.b16 %v1953, %v1950
    %v2149 = vpack.c.b16 %v1957, %v1954
    %v2150 = vpack.c.b16 %v1958, %v1955
    %v2151 = vpack.c.b16 %v1959, %v1956
    %v2152 = vpack.c.b16 %v1963, %v1960
    %v2153 = vpack.c.b16 %v1964, %v1961
    %v2154 = vpack.c.b16 %v1965, %v1962
    %v2155 = vpack.c.b16 %v1969, %v1966
    %v2156 = vpack.c.b16 %v1970, %v1967
    %v2157 = vpack.c.b16 %v1971, %v1968
    %v2158 = vpack.c.b16 %v1975, %v1972
    %v2159 = vpack.c.b16 %v1976, %v1973
    %v2160 = vpack.c.b16 %v1977, %v1974
    %v2161 = vpack.c.b16 %v1981, %v1978
    %v2162 = vpack.c.b16 %v1982, %v1979
    %v2163 = vpack.c.b16 %v1983, %v1980
    %v2164 = vpack.c.b16 %v1987, %v1984
    %v2165 = vpack.c.b16 %v1988, %v1985
    %v2166 = vpack.c.b16 %v1989, %v1986
    %v2167 = vpack.c.b16 %v1993, %v1990
    %v2168 = vpack.c.b16 %v1994, %v1991
    %v2169 = vpack.c.b16 %v1995, %v1992
    %v2170 = vpack.c.b16 %v1999, %v1996
    %v2171 = vpack.c.b16 %v2000, %v1997
    %v2172 = vpack.c.b16 %v2001, %v1998
    %v2173 = vpack.c.b16 %v2005, %v2002
    %v2174 = vpack.c.b16 %v2006, %v2003
    %v2175 = vpack.c.b16 %v2007, %v2004
    %v2176 = vpack.c.b16 %v2011, %v2008
    %v2177 = vpack.c.b16 %v2012, %v2009
    %v2178 = vpack.c.b16 %v2013, %v2010
    %v2179 = vpack.c.b16 %v2017, %v2014
    %v2180 = vpack.c.b16 %v2018, %v2015
    %v2181 = vpack.c.b16 %v2019, %v2016
    %v2182 = vpack.c.b16 %v2023, %v2020
    %v2183 = vpack.c.b16 %v2024, %v2021
    %v2184 = vpack.c.b16 %v2025, %v2022
    %v2185 = vpack.c.b16 %v2029, %v2026
    %v2186 = vpack.c.b16 %v2030, %v2027
    %v2187 = vpack.c.b16 %v2031, %v2028
    %v2188 = vpack.c.b16 %v2035, %v2032
    %v2189 = vpack.c.b16 %v2036, %v2033
    %v2190 = vpack.c.b16 %v2037, %v2034
    %v2191 = vpack.c.b16 %v2041, %v2038
    %v2192 = vpack.c.b16 %v2042, %v2039
    %v2193 = vpack.c.b16 %v2043, %v2040
    %v2194 = vpack.c.b16 %v2047, %v2044
    %v2195 = vpack.c.b16 %v2048, %v2045
    %v2196 = vpack.c.b16 %v2049, %v2046
    %v2197 = vpack.c.b16 %v2053, %v2050
    %v2198 = vpack.c.b16 %v2054, %v2051
    %v2199 = vpack.c.b16 %v2055, %v2052
    %v2200 = vpack.c.b16 %v2059, %v2056
    %v2201 = vpack.c.b16 %v2060, %v2057
    %v2202 = vpack.c.b16 %v2061, %v2058
    %v2203 = vpack.c.b16 %v2065, %v2062
    %v2204 = vpack.c.b16 %v2066, %v2063
    %v2205 = vpack.c.b16 %v2067, %v2064
    %v2206 = vpack.c.b16 %v2071, %v2068
    %v2207 = vpack.c.b16 %v2072, %v2069
    %v2208 = vpack.c.b16 %v2073, %v2070
    %v2209 = vpack.c.b16 %v2077, %v2074
    %v2210 = vpack.c.b16 %v2078, %v2075
    %v2211 = vpack.c.b16 %v2079, %v2076
    %v2212 = vpack.c.b16 %v2083, %v2080
    %v2213 = vpack.c.b16 %v2084, %v2081
    %v2214 = vpack.c.b16 %v2085, %v2082
    %v2215 = vpack.c.b16 %v2089, %v2086
    %v2216 = vpack.c.b16 %v2090, %v2087
    %v2217 = vpack.c.b16 %v2091, %v2088
    %v2218 = vpack.c.b16 %v2095, %v2092
    %v2219 = vpack.c.b16 %v2096, %v2093
    %v2220 = vpack.c.b16 %v2097, %v2094
    %v2221 = vpack.c.b16 %v2101, %v2098
    %v2222 = vpack.c.b16 %v2102, %v2099
    %v2223 = vpack.c.b16 %v2103, %v2100
    %2344 = vmatprep.subr.bf16.mxu0 %v2126
    %2345 = vmatpush1.bf16.msra.mxu0 %v2125
    %2346 = vmatprep.subr.bf16.mxu0 %v2123
    %2347 = vmatpush1.bf16.msra.mxu0 %v2122
    %2348 = vmatprep.subr.bf16.mxu0 %v2120
    %2349 = vmatpush1.bf16.msra.mxu0 %v2119
    %2350 = vmatprep.subr.bf16.mxu0 %v2117
    %2351 = vmatpush1.bf16.msra.mxu0 %v2116
    %2352 = vmatprep.subr.bf16.mxu0 %v2114
    %2353 = vmatpush1.bf16.msra.mxu0 %v2113
    %2354 = vmatprep.subr.bf16.mxu0 %v2111
    %2355 = vmatpush1.bf16.msra.mxu0 %v2110
    %2356 = vmatprep.subr.bf16.mxu0 %v2108
    %2357 = vmatpush1.bf16.msra.mxu0 %v2107
    %2358 = vmatprep.subr.bf16.mxu0 %v2105
    %2359 = vmatpush1.bf16.msra.mxu0 %v2104
    %2360 = vmatprep.subr.bf16.mxu0 %v2150
    %2361 = vmatpush2.bf16.msra.mxu0 %v2149
    %2362 = vmatprep.subr.bf16.mxu0 %v2147
    %2363 = vmatpush2.bf16.msra.mxu0 %v2146
    %2364 = vmatprep.subr.bf16.mxu0 %v2144
    %2365 = vmatpush2.bf16.msra.mxu0 %v2143
    %2366 = vmatprep.subr.bf16.mxu0 %v2141
    %2367 = vmatpush2.bf16.msra.mxu0 %v2140
    %2368 = vmatprep.subr.bf16.mxu0 %v2138
    %2369 = vmatpush2.bf16.msra.mxu0 %v2137
    %2370 = vmatprep.subr.bf16.mxu0 %v2135
    %2371 = vmatpush2.bf16.msra.mxu0 %v2134
    %2372 = vmatprep.subr.bf16.mxu0 %v2132
    %2373 = vmatpush2.bf16.msra.mxu0 %v2131
    %2374 = vmatprep.subr.bf16.mxu0 %v2129
    %2375 = vmatpush2.bf16.msra.mxu0 %v2128
    %2376 = vmatprep.mubr.bf16.mxu0 %v1522
    %2377 = vmatmul.mubr.bf16.gmra.mxu0 %v1521
    %v2378 = vpop.f32.mrf.mxu0
    %v2379 = vadd.f32 %v1692, %v2378
    %v2380 = vpop.f32.mrf.mxu0
    %v2381 = vadd.f32 %v1696, %v2380
    %v2382 = vpop.f32.mrf.mxu0
    %v2383 = vpop.f32.mrf.mxu0
    %2384 = vdwg.mxu0
    %2385 = vmatprep.subr.bf16.mxu0 %v2174
    %2386 = vmatpush1.bf16.msra.mxu0 %v2173
    %2387 = vmatprep.subr.bf16.mxu0 %v2171
    %2388 = vmatpush1.bf16.msra.mxu0 %v2170
    %2389 = vmatprep.subr.bf16.mxu0 %v2168
    %2390 = vmatpush1.bf16.msra.mxu0 %v2167
    %2391 = vmatprep.subr.bf16.mxu0 %v2165
    %2392 = vmatpush1.bf16.msra.mxu0 %v2164
    %2393 = vmatprep.subr.bf16.mxu0 %v2162
    %2394 = vmatpush1.bf16.msra.mxu0 %v2161
    %2395 = vmatprep.subr.bf16.mxu0 %v2159
    %2396 = vmatpush1.bf16.msra.mxu0 %v2158
    %2397 = vmatprep.subr.bf16.mxu0 %v2156
    %2398 = vmatpush1.bf16.msra.mxu0 %v2155
    %2399 = vmatprep.subr.bf16.mxu0 %v2153
    %2400 = vmatpush1.bf16.msra.mxu0 %v2152
    %2401 = vmatprep.subr.bf16.mxu0 %v2198
    %2402 = vmatpush2.bf16.msra.mxu0 %v2197
    %2403 = vmatprep.subr.bf16.mxu0 %v2195
    %2404 = vmatpush2.bf16.msra.mxu0 %v2194
    %2405 = vmatprep.subr.bf16.mxu0 %v2192
    %2406 = vmatpush2.bf16.msra.mxu0 %v2191
    %2407 = vmatprep.subr.bf16.mxu0 %v2189
    %2408 = vmatpush2.bf16.msra.mxu0 %v2188
    %2409 = vmatprep.subr.bf16.mxu0 %v2186
    %2410 = vmatpush2.bf16.msra.mxu0 %v2185
    %2411 = vmatprep.subr.bf16.mxu0 %v2183
    %2412 = vmatpush2.bf16.msra.mxu0 %v2182
    %2413 = vmatprep.subr.bf16.mxu0 %v2180
    %2414 = vmatpush2.bf16.msra.mxu0 %v2179
    %2415 = vmatprep.subr.bf16.mxu0 %v2177
    %2416 = vmatpush2.bf16.msra.mxu0 %v2176
    %2417 = vmatprep.mubr.bf16.mxu0 %v1524
    %2418 = vmatmul.mubr.bf16.gmra.mxu0 %v1523
    %v2419 = vpop.f32.mrf.mxu0
    %v2420 = vadd.f32 %v2379, %v2419
    %v2421 = vpop.f32.mrf.mxu0
    %v2422 = vadd.f32 %v2381, %v2421
    %v2423 = vpop.f32.mrf.mxu0
    %v2424 = vpop.f32.mrf.mxu0
    %2425 = vdwg.mxu0
    %2426 = vmatprep.subr.bf16.mxu0 %v2222
    %2427 = vmatpush1.bf16.msra.mxu0 %v2221
    %2428 = vmatprep.subr.bf16.mxu0 %v2219
    %2429 = vmatpush1.bf16.msra.mxu0 %v2218
    %2430 = vmatprep.subr.bf16.mxu0 %v2216
    %2431 = vmatpush1.bf16.msra.mxu0 %v2215
    %2432 = vmatprep.subr.bf16.mxu0 %v2213
    %2433 = vmatpush1.bf16.msra.mxu0 %v2212
    %2434 = vmatprep.subr.bf16.mxu0 %v2210
    %2435 = vmatpush1.bf16.msra.mxu0 %v2209
    %2436 = vmatprep.subr.bf16.mxu0 %v2207
    %2437 = vmatpush1.bf16.msra.mxu0 %v2206
    %2438 = vmatprep.subr.bf16.mxu0 %v2204
    %2439 = vmatpush1.bf16.msra.mxu0 %v2203
    %2440 = vmatprep.subr.bf16.mxu0 %v2201
    %2441 = vmatpush1.bf16.msra.mxu0 %v2200
    %2442 = vmatprep.subr.bf16.mxu0 0
    %2443 = vmatpush2.bf16.msra.mxu0 0
    %2444 = vmatprep.subr.bf16.mxu0 0
    %2445 = vmatpush2.bf16.msra.mxu0 0
    %2446 = vmatprep.subr.bf16.mxu0 0
    %2447 = vmatpush2.bf16.msra.mxu0 0
    %2448 = vmatprep.subr.bf16.mxu0 0
    %2449 = vmatpush2.bf16.msra.mxu0 0
    %2450 = vmatprep.subr.bf16.mxu0 0
    %2451 = vmatpush2.bf16.msra.mxu0 0
    %2452 = vmatprep.subr.bf16.mxu0 0
    %2453 = vmatpush2.bf16.msra.mxu0 0
    %2454 = vmatprep.subr.bf16.mxu0 0
    %2455 = vmatpush2.bf16.msra.mxu0 0
    %2456 = vmatprep.subr.bf16.mxu0 0
    %2457 = vmatpush2.bf16.msra.mxu0 0
    %2458 = vmatprep.mubr.bf16.mxu0 0
    %2459 = vmatmul.mubr.bf16.gmra.mxu0 %v1525
    %v2460 = vpop.f32.mrf.mxu0
    %v2461 = vadd.f32 %v2420, %v2460
    %v2462 = vpop.f32.mrf.mxu0
    %v2463 = vadd.f32 %v2422, %v2462
    %v2464 = vpop.f32.mrf.mxu0
    %v2465 = vpop.f32.mrf.mxu0
    %2466 = vdwg.mxu0
    %2467 = vmatprep.subr.bf16.mxu0 0
    %2468 = vmatpush1.bf16.msra.mxu0 %v2127
    %2469 = vmatprep.subr.bf16.mxu0 0
    %2470 = vmatpush1.bf16.msra.mxu0 %v2124
    %2471 = vmatprep.subr.bf16.mxu0 0
    %2472 = vmatpush1.bf16.msra.mxu0 %v2121
    %2473 = vmatprep.subr.bf16.mxu0 0
    %2474 = vmatpush1.bf16.msra.mxu0 %v2118
    %2475 = vmatprep.subr.bf16.mxu0 0
    %2476 = vmatpush1.bf16.msra.mxu0 %v2115
    %2477 = vmatprep.subr.bf16.mxu0 0
    %2478 = vmatpush1.bf16.msra.mxu0 %v2112
    %2479 = vmatprep.subr.bf16.mxu0 0
    %2480 = vmatpush1.bf16.msra.mxu0 %v2109
    %2481 = vmatprep.subr.bf16.mxu0 0
    %2482 = vmatpush1.bf16.msra.mxu0 %v2106
    %2483 = vmatprep.subr.bf16.mxu0 0
    %2484 = vmatpush2.bf16.msra.mxu0 %v2151
    %2485 = vmatprep.subr.bf16.mxu0 0
    %2486 = vmatpush2.bf16.msra.mxu0 %v2148
    %2487 = vmatprep.subr.bf16.mxu0 0
    %2488 = vmatpush2.bf16.msra.mxu0 %v2145
    %2489 = vmatprep.subr.bf16.mxu0 0
    %2490 = vmatpush2.bf16.msra.mxu0 %v2142
    %2491 = vmatprep.subr.bf16.mxu0 0
    %2492 = vmatpush2.bf16.msra.mxu0 %v2139
    %2493 = vmatprep.subr.bf16.mxu0 0
    %2494 = vmatpush2.bf16.msra.mxu0 %v2136
    %2495 = vmatprep.subr.bf16.mxu0 0
    %2496 = vmatpush2.bf16.msra.mxu0 %v2133
    %2497 = vmatprep.subr.bf16.mxu0 0
    %2498 = vmatpush2.bf16.msra.mxu0 %v2130
    %2499 = vmatprep.mubr.bf16.mxu0 %v1522
    %2500 = vmatmul.mubr.bf16.gmra.mxu0 %v1521
    %v2501 = vpop.f32.mrf.mxu0
    %v2502 = vadd.f32 %v1700, %v2501
    %v2503 = vpop.f32.mrf.mxu0
    %v2504 = vpop.f32.mrf.mxu0
    %v2505 = vpop.f32.mrf.mxu0
    %2506 = vdwg.mxu0
    %2507 = vmatprep.subr.bf16.mxu0 0
    %2508 = vmatpush1.bf16.msra.mxu0 %v2175
    %2509 = vmatprep.subr.bf16.mxu0 0
    %2510 = vmatpush1.bf16.msra.mxu0 %v2172
    %2511 = vmatprep.subr.bf16.mxu0 0
    %2512 = vmatpush1.bf16.msra.mxu0 %v2169
    %2513 = vmatprep.subr.bf16.mxu0 0
    %2514 = vmatpush1.bf16.msra.mxu0 %v2166
    %2515 = vmatprep.subr.bf16.mxu0 0
    %2516 = vmatpush1.bf16.msra.mxu0 %v2163
    %2517 = vmatprep.subr.bf16.mxu0 0
    %2518 = vmatpush1.bf16.msra.mxu0 %v2160
    %2519 = vmatprep.subr.bf16.mxu0 0
    %2520 = vmatpush1.bf16.msra.mxu0 %v2157
    %2521 = vmatprep.subr.bf16.mxu0 0
    %2522 = vmatpush1.bf16.msra.mxu0 %v2154
    %2523 = vmatprep.subr.bf16.mxu0 0
    %2524 = vmatpush2.bf16.msra.mxu0 %v2199
    %2525 = vmatprep.subr.bf16.mxu0 0
    %2526 = vmatpush2.bf16.msra.mxu0 %v2196
    %2527 = vmatprep.subr.bf16.mxu0 0
    %2528 = vmatpush2.bf16.msra.mxu0 %v2193
    %2529 = vmatprep.subr.bf16.mxu0 0
    %2530 = vmatpush2.bf16.msra.mxu0 %v2190
    %2531 = vmatprep.subr.bf16.mxu0 0
    %2532 = vmatpush2.bf16.msra.mxu0 %v2187
    %2533 = vmatprep.subr.bf16.mxu0 0
    %2534 = vmatpush2.bf16.msra.mxu0 %v2184
    %2535 = vmatprep.subr.bf16.mxu0 0
    %2536 = vmatpush2.bf16.msra.mxu0 %v2181
    %2537 = vmatprep.subr.bf16.mxu0 0
    %2538 = vmatpush2.bf16.msra.mxu0 %v2178
    %2539 = vmatprep.mubr.bf16.mxu0 %v1524
    %2540 = vmatmul.mubr.bf16.gmra.mxu0 %v1523
    %v2541 = vpop.f32.mrf.mxu0
    %v2542 = vadd.f32 %v2502, %v2541
    %v2543 = vpop.f32.mrf.mxu0
    %v2544 = vpop.f32.mrf.mxu0
    %v2545 = vpop.f32.mrf.mxu0
    %2546 = vdwg.mxu0
    %2547 = vmatprep.subr.bf16.mxu0 0
    %2548 = vmatpush1.bf16.msra.mxu0 %v2223
    %2549 = vmatprep.subr.bf16.mxu0 0
    %2550 = vmatpush1.bf16.msra.mxu0 %v2220
    %2551 = vmatprep.subr.bf16.mxu0 0
    %2552 = vmatpush1.bf16.msra.mxu0 %v2217
    %2553 = vmatprep.subr.bf16.mxu0 0
    %2554 = vmatpush1.bf16.msra.mxu0 %v2214
    %2555 = vmatprep.subr.bf16.mxu0 0
    %2556 = vmatpush1.bf16.msra.mxu0 %v2211
    %2557 = vmatprep.subr.bf16.mxu0 0
    %2558 = vmatpush1.bf16.msra.mxu0 %v2208
    %2559 = vmatprep.subr.bf16.mxu0 0
    %2560 = vmatpush1.bf16.msra.mxu0 %v2205
    %2561 = vmatprep.subr.bf16.mxu0 0
    %2562 = vmatpush1.bf16.msra.mxu0 %v2202
    %2563 = vmatprep.subr.bf16.mxu0 0
    %2564 = vmatpush2.bf16.msra.mxu0 0
    %2565 = vmatprep.subr.bf16.mxu0 0
    %2566 = vmatpush2.bf16.msra.mxu0 0
    %2567 = vmatprep.subr.bf16.mxu0 0
    %2568 = vmatpush2.bf16.msra.mxu0 0
    %2569 = vmatprep.subr.bf16.mxu0 0
    %2570 = vmatpush2.bf16.msra.mxu0 0
    %2571 = vmatprep.subr.bf16.mxu0 0
    %2572 = vmatpush2.bf16.msra.mxu0 0
    %2573 = vmatprep.subr.bf16.mxu0 0
    %2574 = vmatpush2.bf16.msra.mxu0 0
    %2575 = vmatprep.subr.bf16.mxu0 0
    %2576 = vmatpush2.bf16.msra.mxu0 0
    %2577 = vmatprep.subr.bf16.mxu0 0
    %2578 = vmatpush2.bf16.msra.mxu0 0
    %2579 = vmatprep.mubr.bf16.mxu0 0
    %2580 = vmatmul.mubr.bf16.gmra.mxu0 %v1525
    %v2581 = vpop.f32.mrf.mxu0
    %v2582 = vadd.f32 %v2542, %v2581
    %v2583 = vpop.f32.mrf.mxu0
    %v2584 = vpop.f32.mrf.mxu0
    %v2585 = vpop.f32.mrf.mxu0
    %2586 = vdwg.mxu0
    %s2587 = scalar_lea.vmem [#allocation13], 80
    %v2588 = vld [vmem:[%s2587] ss:$8 sm:$0x7]
    %s2589 = scalar_lea.vmem [#allocation13], 81
    %v2590 = vld [vmem:[%s2589] ss:$8 sm:$0x7]
    %v2591 = vadd.f32 %v2461, %v2463
    %v2592 = vadd.f32 %v2591, %v2582
    %2593 = vadd.xlane.f32.xlu0 %v2592
    %v2594 = vpop.xlane.xlu0 %2593
    %v2595 = vmul.f32 %v2594, 0.003533569
    %v2596 = vmul.f32 %v2461, %v2461
    %v2597 = vmul.f32 %v2463, %v2463
    %v2598 = vmul.f32 %v2582, %v2582
    %v2599 = vadd.f32 %v2596, %v2597
    %v2600 = vadd.f32 %v2599, %v2598
    %2601 = vadd.xlane.f32.xlu0 %v2600
    %v2602 = vpop.xlane.xlu0 %2601
    %v2603 = vmul.f32 %v2602, 0.003533569
    %v2604 = vmul.f32 %v2595, %v2595
    %v2605 = vsub.f32 %v2603, %v2604
    %v2606 = vmax.f32 %v2605, 0.0
    %v2607 = vadd.f32 %v2606, 1e-05
    %v2608 = vrsqrt.pop %v2607
    %v2609 = vsub.f32 %v2461, %v2595
    %v2610 = vsub.f32 %v2463, %v2595
    %v2611 = vsub.f32 %v2582, %v2595
    %v2612 = vmul.f32 %v2609, %v2608
    %v2613 = vmul.f32 %v2610, %v2608
    %v2614 = vmul.f32 %v2611, %v2608
    %v2616 = vlaneseq
    %v2617 = vshrl.u32 %v2616, 7
    %v2618 = vsub.s32 0, %v2617
    %v2619 = vrot.slane %v2588, %v2618
    %v2620 = vlaneseq
    %v2621 = vshrl.u32 %v2620, 7
    %v2622 = vsub.s32 1, %v2621
    %v2623 = vrot.slane %v2588, %v2622
    %v2624 = vlaneseq
    %v2625 = vshrl.u32 %v2624, 7
    %v2626 = vsub.s32 2, %v2625
    %v2627 = vrot.slane %v2588, %v2626
    %v2631 = vmul.f32 %v2612, %v2619
    %v2632 = vmul.f32 %v2613, %v2623
    %v2633 = vmul.f32 %v2614, %v2627
    %v2635 = vlaneseq
    %v2636 = vshrl.u32 %v2635, 7
    %v2637 = vsub.s32 0, %v2636
    %v2638 = vrot.slane %v2590, %v2637
    %v2639 = vlaneseq
    %v2640 = vshrl.u32 %v2639, 7
    %v2641 = vsub.s32 1, %v2640
    %v2642 = vrot.slane %v2590, %v2641
    %v2643 = vlaneseq
    %v2644 = vshrl.u32 %v2643, 7
    %v2645 = vsub.s32 2, %v2644
    %v2646 = vrot.slane %v2590, %v2645
    %v2650 = vadd.f32 %v2631, %v2638
    %v2651 = vadd.f32 %v2632, %v2642
    %v2652 = vadd.f32 %v2633, %v2646
    %v2653 = vmul.f32 %v2650, %v2650
    %v2654 = vmul.f32 %v2651, %v2651
    %v2655 = vmul.f32 %v2652, %v2652
    %v2656 = vmul.f32 %v2653, %v2650
    %v2657 = vmul.f32 %v2654, %v2651
    %v2658 = vmul.f32 %v2655, %v2652
    %v2659 = vmul.f32 %v2656, 0.044715
    %v2660 = vmul.f32 %v2657, 0.044715
    %v2661 = vmul.f32 %v2658, 0.044715
    %v2662 = vadd.f32 %v2650, %v2659
    %v2663 = vadd.f32 %v2651, %v2660
    %v2664 = vadd.f32 %v2652, %v2661
    %v2665 = vmul.f32 %v2662, 0.7978846
    %v2666 = vmul.f32 %v2663, 0.7978846
    %v2667 = vmul.f32 %v2664, 0.7978846
    %v2668 = vmul.f32 %v2650, 0.5
    %v2669 = vmul.f32 %v2651, 0.5
    %v2670 = vmul.f32 %v2652, 0.5
    %v2671 = vtanh.pop %v2665
    %v2672 = vtanh.pop %v2666
    %v2673 = vtanh.pop %v2667
    %v2674 = vadd.f32 %v2671, 1.0
    %v2675 = vadd.f32 %v2672, 1.0
    %v2676 = vadd.f32 %v2673, 1.0
    %v2677 = vmul.f32 %v2668, %v2674
    %v2678 = vmul.f32 %v2669, %v2675
    %v2679 = vmul.f32 %v2670, %v2676
    %v2680 = vpack.c.bf16 %v2677, %v2677
    %v2681 = vpack.c.bf16 %v2678, %v2678
    %v2682 = vpack.c.bf16 %v2679, %v2679
    %v2683 = vld [vmem:[#allocation10] sm:$0xf]
    %v2684 = vld [vmem:[#allocation10 + $0x4] sm:$0xf]
    %v2685 = vld [vmem:[#allocation10 + $0x8] sm:$0xf]
    %v2686 = vld [vmem:[#allocation10 + $0xc] sm:$0xf]
    %v2687 = vld [vmem:[#allocation10 + $0x10] sm:$0xf]
    %v2688 = vld [vmem:[#allocation10 + $0x14] sm:$0xf]
    %v2689 = vld [vmem:[#allocation10 + $0x18] sm:$0xf]
    %v2690 = vld [vmem:[#allocation10 + $0x1c] sm:$0xf]
    %v2691 = vld [vmem:[#allocation10 + $0x20] sm:$0xf]
    %v2692 = vld [vmem:[#allocation10 + $0x24] sm:$0xf]
    %v2693 = vld [vmem:[#allocation10 + $0x28] sm:$0xf]
    %v2694 = vld [vmem:[#allocation10 + $0x2c] sm:$0xf]
    %v2695 = vld [vmem:[#allocation10 + $0x30] sm:$0xf]
    %v2696 = vld [vmem:[#allocation10 + $0x34] sm:$0xf]
    %v2697 = vld [vmem:[#allocation10 + $0x38] sm:$0xf]
    %v2698 = vld [vmem:[#allocation10 + $0x3c] sm:$0xf]
    %v2699 = vld [vmem:[#allocation10 + $0x40] sm:$0xf]
    %v2700 = vld [vmem:[#allocation10 + $0x44] sm:$0xf]
    %v2701 = vld [vmem:[#allocation10 + $0x48] sm:$0xf]
    %v2702 = vld [vmem:[#allocation10 + $0x4c] sm:$0xf]
    %v2703 = vld [vmem:[#allocation10 + $0x50] sm:$0xf]
    %v2704 = vld [vmem:[#allocation10 + $0x54] sm:$0xf]
    %v2705 = vld [vmem:[#allocation10 + $0x58] sm:$0xf]
    %v2706 = vld [vmem:[#allocation10 + $0x5c] sm:$0xf]
    %v2707 = vld [vmem:[#allocation10 + $0x60] sm:$0xf]
    %v2708 = vld [vmem:[#allocation10 + $0x64] sm:$0xf]
    %v2709 = vld [vmem:[#allocation10 + $0x68] sm:$0xf]
    %v2710 = vld [vmem:[#allocation10 + $0x6c] sm:$0xf]
    %v2711 = vld [vmem:[#allocation10 + $0x70] sm:$0xf]
    %v2712 = vld [vmem:[#allocation10 + $0x74] sm:$0xf]
    %v2713 = vld [vmem:[#allocation10 + $0x78] sm:$0xf]
    %v2714 = vld [vmem:[#allocation10 + $0x7c] sm:$0xf]
    %v2715 = vld [vmem:[#allocation10 + $0x80] sm:$0xf]
    %v2716 = vld [vmem:[#allocation10 + $0x84] sm:$0xf]
    %v2717 = vld [vmem:[#allocation10 + $0x88] sm:$0xf]
    %v2718 = vld [vmem:[#allocation10 + $0x8c] sm:$0xf]
    %v2719 = vld [vmem:[#allocation10 + $0x90] sm:$0xf]
    %v2720 = vld [vmem:[#allocation10 + $0x94] sm:$0xf]
    %v2721 = vld [vmem:[#allocation10 + $0x98] sm:$0xf]
    %v2722 = vld [vmem:[#allocation10 + $0x9c] sm:$0xf]
    %v2723 = vld [vmem:[#allocation10 + $0xa0] sm:$0xf]
    %v2724 = vld [vmem:[#allocation10 + $0xa4] sm:$0xf]
    %v2725 = vld [vmem:[#allocation10 + $0xa8] sm:$0xf]
    %v2726 = vld [vmem:[#allocation10 + $0xac] sm:$0xf]
    %v2727 = vld [vmem:[#allocation10 + $0xb0] sm:$0xf]
    %v2728 = vld [vmem:[#allocation10 + $0xb4] sm:$0xf]
    %v2729 = vld [vmem:[#allocation10 + $0xb8] sm:$0xf]
    %v2730 = vld [vmem:[#allocation10 + $0xbc] sm:$0xf]
    %v2731 = vld [vmem:[#allocation13 + $0x52] ss:$0 sm:$0xff]
    %v2780 = vunpack.c.l.b16 %v2683
    %v2781 = vunpack.c.l.b16 %v2684
    %v2782 = vunpack.c.l.b16 %v2685
    %v2783 = vunpack.c.l.b16 %v2686
    %v2784 = vunpack.c.l.b16 %v2687
    %v2785 = vunpack.c.l.b16 %v2688
    %v2786 = vunpack.c.l.b16 %v2689
    %v2787 = vunpack.c.l.b16 %v2690
    %v2788 = vunpack.c.l.b16 %v2691
    %v2789 = vunpack.c.l.b16 %v2692
    %v2790 = vunpack.c.l.b16 %v2693
    %v2791 = vunpack.c.l.b16 %v2694
    %v2792 = vunpack.c.l.b16 %v2695
    %v2793 = vunpack.c.l.b16 %v2696
    %v2794 = vunpack.c.l.b16 %v2697
    %v2795 = vunpack.c.l.b16 %v2698
    %v2796 = vunpack.c.l.b16 %v2699
    %v2797 = vunpack.c.l.b16 %v2700
    %v2798 = vunpack.c.l.b16 %v2701
    %v2799 = vunpack.c.l.b16 %v2702
    %v2800 = vunpack.c.l.b16 %v2703
    %v2801 = vunpack.c.l.b16 %v2704
    %v2802 = vunpack.c.l.b16 %v2705
    %v2803 = vunpack.c.l.b16 %v2706
    %v2804 = vunpack.c.l.b16 %v2707
    %v2805 = vunpack.c.l.b16 %v2708
    %v2806 = vunpack.c.l.b16 %v2709
    %v2807 = vunpack.c.l.b16 %v2710
    %v2808 = vunpack.c.l.b16 %v2711
    %v2809 = vunpack.c.l.b16 %v2712
    %v2810 = vunpack.c.l.b16 %v2713
    %v2811 = vunpack.c.l.b16 %v2714
    %v2812 = vunpack.c.l.b16 %v2715
    %v2813 = vunpack.c.l.b16 %v2716
    %v2814 = vunpack.c.l.b16 %v2717
    %v2815 = vunpack.c.l.b16 %v2718
    %v2816 = vunpack.c.l.b16 %v2719
    %v2817 = vunpack.c.l.b16 %v2720
    %v2818 = vunpack.c.l.b16 %v2721
    %v2819 = vunpack.c.l.b16 %v2722
    %v2820 = vunpack.c.l.b16 %v2723
    %v2821 = vunpack.c.l.b16 %v2724
    %v2822 = vunpack.c.l.b16 %v2725
    %v2823 = vunpack.c.l.b16 %v2726
    %v2824 = vunpack.c.l.b16 %v2727
    %v2825 = vunpack.c.l.b16 %v2728
    %v2826 = vunpack.c.l.b16 %v2729
    %v2827 = vunpack.c.l.b16 %v2730
    %v2828 = vpack.c.b16 %v2781, %v2780
    %v2829 = vpack.c.b16 %v2783, %v2782
    %v2830 = vpack.c.b16 %v2785, %v2784
    %v2831 = vpack.c.b16 %v2787, %v2786
    %v2832 = vpack.c.b16 %v2789, %v2788
    %v2833 = vpack.c.b16 %v2791, %v2790
    %v2834 = vpack.c.b16 %v2793, %v2792
    %v2835 = vpack.c.b16 %v2795, %v2794
    %v2836 = vpack.c.b16 %v2797, %v2796
    %v2837 = vpack.c.b16 %v2799, %v2798
    %v2838 = vpack.c.b16 %v2801, %v2800
    %v2839 = vpack.c.b16 %v2803, %v2802
    %v2840 = vpack.c.b16 %v2805, %v2804
    %v2841 = vpack.c.b16 %v2807, %v2806
    %v2842 = vpack.c.b16 %v2809, %v2808
    %v2843 = vpack.c.b16 %v2811, %v2810
    %v2844 = vpack.c.b16 %v2813, %v2812
    %v2845 = vpack.c.b16 %v2815, %v2814
    %v2846 = vpack.c.b16 %v2817, %v2816
    %v2847 = vpack.c.b16 %v2819, %v2818
    %v2848 = vpack.c.b16 %v2821, %v2820
    %v2849 = vpack.c.b16 %v2823, %v2822
    %v2850 = vpack.c.b16 %v2825, %v2824
    %v2851 = vpack.c.b16 %v2827, %v2826
    %2876 = vmatprep.subr.bf16.mxu0 0
    %2877 = vmatpush1.bf16.msra.mxu0 %v2835
    %2878 = vmatprep.subr.bf16.mxu0 0
    %2879 = vmatpush1.bf16.msra.mxu0 %v2834
    %2880 = vmatprep.subr.bf16.mxu0 0
    %2881 = vmatpush1.bf16.msra.mxu0 %v2833
    %2882 = vmatprep.subr.bf16.mxu0 0
    %2883 = vmatpush1.bf16.msra.mxu0 %v2832
    %2884 = vmatprep.subr.bf16.mxu0 0
    %2885 = vmatpush1.bf16.msra.mxu0 %v2831
    %2886 = vmatprep.subr.bf16.mxu0 0
    %2887 = vmatpush1.bf16.msra.mxu0 %v2830
    %2888 = vmatprep.subr.bf16.mxu0 0
    %2889 = vmatpush1.bf16.msra.mxu0 %v2829
    %2890 = vmatprep.subr.bf16.mxu0 0
    %2891 = vmatpush1.bf16.msra.mxu0 %v2828
    %2892 = vmatprep.subr.bf16.mxu0 0
    %2893 = vmatpush2.bf16.msra.mxu0 %v2843
    %2894 = vmatprep.subr.bf16.mxu0 0
    %2895 = vmatpush2.bf16.msra.mxu0 %v2842
    %2896 = vmatprep.subr.bf16.mxu0 0
    %2897 = vmatpush2.bf16.msra.mxu0 %v2841
    %2898 = vmatprep.subr.bf16.mxu0 0
    %2899 = vmatpush2.bf16.msra.mxu0 %v2840
    %2900 = vmatprep.subr.bf16.mxu0 0
    %2901 = vmatpush2.bf16.msra.mxu0 %v2839
    %2902 = vmatprep.subr.bf16.mxu0 0
    %2903 = vmatpush2.bf16.msra.mxu0 %v2838
    %2904 = vmatprep.subr.bf16.mxu0 0
    %2905 = vmatpush2.bf16.msra.mxu0 %v2837
    %2906 = vmatprep.subr.bf16.mxu0 0
    %2907 = vmatpush2.bf16.msra.mxu0 %v2836
    %2908 = vmatprep.mubr.bf16.mxu0 %v2681
    %2909 = vmatmul.mubr.bf16.gmra.mxu0 %v2680
    %v2910 = vpop.f32.mrf.mxu0
    %v2911 = vadd.f32 %v2731, %v2910
    %v2912 = vpop.f32.mrf.mxu0
    %v2913 = vpop.f32.mrf.mxu0
    %v2914 = vpop.f32.mrf.mxu0
    %2915 = vdwg.mxu0
    %2916 = vmatprep.subr.bf16.mxu0 0
    %2917 = vmatpush1.bf16.msra.mxu0 %v2851
    %2918 = vmatprep.subr.bf16.mxu0 0
    %2919 = vmatpush1.bf16.msra.mxu0 %v2850
    %2920 = vmatprep.subr.bf16.mxu0 0
    %2921 = vmatpush1.bf16.msra.mxu0 %v2849
    %2922 = vmatprep.subr.bf16.mxu0 0
    %2923 = vmatpush1.bf16.msra.mxu0 %v2848
    %2924 = vmatprep.subr.bf16.mxu0 0
    %2925 = vmatpush1.bf16.msra.mxu0 %v2847
    %2926 = vmatprep.subr.bf16.mxu0 0
    %2927 = vmatpush1.bf16.msra.mxu0 %v2846
    %2928 = vmatprep.subr.bf16.mxu0 0
    %2929 = vmatpush1.bf16.msra.mxu0 %v2845
    %2930 = vmatprep.subr.bf16.mxu0 0
    %2931 = vmatpush1.bf16.msra.mxu0 %v2844
    %2932 = vmatprep.subr.bf16.mxu0 0
    %2933 = vmatpush2.bf16.msra.mxu0 0
    %2934 = vmatprep.subr.bf16.mxu0 0
    %2935 = vmatpush2.bf16.msra.mxu0 0
    %2936 = vmatprep.subr.bf16.mxu0 0
    %2937 = vmatpush2.bf16.msra.mxu0 0
    %2938 = vmatprep.subr.bf16.mxu0 0
    %2939 = vmatpush2.bf16.msra.mxu0 0
    %2940 = vmatprep.subr.bf16.mxu0 0
    %2941 = vmatpush2.bf16.msra.mxu0 0
    %2942 = vmatprep.subr.bf16.mxu0 0
    %2943 = vmatpush2.bf16.msra.mxu0 0
    %2944 = vmatprep.subr.bf16.mxu0 0
    %2945 = vmatpush2.bf16.msra.mxu0 0
    %2946 = vmatprep.subr.bf16.mxu0 0
    %2947 = vmatpush2.bf16.msra.mxu0 0
    %2948 = vmatprep.mubr.bf16.mxu0 0
    %2949 = vmatmul.mubr.bf16.gmra.mxu0 %v2682
    %v2950 = vpop.f32.mrf.mxu0
    %v2951 = vadd.f32 %v2911, %v2950
    %v2952 = vpop.f32.mrf.mxu0
    %v2953 = vpop.f32.mrf.mxu0
    %v2954 = vpop.f32.mrf.mxu0
    %2955 = vdwg.mxu0
    %v2956 = vld [vmem:[#allocation13 + $0x53] ss:$0 sm:$0xff]
    %v2957 = vld [vmem:[#allocation13 + $0x54] ss:$0 sm:$0xff]
    %2958 = vadd.xlane.f32.xlu0 %v2951
    %v2959 = vpop.xlane.xlu0 %2958
    %v2960 = vmul.f32 %v2959, 0.0078125
    %v2961 = vmul.f32 %v2951, %v2951
    %2962 = vadd.xlane.f32.xlu0 %v2961
    %v2963 = vpop.xlane.xlu0 %2962
    %v2964 = vmul.f32 %v2963, 0.0078125
    %v2965 = vmul.f32 %v2960, %v2960
    %v2966 = vsub.f32 %v2964, %v2965
    %v2967 = vmax.f32 %v2966, 0.0
    %v2968 = vadd.f32 %v2967, 1e-05
    %v2969 = vrsqrt.pop %v2968
    %v2970 = vsub.f32 %v2951, %v2960
    %v2971 = vmul.f32 %v2970, %v2969
    %v2972 = vmul.f32 %v2971, %v2956
    %v2973 = vadd.f32 %v2972, %v2957
    %v2974 = vmul.f32 %v2973, %v2973
    %v2975 = vmul.f32 %v2974, %v2973
    %v2976 = vmul.f32 %v2975, 0.044715
    %v2977 = vadd.f32 %v2973, %v2976
    %v2978 = vmul.f32 %v2977, 0.7978846
    %v2979 = vmul.f32 %v2973, 0.5
    %v2980 = vtanh.pop %v2978
    %v2981 = vadd.f32 %v2980, 1.0
    %v2982 = vmul.f32 %v2979, %v2981
    %2983 = vst [vmem:[%s13] sm:$0xff] %v2982
    %v2984 = vpack.c.bf16 %v2982, %v2982
    %v2985 = vld [vmem:[%s9] sm:$0xff]
    %v2986 = vld [vmem:[%s9 + $0x8] sm:$0xf]
    %v2987 = vld [vmem:[%s9 + $0xc] sm:$0xff]
    %v2988 = vld [vmem:[%s9 + $0x14] sm:$0xf]
    %v2989 = vld [vmem:[%s9 + $0x18] sm:$0xff]
    %v2990 = vld [vmem:[%s9 + $0x20] sm:$0xf]
    %v2991 = vld [vmem:[%s9 + $0x24] sm:$0xff]
    %v2992 = vld [vmem:[%s9 + $0x2c] sm:$0xf]
    %v2993 = vld [vmem:[%s9 + $0x30] sm:$0xff]
    %v2994 = vld [vmem:[%s9 + $0x38] sm:$0xf]
    %v2995 = vld [vmem:[%s9 + $0x3c] sm:$0xff]
    %v2996 = vld [vmem:[%s9 + $0x44] sm:$0xf]
    %v2997 = vld [vmem:[%s9 + $0x48] sm:$0xff]
    %v2998 = vld [vmem:[%s9 + $0x50] sm:$0xf]
    %v2999 = vld [vmem:[%s9 + $0x54] sm:$0xff]
    %v3000 = vld [vmem:[%s9 + $0x5c] sm:$0xf]
    %v3001 = vld [vmem:[%s9 + $0x60] sm:$0xff]
    %v3002 = vld [vmem:[%s9 + $0x68] sm:$0xf]
    %v3003 = vld [vmem:[%s9 + $0x6c] sm:$0xff]
    %v3004 = vld [vmem:[%s9 + $0x74] sm:$0xf]
    %v3005 = vld [vmem:[%s9 + $0x78] sm:$0xff]
    %v3006 = vld [vmem:[%s9 + $0x80] sm:$0xf]
    %v3007 = vld [vmem:[%s9 + $0x84] sm:$0xff]
    %v3008 = vld [vmem:[%s9 + $0x8c] sm:$0xf]
    %v3009 = vld [vmem:[%s9 + $0x90] sm:$0xff]
    %v3010 = vld [vmem:[%s9 + $0x98] sm:$0xf]
    %v3011 = vld [vmem:[%s9 + $0x9c] sm:$0xff]
    %v3012 = vld [vmem:[%s9 + $0xa4] sm:$0xf]
    %v3013 = vld [vmem:[%s9 + $0xa8] sm:$0xff]
    %v3014 = vld [vmem:[%s9 + $0xb0] sm:$0xf]
    %v3015 = vld [vmem:[%s9 + $0xb4] sm:$0xff]
    %v3016 = vld [vmem:[%s9 + $0xbc] sm:$0xf]
    %s3017 = scalar_lea.vmem [#allocation13], 85
    %v3018 = vld [vmem:[%s3017] ss:$8 sm:$0x7]
    %v3020 = vlaneseq
    %v3021 = vshrl.u32 %v3020, 7
    %v3022 = vsub.s32 0, %v3021
    %v3023 = vrot.slane %v3018, %v3022
    %v3024 = vlaneseq
    %v3025 = vshrl.u32 %v3024, 7
    %v3026 = vsub.s32 1, %v3025
    %v3027 = vrot.slane %v3018, %v3026
    %v3028 = vlaneseq
    %v3029 = vshrl.u32 %v3028, 7
    %v3030 = vsub.s32 2, %v3029
    %v3031 = vrot.slane %v3018, %v3030
    %v3067 = vunpack.c.l.b16 %v2985
    %v3068 = vunpack.c.h.b16 %v2985
    %v3069 = vunpack.c.l.b16 %v2986
    %v3070 = vunpack.c.l.b16 %v2987
    %v3071 = vunpack.c.h.b16 %v2987
    %v3072 = vunpack.c.l.b16 %v2988
    %v3073 = vunpack.c.l.b16 %v2989
    %v3074 = vunpack.c.h.b16 %v2989
    %v3075 = vunpack.c.l.b16 %v2990
    %v3076 = vunpack.c.l.b16 %v2991
    %v3077 = vunpack.c.h.b16 %v2991
    %v3078 = vunpack.c.l.b16 %v2992
    %v3079 = vunpack.c.l.b16 %v2993
    %v3080 = vunpack.c.h.b16 %v2993
    %v3081 = vunpack.c.l.b16 %v2994
    %v3082 = vunpack.c.l.b16 %v2995
    %v3083 = vunpack.c.h.b16 %v2995
    %v3084 = vunpack.c.l.b16 %v2996
    %v3085 = vunpack.c.l.b16 %v2997
    %v3086 = vunpack.c.h.b16 %v2997
    %v3087 = vunpack.c.l.b16 %v2998
    %v3088 = vunpack.c.l.b16 %v2999
    %v3089 = vunpack.c.h.b16 %v2999
    %v3090 = vunpack.c.l.b16 %v3000
    %v3091 = vunpack.c.l.b16 %v3001
    %v3092 = vunpack.c.h.b16 %v3001
    %v3093 = vunpack.c.l.b16 %v3002
    %v3094 = vunpack.c.l.b16 %v3003
    %v3095 = vunpack.c.h.b16 %v3003
    %v3096 = vunpack.c.l.b16 %v3004
    %v3097 = vunpack.c.l.b16 %v3005
    %v3098 = vunpack.c.h.b16 %v3005
    %v3099 = vunpack.c.l.b16 %v3006
    %v3100 = vunpack.c.l.b16 %v3007
    %v3101 = vunpack.c.h.b16 %v3007
    %v3102 = vunpack.c.l.b16 %v3008
    %v3103 = vunpack.c.l.b16 %v3009
    %v3104 = vunpack.c.h.b16 %v3009
    %v3105 = vunpack.c.l.b16 %v3010
    %v3106 = vunpack.c.l.b16 %v3011
    %v3107 = vunpack.c.h.b16 %v3011
    %v3108 = vunpack.c.l.b16 %v3012
    %v3109 = vunpack.c.l.b16 %v3013
    %v3110 = vunpack.c.h.b16 %v3013
    %v3111 = vunpack.c.l.b16 %v3014
    %v3112 = vunpack.c.l.b16 %v3015
    %v3113 = vunpack.c.h.b16 %v3015
    %v3114 = vunpack.c.l.b16 %v3016
    %v3115 = vpack.c.b16 %v3070, %v3067
    %v3116 = vpack.c.b16 %v3071, %v3068
    %v3117 = vpack.c.b16 %v3072, %v3069
    %v3118 = vpack.c.b16 %v3076, %v3073
    %v3119 = vpack.c.b16 %v3077, %v3074
    %v3120 = vpack.c.b16 %v3078, %v3075
    %v3121 = vpack.c.b16 %v3082, %v3079
    %v3122 = vpack.c.b16 %v3083, %v3080
    %v3123 = vpack.c.b16 %v3084, %v3081
    %v3124 = vpack.c.b16 %v3088, %v3085
    %v3125 = vpack.c.b16 %v3089, %v3086
    %v3126 = vpack.c.b16 %v3090, %v3087
    %v3127 = vpack.c.b16 %v3094, %v3091
    %v3128 = vpack.c.b16 %v3095, %v3092
    %v3129 = vpack.c.b16 %v3096, %v3093
    %v3130 = vpack.c.b16 %v3100, %v3097
    %v3131 = vpack.c.b16 %v3101, %v3098
    %v3132 = vpack.c.b16 %v3102, %v3099
    %v3133 = vpack.c.b16 %v3106, %v3103
    %v3134 = vpack.c.b16 %v3107, %v3104
    %v3135 = vpack.c.b16 %v3108, %v3105
    %v3136 = vpack.c.b16 %v3112, %v3109
    %v3137 = vpack.c.b16 %v3113, %v3110
    %v3138 = vpack.c.b16 %v3114, %v3111
    %3163 = vmatprep.subr.bf16.mxu0 %v3137
    %3164 = vmatpush1.bf16.msra.mxu0 %v3136
    %3165 = vmatprep.subr.bf16.mxu0 %v3134
    %3166 = vmatpush1.bf16.msra.mxu0 %v3133
    %3167 = vmatprep.subr.bf16.mxu0 %v3131
    %3168 = vmatpush1.bf16.msra.mxu0 %v3130
    %3169 = vmatprep.subr.bf16.mxu0 %v3128
    %3170 = vmatpush1.bf16.msra.mxu0 %v3127
    %3171 = vmatprep.subr.bf16.mxu0 %v3125
    %3172 = vmatpush1.bf16.msra.mxu0 %v3124
    %3173 = vmatprep.subr.bf16.mxu0 %v3122
    %3174 = vmatpush1.bf16.msra.mxu0 %v3121
    %3175 = vmatprep.subr.bf16.mxu0 %v3119
    %3176 = vmatpush1.bf16.msra.mxu0 %v3118
    %3177 = vmatprep.subr.bf16.mxu0 %v3116
    %3178 = vmatpush1.bf16.msra.mxu0 %v3115
    %3179 = vmatprep.subr.bf16.mxu0 0
    %3180 = vmatpush2.bf16.msra.mxu0 0
    %3181 = vmatprep.subr.bf16.mxu0 0
    %3182 = vmatpush2.bf16.msra.mxu0 0
    %3183 = vmatprep.subr.bf16.mxu0 0
    %3184 = vmatpush2.bf16.msra.mxu0 0
    %3185 = vmatprep.subr.bf16.mxu0 0
    %3186 = vmatpush2.bf16.msra.mxu0 0
    %3187 = vmatprep.subr.bf16.mxu0 0
    %3188 = vmatpush2.bf16.msra.mxu0 0
    %3189 = vmatprep.subr.bf16.mxu0 0
    %3190 = vmatpush2.bf16.msra.mxu0 0
    %3191 = vmatprep.subr.bf16.mxu0 0
    %3192 = vmatpush2.bf16.msra.mxu0 0
    %3193 = vmatprep.subr.bf16.mxu0 0
    %3194 = vmatpush2.bf16.msra.mxu0 0
    %3195 = vmatprep.mubr.bf16.mxu0 0
    %3196 = vmatmul.mubr.bf16.gmra.mxu0 %v2984
    %v3197 = vpop.f32.mrf.mxu0
    %v3198 = vadd.f32 %v3023, %v3197
    %v3199 = vpop.f32.mrf.mxu0
    %v3200 = vadd.f32 %v3027, %v3199
    %v3201 = vpop.f32.mrf.mxu0
    %v3202 = vpop.f32.mrf.mxu0
    %3203 = vdwg.mxu0
    %3204 = vmatprep.subr.bf16.mxu0 0
    %3205 = vmatpush1.bf16.msra.mxu0 %v3138
    %3206 = vmatprep.subr.bf16.mxu0 0
    %3207 = vmatpush1.bf16.msra.mxu0 %v3135
    %3208 = vmatprep.subr.bf16.mxu0 0
    %3209 = vmatpush1.bf16.msra.mxu0 %v3132
    %3210 = vmatprep.subr.bf16.mxu0 0
    %3211 = vmatpush1.bf16.msra.mxu0 %v3129
    %3212 = vmatprep.subr.bf16.mxu0 0
    %3213 = vmatpush1.bf16.msra.mxu0 %v3126
    %3214 = vmatprep.subr.bf16.mxu0 0
    %3215 = vmatpush1.bf16.msra.mxu0 %v3123
    %3216 = vmatprep.subr.bf16.mxu0 0
    %3217 = vmatpush1.bf16.msra.mxu0 %v3120
    %3218 = vmatprep.subr.bf16.mxu0 0
    %3219 = vmatpush1.bf16.msra.mxu0 %v3117
    %3220 = vmatprep.subr.bf16.mxu0 0
    %3221 = vmatpush2.bf16.msra.mxu0 0
    %3222 = vmatprep.subr.bf16.mxu0 0
    %3223 = vmatpush2.bf16.msra.mxu0 0
    %3224 = vmatprep.subr.bf16.mxu0 0
    %3225 = vmatpush2.bf16.msra.mxu0 0
    %3226 = vmatprep.subr.bf16.mxu0 0
    %3227 = vmatpush2.bf16.msra.mxu0 0
    %3228 = vmatprep.subr.bf16.mxu0 0
    %3229 = vmatpush2.bf16.msra.mxu0 0
    %3230 = vmatprep.subr.bf16.mxu0 0
    %3231 = vmatpush2.bf16.msra.mxu0 0
    %3232 = vmatprep.subr.bf16.mxu0 0
    %3233 = vmatpush2.bf16.msra.mxu0 0
    %3234 = vmatprep.subr.bf16.mxu0 0
    %3235 = vmatpush2.bf16.msra.mxu0 0
    %3236 = vmatprep.mubr.bf16.mxu0 0
    %3237 = vmatmul.mubr.bf16.gmra.mxu0 %v2984
    %v3238 = vpop.f32.mrf.mxu0
    %v3239 = vadd.f32 %v3031, %v3238
    %v3240 = vpop.f32.mrf.mxu0
    %v3241 = vpop.f32.mrf.mxu0
    %v3242 = vpop.f32.mrf.mxu0
    %3243 = vdwg.mxu0
    %s3244 = scalar_lea.vmem [#allocation13], 86
    %v3245 = vld [vmem:[%s3244] ss:$8 sm:$0x7]
    %s3246 = scalar_lea.vmem [#allocation13], 87
    %v3247 = vld [vmem:[%s3246] ss:$8 sm:$0x7]
    %v3248 = vadd.f32 %v3198, %v3200
    %v3249 = vadd.f32 %v3248, %v3239
    %3250 = vadd.xlane.f32.xlu0 %v3249
    %v3251 = vpop.xlane.xlu0 %3250
    %v3252 = vmul.f32 %v3251, 0.003533569
    %v3253 = vmul.f32 %v3198, %v3198
    %v3254 = vmul.f32 %v3200, %v3200
    %v3255 = vmul.f32 %v3239, %v3239
    %v3256 = vadd.f32 %v3253, %v3254
    %v3257 = vadd.f32 %v3256, %v3255
    %3258 = vadd.xlane.f32.xlu0 %v3257
    %v3259 = vpop.xlane.xlu0 %3258
    %v3260 = vmul.f32 %v3259, 0.003533569
    %v3261 = vmul.f32 %v3252, %v3252
    %v3262 = vsub.f32 %v3260, %v3261
    %v3263 = vmax.f32 %v3262, 0.0
    %v3264 = vadd.f32 %v3263, 1e-05
    %v3265 = vrsqrt.pop %v3264
    %v3266 = vsub.f32 %v3198, %v3252
    %v3267 = vsub.f32 %v3200, %v3252
    %v3268 = vsub.f32 %v3239, %v3252
    %v3269 = vmul.f32 %v3266, %v3265
    %v3270 = vmul.f32 %v3267, %v3265
    %v3271 = vmul.f32 %v3268, %v3265
    %v3273 = vlaneseq
    %v3274 = vshrl.u32 %v3273, 7
    %v3275 = vsub.s32 0, %v3274
    %v3276 = vrot.slane %v3245, %v3275
    %v3277 = vlaneseq
    %v3278 = vshrl.u32 %v3277, 7
    %v3279 = vsub.s32 1, %v3278
    %v3280 = vrot.slane %v3245, %v3279
    %v3281 = vlaneseq
    %v3282 = vshrl.u32 %v3281, 7
    %v3283 = vsub.s32 2, %v3282
    %v3284 = vrot.slane %v3245, %v3283
    %v3288 = vmul.f32 %v3269, %v3276
    %v3289 = vmul.f32 %v3270, %v3280
    %v3290 = vmul.f32 %v3271, %v3284
    %v3292 = vlaneseq
    %v3293 = vshrl.u32 %v3292, 7
    %v3294 = vsub.s32 0, %v3293
    %v3295 = vrot.slane %v3247, %v3294
    %v3296 = vlaneseq
    %v3297 = vshrl.u32 %v3296, 7
    %v3298 = vsub.s32 1, %v3297
    %v3299 = vrot.slane %v3247, %v3298
    %v3300 = vlaneseq
    %v3301 = vshrl.u32 %v3300, 7
    %v3302 = vsub.s32 2, %v3301
    %v3303 = vrot.slane %v3247, %v3302
    %v3307 = vadd.f32 %v3288, %v3295
    %v3308 = vadd.f32 %v3289, %v3299
    %v3309 = vadd.f32 %v3290, %v3303
    %v3310 = vmul.f32 %v3307, %v3307
    %v3311 = vmul.f32 %v3308, %v3308
    %v3312 = vmul.f32 %v3309, %v3309
    %v3313 = vmul.f32 %v3310, %v3307
    %v3314 = vmul.f32 %v3311, %v3308
    %v3315 = vmul.f32 %v3312, %v3309
    %v3316 = vmul.f32 %v3313, 0.044715
    %v3317 = vmul.f32 %v3314, 0.044715
    %v3318 = vmul.f32 %v3315, 0.044715
    %v3319 = vadd.f32 %v3307, %v3316
    %v3320 = vadd.f32 %v3308, %v3317
    %v3321 = vadd.f32 %v3309, %v3318
    %v3322 = vmul.f32 %v3319, 0.7978846
    %v3323 = vmul.f32 %v3320, 0.7978846
    %v3324 = vmul.f32 %v3321, 0.7978846
    %v3325 = vmul.f32 %v3307, 0.5
    %v3326 = vmul.f32 %v3308, 0.5
    %v3327 = vmul.f32 %v3309, 0.5
    %v3328 = vtanh.pop %v3322
    %v3329 = vtanh.pop %v3323
    %v3330 = vtanh.pop %v3324
    %v3331 = vadd.f32 %v3328, 1.0
    %v3332 = vadd.f32 %v3329, 1.0
    %v3333 = vadd.f32 %v3330, 1.0
    %v3334 = vmul.f32 %v3325, %v3331
    %v3335 = vmul.f32 %v3326, %v3332
    %v3336 = vmul.f32 %v3327, %v3333
    %v3337 = vpack.c.bf16 %v3334, %v3334
    %v3338 = vpack.c.bf16 %v3335, %v3335
    %v3339 = vpack.c.bf16 %v3336, %v3336
    %v3340 = vld [vmem:[#allocation12] sm:$0xff]
    %v3341 = vld [vmem:[#allocation12 + $0x8] sm:$0xff]
    %v3342 = vld [vmem:[#allocation12 + $0x10] sm:$0xf]
    %v3343 = vld [vmem:[#allocation12 + $0x14] sm:$0xff]
    %v3344 = vld [vmem:[#allocation12 + $0x1c] sm:$0xff]
    %v3345 = vld [vmem:[#allocation12 + $0x24] sm:$0xf]
    %v3346 = vld [vmem:[#allocation12 + $0x28] sm:$0xff]
    %v3347 = vld [vmem:[#allocation12 + $0x30] sm:$0xff]
    %v3348 = vld [vmem:[#allocation12 + $0x38] sm:$0xf]
    %v3349 = vld [vmem:[#allocation12 + $0x3c] sm:$0xff]
    %v3350 = vld [vmem:[#allocation12 + $0x44] sm:$0xff]
    %v3351 = vld [vmem:[#allocation12 + $0x4c] sm:$0xf]
    %v3352 = vld [vmem:[#allocation12 + $0x50] sm:$0xff]
    %v3353 = vld [vmem:[#allocation12 + $0x58] sm:$0xff]
    %v3354 = vld [vmem:[#allocation12 + $0x60] sm:$0xf]
    %v3355 = vld [vmem:[#allocation12 + $0x64] sm:$0xff]
    %v3356 = vld [vmem:[#allocation12 + $0x6c] sm:$0xff]
    %v3357 = vld [vmem:[#allocation12 + $0x74] sm:$0xf]
    %v3358 = vld [vmem:[#allocation12 + $0x78] sm:$0xff]
    %v3359 = vld [vmem:[#allocation12 + $0x80] sm:$0xff]
    %v3360 = vld [vmem:[#allocation12 + $0x88] sm:$0xf]
    %v3361 = vld [vmem:[#allocation12 + $0x8c] sm:$0xff]
    %v3362 = vld [vmem:[#allocation12 + $0x94] sm:$0xff]
    %v3363 = vld [vmem:[#allocation12 + $0x9c] sm:$0xf]
    %v3364 = vld [vmem:[#allocation12 + $0xa0] sm:$0xff]
    %v3365 = vld [vmem:[#allocation12 + $0xa8] sm:$0xff]
    %v3366 = vld [vmem:[#allocation12 + $0xb0] sm:$0xf]
    %v3367 = vld [vmem:[#allocation12 + $0xb4] sm:$0xff]
    %v3368 = vld [vmem:[#allocation12 + $0xbc] sm:$0xff]
    %v3369 = vld [vmem:[#allocation12 + $0xc4] sm:$0xf]
    %v3370 = vld [vmem:[#allocation12 + $0xc8] sm:$0xff]
    %v3371 = vld [vmem:[#allocation12 + $0xd0] sm:$0xff]
    %v3372 = vld [vmem:[#allocation12 + $0xd8] sm:$0xf]
    %v3373 = vld [vmem:[#allocation12 + $0xdc] sm:$0xff]
    %v3374 = vld [vmem:[#allocation12 + $0xe4] sm:$0xff]
    %v3375 = vld [vmem:[#allocation12 + $0xec] sm:$0xf]
    %v3376 = vld [vmem:[#allocation12 + $0xf0] sm:$0xff]
    %v3377 = vld [vmem:[#allocation12 + $0xf8] sm:$0xff]
    %v3378 = vld [vmem:[#allocation12 + $0x100] sm:$0xf]
    %v3379 = vld [vmem:[#allocation12 + $0x104] sm:$0xff]
    %v3380 = vld [vmem:[#allocation12 + $0x10c] sm:$0xff]
    %v3381 = vld [vmem:[#allocation12 + $0x114] sm:$0xf]
    %v3382 = vld [vmem:[#allocation12 + $0x118] sm:$0xff]
    %v3383 = vld [vmem:[#allocation12 + $0x120] sm:$0xff]
    %v3384 = vld [vmem:[#allocation12 + $0x128] sm:$0xf]
    %v3385 = vld [vmem:[#allocation12 + $0x12c] sm:$0xff]
    %v3386 = vld [vmem:[#allocation12 + $0x134] sm:$0xff]
    %v3387 = vld [vmem:[#allocation12 + $0x13c] sm:$0xf]
    %v3388 = vld [vmem:[#allocation12 + $0x140] sm:$0xff]
    %v3389 = vld [vmem:[#allocation12 + $0x148] sm:$0xff]
    %v3390 = vld [vmem:[#allocation12 + $0x150] sm:$0xf]
    %v3391 = vld [vmem:[#allocation12 + $0x154] sm:$0xff]
    %v3392 = vld [vmem:[#allocation12 + $0x15c] sm:$0xff]
    %v3393 = vld [vmem:[#allocation12 + $0x164] sm:$0xf]
    %v3394 = vld [vmem:[#allocation12 + $0x168] sm:$0xff]
    %v3395 = vld [vmem:[#allocation12 + $0x170] sm:$0xff]
    %v3396 = vld [vmem:[#allocation12 + $0x178] sm:$0xf]
    %v3397 = vld [vmem:[#allocation12 + $0x17c] sm:$0xff]
    %v3398 = vld [vmem:[#allocation12 + $0x184] sm:$0xff]
    %v3399 = vld [vmem:[#allocation12 + $0x18c] sm:$0xf]
    %v3400 = vld [vmem:[#allocation12 + $0x190] sm:$0xff]
    %v3401 = vld [vmem:[#allocation12 + $0x198] sm:$0xff]
    %v3402 = vld [vmem:[#allocation12 + $0x1a0] sm:$0xf]
    %v3403 = vld [vmem:[#allocation12 + $0x1a4] sm:$0xff]
    %v3404 = vld [vmem:[#allocation12 + $0x1ac] sm:$0xff]
    %v3405 = vld [vmem:[#allocation12 + $0x1b4] sm:$0xf]
    %v3406 = vld [vmem:[#allocation12 + $0x1b8] sm:$0xff]
    %v3407 = vld [vmem:[#allocation12 + $0x1c0] sm:$0xff]
    %v3408 = vld [vmem:[#allocation12 + $0x1c8] sm:$0xf]
    %v3409 = vld [vmem:[#allocation12 + $0x1cc] sm:$0xff]
    %v3410 = vld [vmem:[#allocation12 + $0x1d4] sm:$0xff]
    %v3411 = vld [vmem:[#allocation12 + $0x1dc] sm:$0xf]
    %v3412 = vld [vmem:[#allocation12 + $0x1e0] sm:$0xff]
    %v3413 = vld [vmem:[#allocation12 + $0x1e8] sm:$0xff]
    %v3414 = vld [vmem:[#allocation12 + $0x1f0] sm:$0xf]
    %v3415 = vld [vmem:[#allocation12 + $0x1f4] sm:$0xff]
    %v3416 = vld [vmem:[#allocation12 + $0x1fc] sm:$0xff]
    %v3417 = vld [vmem:[#allocation12 + $0x204] sm:$0xf]
    %v3418 = vld [vmem:[#allocation12 + $0x208] sm:$0xff]
    %v3419 = vld [vmem:[#allocation12 + $0x210] sm:$0xff]
    %v3420 = vld [vmem:[#allocation12 + $0x218] sm:$0xf]
    %v3421 = vld [vmem:[#allocation12 + $0x21c] sm:$0xff]
    %v3422 = vld [vmem:[#allocation12 + $0x224] sm:$0xff]
    %v3423 = vld [vmem:[#allocation12 + $0x22c] sm:$0xf]
    %v3424 = vld [vmem:[#allocation12 + $0x230] sm:$0xff]
    %v3425 = vld [vmem:[#allocation12 + $0x238] sm:$0xff]
    %v3426 = vld [vmem:[#allocation12 + $0x240] sm:$0xf]
    %v3427 = vld [vmem:[#allocation12 + $0x244] sm:$0xff]
    %v3428 = vld [vmem:[#allocation12 + $0x24c] sm:$0xff]
    %v3429 = vld [vmem:[#allocation12 + $0x254] sm:$0xf]
    %v3430 = vld [vmem:[#allocation12 + $0x258] sm:$0xff]
    %v3431 = vld [vmem:[#allocation12 + $0x260] sm:$0xff]
    %v3432 = vld [vmem:[#allocation12 + $0x268] sm:$0xf]
    %v3433 = vld [vmem:[#allocation12 + $0x26c] sm:$0xff]
    %v3434 = vld [vmem:[#allocation12 + $0x274] sm:$0xff]
    %v3435 = vld [vmem:[#allocation12 + $0x27c] sm:$0xf]
    %v3436 = vld [vmem:[#allocation12 + $0x280] sm:$0xff]
    %v3437 = vld [vmem:[#allocation12 + $0x288] sm:$0xff]
    %v3438 = vld [vmem:[#allocation12 + $0x290] sm:$0xf]
    %v3439 = vld [vmem:[#allocation12 + $0x294] sm:$0xff]
    %v3440 = vld [vmem:[#allocation12 + $0x29c] sm:$0xff]
    %v3441 = vld [vmem:[#allocation12 + $0x2a4] sm:$0xf]
    %v3442 = vld [vmem:[#allocation12 + $0x2a8] sm:$0xff]
    %v3443 = vld [vmem:[#allocation12 + $0x2b0] sm:$0xff]
    %v3444 = vld [vmem:[#allocation12 + $0x2b8] sm:$0xf]
    %v3445 = vld [vmem:[#allocation12 + $0x2bc] sm:$0xff]
    %v3446 = vld [vmem:[#allocation12 + $0x2c4] sm:$0xff]
    %v3447 = vld [vmem:[#allocation12 + $0x2cc] sm:$0xf]
    %v3448 = vld [vmem:[#allocation12 + $0x2d0] sm:$0xff]
    %v3449 = vld [vmem:[#allocation12 + $0x2d8] sm:$0xff]
    %v3450 = vld [vmem:[#allocation12 + $0x2e0] sm:$0xf]
    %v3451 = vld [vmem:[#allocation12 + $0x2e4] sm:$0xff]
    %v3452 = vld [vmem:[#allocation12 + $0x2ec] sm:$0xff]
    %v3453 = vld [vmem:[#allocation12 + $0x2f4] sm:$0xf]
    %v3454 = vld [vmem:[#allocation12 + $0x2f8] sm:$0xff]
    %v3455 = vld [vmem:[#allocation12 + $0x300] sm:$0xff]
    %v3456 = vld [vmem:[#allocation12 + $0x308] sm:$0xf]
    %v3457 = vld [vmem:[#allocation12 + $0x30c] sm:$0xff]
    %v3458 = vld [vmem:[#allocation12 + $0x314] sm:$0xff]
    %v3459 = vld [vmem:[#allocation12 + $0x31c] sm:$0xf]
    %v3460 = vld [vmem:[#allocation12 + $0x320] sm:$0xff]
    %v3461 = vld [vmem:[#allocation12 + $0x328] sm:$0xff]
    %v3462 = vld [vmem:[#allocation12 + $0x330] sm:$0xf]
    %v3463 = vld [vmem:[#allocation12 + $0x334] sm:$0xff]
    %v3464 = vld [vmem:[#allocation12 + $0x33c] sm:$0xff]
    %v3465 = vld [vmem:[#allocation12 + $0x344] sm:$0xf]
    %v3466 = vld [vmem:[#allocation12 + $0x348] sm:$0xff]
    %v3467 = vld [vmem:[#allocation12 + $0x350] sm:$0xff]
    %v3468 = vld [vmem:[#allocation12 + $0x358] sm:$0xf]
    %v3469 = vld [vmem:[#allocation12 + $0x35c] sm:$0xff]
    %v3470 = vld [vmem:[#allocation12 + $0x364] sm:$0xff]
    %v3471 = vld [vmem:[#allocation12 + $0x36c] sm:$0xf]
    %v3472 = vld [vmem:[#allocation12 + $0x370] sm:$0xff]
    %v3473 = vld [vmem:[#allocation12 + $0x378] sm:$0xff]
    %v3474 = vld [vmem:[#allocation12 + $0x380] sm:$0xf]
    %v3475 = vld [vmem:[#allocation12 + $0x384] sm:$0xff]
    %v3476 = vld [vmem:[#allocation12 + $0x38c] sm:$0xff]
    %v3477 = vld [vmem:[#allocation12 + $0x394] sm:$0xf]
    %v3478 = vld [vmem:[#allocation12 + $0x398] sm:$0xff]
    %v3479 = vld [vmem:[#allocation12 + $0x3a0] sm:$0xff]
    %v3480 = vld [vmem:[#allocation12 + $0x3a8] sm:$0xf]
    %v3481 = vld [vmem:[#allocation12 + $0x3ac] sm:$0xff]
    %v3482 = vld [vmem:[#allocation12 + $0x3b4] sm:$0xff]
    %v3483 = vld [vmem:[#allocation12 + $0x3bc] sm:$0xf]
    %s3484 = scalar_lea.vmem [#allocation13], 120
    %v3485 = vld [vmem:[%s3484] ss:$8 sm:$0xf]
    %v3486 = vld [vmem:[%s3484] ss:$8 sm:$0x10]
    %v3487 = vor.u32 %v3485, %v3486
    %v3489 = vlaneseq
    %v3490 = vshrl.u32 %v3489, 7
    %v3491 = vsub.s32 0, %v3490
    %v3492 = vrot.slane %v3487, %v3491
    %v3493 = vlaneseq
    %v3494 = vshrl.u32 %v3493, 7
    %v3495 = vsub.s32 1, %v3494
    %v3496 = vrot.slane %v3487, %v3495
    %v3497 = vlaneseq
    %v3498 = vshrl.u32 %v3497, 7
    %v3499 = vsub.s32 2, %v3498
    %v3500 = vrot.slane %v3487, %v3499
    %v3501 = vlaneseq
    %v3502 = vshrl.u32 %v3501, 7
    %v3503 = vsub.s32 3, %v3502
    %v3504 = vrot.slane %v3487, %v3503
    %v3505 = vlaneseq
    %v3506 = vshrl.u32 %v3505, 7
    %v3507 = vsub.s32 4, %v3506
    %v3508 = vrot.slane %v3487, %v3507
    %v3658 = vunpack.c.l.b16 %v3340
    %v3659 = vunpack.c.h.b16 %v3340
    %v3660 = vunpack.c.l.b16 %v3341
    %v3661 = vunpack.c.h.b16 %v3341
    %v3662 = vunpack.c.l.b16 %v3342
    %v3663 = vunpack.c.l.b16 %v3343
    %v3664 = vunpack.c.h.b16 %v3343
    %v3665 = vunpack.c.l.b16 %v3344
    %v3666 = vunpack.c.h.b16 %v3344
    %v3667 = vunpack.c.l.b16 %v3345
    %v3668 = vunpack.c.l.b16 %v3346
    %v3669 = vunpack.c.h.b16 %v3346
    %v3670 = vunpack.c.l.b16 %v3347
    %v3671 = vunpack.c.h.b16 %v3347
    %v3672 = vunpack.c.l.b16 %v3348
    %v3673 = vunpack.c.l.b16 %v3349
    %v3674 = vunpack.c.h.b16 %v3349
    %v3675 = vunpack.c.l.b16 %v3350
    %v3676 = vunpack.c.h.b16 %v3350
    %v3677 = vunpack.c.l.b16 %v3351
    %v3678 = vunpack.c.l.b16 %v3352
    %v3679 = vunpack.c.h.b16 %v3352
    %v3680 = vunpack.c.l.b16 %v3353
    %v3681 = vunpack.c.h.b16 %v3353
    %v3682 = vunpack.c.l.b16 %v3354
    %v3683 = vunpack.c.l.b16 %v3355
    %v3684 = vunpack.c.h.b16 %v3355
    %v3685 = vunpack.c.l.b16 %v3356
    %v3686 = vunpack.c.h.b16 %v3356
    %v3687 = vunpack.c.l.b16 %v3357
    %v3688 = vunpack.c.l.b16 %v3358
    %v3689 = vunpack.c.h.b16 %v3358
    %v3690 = vunpack.c.l.b16 %v3359
    %v3691 = vunpack.c.h.b16 %v3359
    %v3692 = vunpack.c.l.b16 %v3360
    %v3693 = vunpack.c.l.b16 %v3361
    %v3694 = vunpack.c.h.b16 %v3361
    %v3695 = vunpack.c.l.b16 %v3362
    %v3696 = vunpack.c.h.b16 %v3362
    %v3697 = vunpack.c.l.b16 %v3363
    %v3698 = vunpack.c.l.b16 %v3364
    %v3699 = vunpack.c.h.b16 %v3364
    %v3700 = vunpack.c.l.b16 %v3365
    %v3701 = vunpack.c.h.b16 %v3365
    %v3702 = vunpack.c.l.b16 %v3366
    %v3703 = vunpack.c.l.b16 %v3367
    %v3704 = vunpack.c.h.b16 %v3367
    %v3705 = vunpack.c.l.b16 %v3368
    %v3706 = vunpack.c.h.b16 %v3368
    %v3707 = vunpack.c.l.b16 %v3369
    %v3708 = vunpack.c.l.b16 %v3370
    %v3709 = vunpack.c.h.b16 %v3370
    %v3710 = vunpack.c.l.b16 %v3371
    %v3711 = vunpack.c.h.b16 %v3371
    %v3712 = vunpack.c.l.b16 %v3372
    %v3713 = vunpack.c.l.b16 %v3373
    %v3714 = vunpack.c.h.b16 %v3373
    %v3715 = vunpack.c.l.b16 %v3374
    %v3716 = vunpack.c.h.b16 %v3374
    %v3717 = vunpack.c.l.b16 %v3375
    %v3718 = vunpack.c.l.b16 %v3376
    %v3719 = vunpack.c.h.b16 %v3376
    %v3720 = vunpack.c.l.b16 %v3377
    %v3721 = vunpack.c.h.b16 %v3377
    %v3722 = vunpack.c.l.b16 %v3378
    %v3723 = vunpack.c.l.b16 %v3379
    %v3724 = vunpack.c.h.b16 %v3379
    %v3725 = vunpack.c.l.b16 %v3380
    %v3726 = vunpack.c.h.b16 %v3380
    %v3727 = vunpack.c.l.b16 %v3381
    %v3728 = vunpack.c.l.b16 %v3382
    %v3729 = vunpack.c.h.b16 %v3382
    %v3730 = vunpack.c.l.b16 %v3383
    %v3731 = vunpack.c.h.b16 %v3383
    %v3732 = vunpack.c.l.b16 %v3384
    %v3733 = vunpack.c.l.b16 %v3385
    %v3734 = vunpack.c.h.b16 %v3385
    %v3735 = vunpack.c.l.b16 %v3386
    %v3736 = vunpack.c.h.b16 %v3386
    %v3737 = vunpack.c.l.b16 %v3387
    %v3738 = vunpack.c.l.b16 %v3388
    %v3739 = vunpack.c.h.b16 %v3388
    %v3740 = vunpack.c.l.b16 %v3389
    %v3741 = vunpack.c.h.b16 %v3389
    %v3742 = vunpack.c.l.b16 %v3390
    %v3743 = vunpack.c.l.b16 %v3391
    %v3744 = vunpack.c.h.b16 %v3391
    %v3745 = vunpack.c.l.b16 %v3392
    %v3746 = vunpack.c.h.b16 %v3392
    %v3747 = vunpack.c.l.b16 %v3393
    %v3748 = vunpack.c.l.b16 %v3394
    %v3749 = vunpack.c.h.b16 %v3394
    %v3750 = vunpack.c.l.b16 %v3395
    %v3751 = vunpack.c.h.b16 %v3395
    %v3752 = vunpack.c.l.b16 %v3396
    %v3753 = vunpack.c.l.b16 %v3397
    %v3754 = vunpack.c.h.b16 %v3397
    %v3755 = vunpack.c.l.b16 %v3398
    %v3756 = vunpack.c.h.b16 %v3398
    %v3757 = vunpack.c.l.b16 %v3399
    %v3758 = vunpack.c.l.b16 %v3400
    %v3759 = vunpack.c.h.b16 %v3400
    %v3760 = vunpack.c.l.b16 %v3401
    %v3761 = vunpack.c.h.b16 %v3401
    %v3762 = vunpack.c.l.b16 %v3402
    %v3763 = vunpack.c.l.b16 %v3403
    %v3764 = vunpack.c.h.b16 %v3403
    %v3765 = vunpack.c.l.b16 %v3404
    %v3766 = vunpack.c.h.b16 %v3404
    %v3767 = vunpack.c.l.b16 %v3405
    %v3768 = vunpack.c.l.b16 %v3406
    %v3769 = vunpack.c.h.b16 %v3406
    %v3770 = vunpack.c.l.b16 %v3407
    %v3771 = vunpack.c.h.b16 %v3407
    %v3772 = vunpack.c.l.b16 %v3408
    %v3773 = vunpack.c.l.b16 %v3409
    %v3774 = vunpack.c.h.b16 %v3409
    %v3775 = vunpack.c.l.b16 %v3410
    %v3776 = vunpack.c.h.b16 %v3410
    %v3777 = vunpack.c.l.b16 %v3411
    %v3778 = vunpack.c.l.b16 %v3412
    %v3779 = vunpack.c.h.b16 %v3412
    %v3780 = vunpack.c.l.b16 %v3413
    %v3781 = vunpack.c.h.b16 %v3413
    %v3782 = vunpack.c.l.b16 %v3414
    %v3783 = vunpack.c.l.b16 %v3415
    %v3784 = vunpack.c.h.b16 %v3415
    %v3785 = vunpack.c.l.b16 %v3416
    %v3786 = vunpack.c.h.b16 %v3416
    %v3787 = vunpack.c.l.b16 %v3417
    %v3788 = vunpack.c.l.b16 %v3418
    %v3789 = vunpack.c.h.b16 %v3418
    %v3790 = vunpack.c.l.b16 %v3419
    %v3791 = vunpack.c.h.b16 %v3419
    %v3792 = vunpack.c.l.b16 %v3420
    %v3793 = vunpack.c.l.b16 %v3421
    %v3794 = vunpack.c.h.b16 %v3421
    %v3795 = vunpack.c.l.b16 %v3422
    %v3796 = vunpack.c.h.b16 %v3422
    %v3797 = vunpack.c.l.b16 %v3423
    %v3798 = vunpack.c.l.b16 %v3424
    %v3799 = vunpack.c.h.b16 %v3424
    %v3800 = vunpack.c.l.b16 %v3425
    %v3801 = vunpack.c.h.b16 %v3425
    %v3802 = vunpack.c.l.b16 %v3426
    %v3803 = vunpack.c.l.b16 %v3427
    %v3804 = vunpack.c.h.b16 %v3427
    %v3805 = vunpack.c.l.b16 %v3428
    %v3806 = vunpack.c.h.b16 %v3428
    %v3807 = vunpack.c.l.b16 %v3429
    %v3808 = vunpack.c.l.b16 %v3430
    %v3809 = vunpack.c.h.b16 %v3430
    %v3810 = vunpack.c.l.b16 %v3431
    %v3811 = vunpack.c.h.b16 %v3431
    %v3812 = vunpack.c.l.b16 %v3432
    %v3813 = vunpack.c.l.b16 %v3433
    %v3814 = vunpack.c.h.b16 %v3433
    %v3815 = vunpack.c.l.b16 %v3434
    %v3816 = vunpack.c.h.b16 %v3434
    %v3817 = vunpack.c.l.b16 %v3435
    %v3818 = vunpack.c.l.b16 %v3436
    %v3819 = vunpack.c.h.b16 %v3436
    %v3820 = vunpack.c.l.b16 %v3437
    %v3821 = vunpack.c.h.b16 %v3437
    %v3822 = vunpack.c.l.b16 %v3438
    %v3823 = vunpack.c.l.b16 %v3439
    %v3824 = vunpack.c.h.b16 %v3439
    %v3825 = vunpack.c.l.b16 %v3440
    %v3826 = vunpack.c.h.b16 %v3440
    %v3827 = vunpack.c.l.b16 %v3441
    %v3828 = vunpack.c.l.b16 %v3442
    %v3829 = vunpack.c.h.b16 %v3442
    %v3830 = vunpack.c.l.b16 %v3443
    %v3831 = vunpack.c.h.b16 %v3443
    %v3832 = vunpack.c.l.b16 %v3444
    %v3833 = vunpack.c.l.b16 %v3445
    %v3834 = vunpack.c.h.b16 %v3445
    %v3835 = vunpack.c.l.b16 %v3446
    %v3836 = vunpack.c.h.b16 %v3446
    %v3837 = vunpack.c.l.b16 %v3447
    %v3838 = vunpack.c.l.b16 %v3448
    %v3839 = vunpack.c.h.b16 %v3448
    %v3840 = vunpack.c.l.b16 %v3449
    %v3841 = vunpack.c.h.b16 %v3449
    %v3842 = vunpack.c.l.b16 %v3450
    %v3843 = vunpack.c.l.b16 %v3451
    %v3844 = vunpack.c.h.b16 %v3451
    %v3845 = vunpack.c.l.b16 %v3452
    %v3846 = vunpack.c.h.b16 %v3452
    %v3847 = vunpack.c.l.b16 %v3453
    %v3848 = vunpack.c.l.b16 %v3454
    %v3849 = vunpack.c.h.b16 %v3454
    %v3850 = vunpack.c.l.b16 %v3455
    %v3851 = vunpack.c.h.b16 %v3455
    %v3852 = vunpack.c.l.b16 %v3456
    %v3853 = vunpack.c.l.b16 %v3457
    %v3854 = vunpack.c.h.b16 %v3457
    %v3855 = vunpack.c.l.b16 %v3458
    %v3856 = vunpack.c.h.b16 %v3458
    %v3857 = vunpack.c.l.b16 %v3459
    %v3858 = vunpack.c.l.b16 %v3460
    %v3859 = vunpack.c.h.b16 %v3460
    %v3860 = vunpack.c.l.b16 %v3461
    %v3861 = vunpack.c.h.b16 %v3461
    %v3862 = vunpack.c.l.b16 %v3462
    %v3863 = vunpack.c.l.b16 %v3463
    %v3864 = vunpack.c.h.b16 %v3463
    %v3865 = vunpack.c.l.b16 %v3464
    %v3866 = vunpack.c.h.b16 %v3464
    %v3867 = vunpack.c.l.b16 %v3465
    %v3868 = vunpack.c.l.b16 %v3466
    %v3869 = vunpack.c.h.b16 %v3466
    %v3870 = vunpack.c.l.b16 %v3467
    %v3871 = vunpack.c.h.b16 %v3467
    %v3872 = vunpack.c.l.b16 %v3468
    %v3873 = vunpack.c.l.b16 %v3469
    %v3874 = vunpack.c.h.b16 %v3469
    %v3875 = vunpack.c.l.b16 %v3470
    %v3876 = vunpack.c.h.b16 %v3470
    %v3877 = vunpack.c.l.b16 %v3471
    %v3878 = vunpack.c.l.b16 %v3472
    %v3879 = vunpack.c.h.b16 %v3472
    %v3880 = vunpack.c.l.b16 %v3473
    %v3881 = vunpack.c.h.b16 %v3473
    %v3882 = vunpack.c.l.b16 %v3474
    %v3883 = vunpack.c.l.b16 %v3475
    %v3884 = vunpack.c.h.b16 %v3475
    %v3885 = vunpack.c.l.b16 %v3476
    %v3886 = vunpack.c.h.b16 %v3476
    %v3887 = vunpack.c.l.b16 %v3477
    %v3888 = vunpack.c.l.b16 %v3478
    %v3889 = vunpack.c.h.b16 %v3478
    %v3890 = vunpack.c.l.b16 %v3479
    %v3891 = vunpack.c.h.b16 %v3479
    %v3892 = vunpack.c.l.b16 %v3480
    %v3893 = vunpack.c.l.b16 %v3481
    %v3894 = vunpack.c.h.b16 %v3481
    %v3895 = vunpack.c.l.b16 %v3482
    %v3896 = vunpack.c.h.b16 %v3482
    %v3897 = vunpack.c.l.b16 %v3483
    %v3898 = vpack.c.b16 %v3663, %v3658
    %v3899 = vpack.c.b16 %v3664, %v3659
    %v3900 = vpack.c.b16 %v3665, %v3660
    %v3901 = vpack.c.b16 %v3666, %v3661
    %v3902 = vpack.c.b16 %v3667, %v3662
    %v3903 = vpack.c.b16 %v3673, %v3668
    %v3904 = vpack.c.b16 %v3674, %v3669
    %v3905 = vpack.c.b16 %v3675, %v3670
    %v3906 = vpack.c.b16 %v3676, %v3671
    %v3907 = vpack.c.b16 %v3677, %v3672
    %v3908 = vpack.c.b16 %v3683, %v3678
    %v3909 = vpack.c.b16 %v3684, %v3679
    %v3910 = vpack.c.b16 %v3685, %v3680
    %v3911 = vpack.c.b16 %v3686, %v3681
    %v3912 = vpack.c.b16 %v3687, %v3682
    %v3913 = vpack.c.b16 %v3693, %v3688
    %v3914 = vpack.c.b16 %v3694, %v3689
    %v3915 = vpack.c.b16 %v3695, %v3690
    %v3916 = vpack.c.b16 %v3696, %v3691
    %v3917 = vpack.c.b16 %v3697, %v3692
    %v3918 = vpack.c.b16 %v3703, %v3698
    %v3919 = vpack.c.b16 %v3704, %v3699
    %v3920 = vpack.c.b16 %v3705, %v3700
    %v3921 = vpack.c.b16 %v3706, %v3701
    %v3922 = vpack.c.b16 %v3707, %v3702
    %v3923 = vpack.c.b16 %v3713, %v3708
    %v3924 = vpack.c.b16 %v3714, %v3709
    %v3925 = vpack.c.b16 %v3715, %v3710
    %v3926 = vpack.c.b16 %v3716, %v3711
    %v3927 = vpack.c.b16 %v3717, %v3712
    %v3928 = vpack.c.b16 %v3723, %v3718
    %v3929 = vpack.c.b16 %v3724, %v3719
    %v3930 = vpack.c.b16 %v3725, %v3720
    %v3931 = vpack.c.b16 %v3726, %v3721
    %v3932 = vpack.c.b16 %v3727, %v3722
    %v3933 = vpack.c.b16 %v3733, %v3728
    %v3934 = vpack.c.b16 %v3734, %v3729
    %v3935 = vpack.c.b16 %v3735, %v3730
    %v3936 = vpack.c.b16 %v3736, %v3731
    %v3937 = vpack.c.b16 %v3737, %v3732
    %v3938 = vpack.c.b16 %v3743, %v3738
    %v3939 = vpack.c.b16 %v3744, %v3739
    %v3940 = vpack.c.b16 %v3745, %v3740
    %v3941 = vpack.c.b16 %v3746, %v3741
    %v3942 = vpack.c.b16 %v3747, %v3742
    %v3943 = vpack.c.b16 %v3753, %v3748
    %v3944 = vpack.c.b16 %v3754, %v3749
    %v3945 = vpack.c.b16 %v3755, %v3750
    %v3946 = vpack.c.b16 %v3756, %v3751
    %v3947 = vpack.c.b16 %v3757, %v3752
    %v3948 = vpack.c.b16 %v3763, %v3758
    %v3949 = vpack.c.b16 %v3764, %v3759
    %v3950 = vpack.c.b16 %v3765, %v3760
    %v3951 = vpack.c.b16 %v3766, %v3761
    %v3952 = vpack.c.b16 %v3767, %v3762
    %v3953 = vpack.c.b16 %v3773, %v3768
    %v3954 = vpack.c.b16 %v3774, %v3769
    %v3955 = vpack.c.b16 %v3775, %v3770
    %v3956 = vpack.c.b16 %v3776, %v3771
    %v3957 = vpack.c.b16 %v3777, %v3772
    %v3958 = vpack.c.b16 %v3783, %v3778
    %v3959 = vpack.c.b16 %v3784, %v3779
    %v3960 = vpack.c.b16 %v3785, %v3780
    %v3961 = vpack.c.b16 %v3786, %v3781
    %v3962 = vpack.c.b16 %v3787, %v3782
    %v3963 = vpack.c.b16 %v3793, %v3788
    %v3964 = vpack.c.b16 %v3794, %v3789
    %v3965 = vpack.c.b16 %v3795, %v3790
    %v3966 = vpack.c.b16 %v3796, %v3791
    %v3967 = vpack.c.b16 %v3797, %v3792
    %v3968 = vpack.c.b16 %v3803, %v3798
    %v3969 = vpack.c.b16 %v3804, %v3799
    %v3970 = vpack.c.b16 %v3805, %v3800
    %v3971 = vpack.c.b16 %v3806, %v3801
    %v3972 = vpack.c.b16 %v3807, %v3802
    %v3973 = vpack.c.b16 %v3813, %v3808
    %v3974 = vpack.c.b16 %v3814, %v3809
    %v3975 = vpack.c.b16 %v3815, %v3810
    %v3976 = vpack.c.b16 %v3816, %v3811
    %v3977 = vpack.c.b16 %v3817, %v3812
    %v3978 = vpack.c.b16 %v3823, %v3818
    %v3979 = vpack.c.b16 %v3824, %v3819
    %v3980 = vpack.c.b16 %v3825, %v3820
    %v3981 = vpack.c.b16 %v3826, %v3821
    %v3982 = vpack.c.b16 %v3827, %v3822
    %v3983 = vpack.c.b16 %v3833, %v3828
    %v3984 = vpack.c.b16 %v3834, %v3829
    %v3985 = vpack.c.b16 %v3835, %v3830
    %v3986 = vpack.c.b16 %v3836, %v3831
    %v3987 = vpack.c.b16 %v3837, %v3832
    %v3988 = vpack.c.b16 %v3843, %v3838
    %v3989 = vpack.c.b16 %v3844, %v3839
    %v3990 = vpack.c.b16 %v3845, %v3840
    %v3991 = vpack.c.b16 %v3846, %v3841
    %v3992 = vpack.c.b16 %v3847, %v3842
    %v3993 = vpack.c.b16 %v3853, %v3848
    %v3994 = vpack.c.b16 %v3854, %v3849
    %v3995 = vpack.c.b16 %v3855, %v3850
    %v3996 = vpack.c.b16 %v3856, %v3851
    %v3997 = vpack.c.b16 %v3857, %v3852
    %v3998 = vpack.c.b16 %v3863, %v3858
    %v3999 = vpack.c.b16 %v3864, %v3859
    %v4000 = vpack.c.b16 %v3865, %v3860
    %v4001 = vpack.c.b16 %v3866, %v3861
    %v4002 = vpack.c.b16 %v3867, %v3862
    %v4003 = vpack.c.b16 %v3873, %v3868
    %v4004 = vpack.c.b16 %v3874, %v3869
    %v4005 = vpack.c.b16 %v3875, %v3870
    %v4006 = vpack.c.b16 %v3876, %v3871
    %v4007 = vpack.c.b16 %v3877, %v3872
    %v4008 = vpack.c.b16 %v3883, %v3878
    %v4009 = vpack.c.b16 %v3884, %v3879
    %v4010 = vpack.c.b16 %v3885, %v3880
    %v4011 = vpack.c.b16 %v3886, %v3881
    %v4012 = vpack.c.b16 %v3887, %v3882
    %v4013 = vpack.c.b16 %v3893, %v3888
    %v4014 = vpack.c.b16 %v3894, %v3889
    %v4015 = vpack.c.b16 %v3895, %v3890
    %v4016 = vpack.c.b16 %v3896, %v3891
    %v4017 = vpack.c.b16 %v3897, %v3892
    %4138 = vmatprep.subr.bf16.mxu0 %v3934
    %4139 = vmatpush1.bf16.msra.mxu0 %v3933
    %4140 = vmatprep.subr.bf16.mxu0 %v3929
    %4141 = vmatpush1.bf16.msra.mxu0 %v3928
    %4142 = vmatprep.subr.bf16.mxu0 %v3924
    %4143 = vmatpush1.bf16.msra.mxu0 %v3923
    %4144 = vmatprep.subr.bf16.mxu0 %v3919
    %4145 = vmatpush1.bf16.msra.mxu0 %v3918
    %4146 = vmatprep.subr.bf16.mxu0 %v3914
    %4147 = vmatpush1.bf16.msra.mxu0 %v3913
    %4148 = vmatprep.subr.bf16.mxu0 %v3909
    %4149 = vmatpush1.bf16.msra.mxu0 %v3908
    %4150 = vmatprep.subr.bf16.mxu0 %v3904
    %4151 = vmatpush1.bf16.msra.mxu0 %v3903
    %4152 = vmatprep.subr.bf16.mxu0 %v3899
    %4153 = vmatpush1.bf16.msra.mxu0 %v3898
    %4154 = vmatprep.subr.bf16.mxu0 %v3974
    %4155 = vmatpush2.bf16.msra.mxu0 %v3973
    %4156 = vmatprep.subr.bf16.mxu0 %v3969
    %4157 = vmatpush2.bf16.msra.mxu0 %v3968
    %4158 = vmatprep.subr.bf16.mxu0 %v3964
    %4159 = vmatpush2.bf16.msra.mxu0 %v3963
    %4160 = vmatprep.subr.bf16.mxu0 %v3959
    %4161 = vmatpush2.bf16.msra.mxu0 %v3958
    %4162 = vmatprep.subr.bf16.mxu0 %v3954
    %4163 = vmatpush2.bf16.msra.mxu0 %v3953
    %4164 = vmatprep.subr.bf16.mxu0 %v3949
    %4165 = vmatpush2.bf16.msra.mxu0 %v3948
    %4166 = vmatprep.subr.bf16.mxu0 %v3944
    %4167 = vmatpush2.bf16.msra.mxu0 %v3943
    %4168 = vmatprep.subr.bf16.mxu0 %v3939
    %4169 = vmatpush2.bf16.msra.mxu0 %v3938
    %4170 = vmatprep.mubr.bf16.mxu0 %v3338
    %4171 = vmatmul.mubr.bf16.gmra.mxu0 %v3337
    %v4172 = vpop.f32.mrf.mxu0
    %v4173 = vadd.f32 %v3492, %v4172
    %v4174 = vpop.f32.mrf.mxu0
    %v4175 = vadd.f32 %v3496, %v4174
    %v4176 = vpop.f32.mrf.mxu0
    %v4177 = vpop.f32.mrf.mxu0
    %4178 = vdwg.mxu0
    %4179 = vmatprep.subr.bf16.mxu0 %v4014
    %4180 = vmatpush1.bf16.msra.mxu0 %v4013
    %4181 = vmatprep.subr.bf16.mxu0 %v4009
    %4182 = vmatpush1.bf16.msra.mxu0 %v4008
    %4183 = vmatprep.subr.bf16.mxu0 %v4004
    %4184 = vmatpush1.bf16.msra.mxu0 %v4003
    %4185 = vmatprep.subr.bf16.mxu0 %v3999
    %4186 = vmatpush1.bf16.msra.mxu0 %v3998
    %4187 = vmatprep.subr.bf16.mxu0 %v3994
    %4188 = vmatpush1.bf16.msra.mxu0 %v3993
    %4189 = vmatprep.subr.bf16.mxu0 %v3989
    %4190 = vmatpush1.bf16.msra.mxu0 %v3988
    %4191 = vmatprep.subr.bf16.mxu0 %v3984
    %4192 = vmatpush1.bf16.msra.mxu0 %v3983
    %4193 = vmatprep.subr.bf16.mxu0 %v3979
    %4194 = vmatpush1.bf16.msra.mxu0 %v3978
    %4195 = vmatprep.subr.bf16.mxu0 0
    %4196 = vmatpush2.bf16.msra.mxu0 0
    %4197 = vmatprep.subr.bf16.mxu0 0
    %4198 = vmatpush2.bf16.msra.mxu0 0
    %4199 = vmatprep.subr.bf16.mxu0 0
    %4200 = vmatpush2.bf16.msra.mxu0 0
    %4201 = vmatprep.subr.bf16.mxu0 0
    %4202 = vmatpush2.bf16.msra.mxu0 0
    %4203 = vmatprep.subr.bf16.mxu0 0
    %4204 = vmatpush2.bf16.msra.mxu0 0
    %4205 = vmatprep.subr.bf16.mxu0 0
    %4206 = vmatpush2.bf16.msra.mxu0 0
    %4207 = vmatprep.subr.bf16.mxu0 0
    %4208 = vmatpush2.bf16.msra.mxu0 0
    %4209 = vmatprep.subr.bf16.mxu0 0
    %4210 = vmatpush2.bf16.msra.mxu0 0
    %4211 = vmatprep.mubr.bf16.mxu0 0
    %4212 = vmatmul.mubr.bf16.gmra.mxu0 %v3339
    %v4213 = vpop.f32.mrf.mxu0
    %v4214 = vadd.f32 %v4173, %v4213
    %v4215 = vpop.f32.mrf.mxu0
    %v4216 = vadd.f32 %v4175, %v4215
    %v4217 = vpop.f32.mrf.mxu0
    %v4218 = vpop.f32.mrf.mxu0
    %4219 = vdwg.mxu0
    %4220 = vmatprep.subr.bf16.mxu0 %v3936
    %4221 = vmatpush1.bf16.msra.mxu0 %v3935
    %4222 = vmatprep.subr.bf16.mxu0 %v3931
    %4223 = vmatpush1.bf16.msra.mxu0 %v3930
    %4224 = vmatprep.subr.bf16.mxu0 %v3926
    %4225 = vmatpush1.bf16.msra.mxu0 %v3925
    %4226 = vmatprep.subr.bf16.mxu0 %v3921
    %4227 = vmatpush1.bf16.msra.mxu0 %v3920
    %4228 = vmatprep.subr.bf16.mxu0 %v3916
    %4229 = vmatpush1.bf16.msra.mxu0 %v3915
    %4230 = vmatprep.subr.bf16.mxu0 %v3911
    %4231 = vmatpush1.bf16.msra.mxu0 %v3910
    %4232 = vmatprep.subr.bf16.mxu0 %v3906
    %4233 = vmatpush1.bf16.msra.mxu0 %v3905
    %4234 = vmatprep.subr.bf16.mxu0 %v3901
    %4235 = vmatpush1.bf16.msra.mxu0 %v3900
    %4236 = vmatprep.subr.bf16.mxu0 %v3976
    %4237 = vmatpush2.bf16.msra.mxu0 %v3975
    %4238 = vmatprep.subr.bf16.mxu0 %v3971
    %4239 = vmatpush2.bf16.msra.mxu0 %v3970
    %4240 = vmatprep.subr.bf16.mxu0 %v3966
    %4241 = vmatpush2.bf16.msra.mxu0 %v3965
    %4242 = vmatprep.subr.bf16.mxu0 %v3961
    %4243 = vmatpush2.bf16.msra.mxu0 %v3960
    %4244 = vmatprep.subr.bf16.mxu0 %v3956
    %4245 = vmatpush2.bf16.msra.mxu0 %v3955
    %4246 = vmatprep.subr.bf16.mxu0 %v3951
    %4247 = vmatpush2.bf16.msra.mxu0 %v3950
    %4248 = vmatprep.subr.bf16.mxu0 %v3946
    %4249 = vmatpush2.bf16.msra.mxu0 %v3945
    %4250 = vmatprep.subr.bf16.mxu0 %v3941
    %4251 = vmatpush2.bf16.msra.mxu0 %v3940
    %4252 = vmatprep.mubr.bf16.mxu0 %v3338
    %4253 = vmatmul.mubr.bf16.gmra.mxu0 %v3337
    %v4254 = vpop.f32.mrf.mxu0
    %v4255 = vadd.f32 %v3500, %v4254
    %v4256 = vpop.f32.mrf.mxu0
    %v4257 = vadd.f32 %v3504, %v4256
    %v4258 = vpop.f32.mrf.mxu0
    %v4259 = vpop.f32.mrf.mxu0
    %4260 = vdwg.mxu0
    %4261 = vmatprep.subr.bf16.mxu0 %v4016
    %4262 = vmatpush1.bf16.msra.mxu0 %v4015
    %4263 = vmatprep.subr.bf16.mxu0 %v4011
    %4264 = vmatpush1.bf16.msra.mxu0 %v4010
    %4265 = vmatprep.subr.bf16.mxu0 %v4006
    %4266 = vmatpush1.bf16.msra.mxu0 %v4005
    %4267 = vmatprep.subr.bf16.mxu0 %v4001
    %4268 = vmatpush1.bf16.msra.mxu0 %v4000
    %4269 = vmatprep.subr.bf16.mxu0 %v3996
    %4270 = vmatpush1.bf16.msra.mxu0 %v3995
    %4271 = vmatprep.subr.bf16.mxu0 %v3991
    %4272 = vmatpush1.bf16.msra.mxu0 %v3990
    %4273 = vmatprep.subr.bf16.mxu0 %v3986
    %4274 = vmatpush1.bf16.msra.mxu0 %v3985
    %4275 = vmatprep.subr.bf16.mxu0 %v3981
    %4276 = vmatpush1.bf16.msra.mxu0 %v3980
    %4277 = vmatprep.subr.bf16.mxu0 0
    %4278 = vmatpush2.bf16.msra.mxu0 0
    %4279 = vmatprep.subr.bf16.mxu0 0
    %4280 = vmatpush2.bf16.msra.mxu0 0
    %4281 = vmatprep.subr.bf16.mxu0 0
    %4282 = vmatpush2.bf16.msra.mxu0 0
    %4283 = vmatprep.subr.bf16.mxu0 0
    %4284 = vmatpush2.bf16.msra.mxu0 0
    %4285 = vmatprep.subr.bf16.mxu0 0
    %4286 = vmatpush2.bf16.msra.mxu0 0
    %4287 = vmatprep.subr.bf16.mxu0 0
    %4288 = vmatpush2.bf16.msra.mxu0 0
    %4289 = vmatprep.subr.bf16.mxu0 0
    %4290 = vmatpush2.bf16.msra.mxu0 0
    %4291 = vmatprep.subr.bf16.mxu0 0
    %4292 = vmatpush2.bf16.msra.mxu0 0
    %4293 = vmatprep.mubr.bf16.mxu0 0
    %4294 = vmatmul.mubr.bf16.gmra.mxu0 %v3339
    %v4295 = vpop.f32.mrf.mxu0
    %v4296 = vadd.f32 %v4255, %v4295
    %v4297 = vpop.f32.mrf.mxu0
    %v4298 = vadd.f32 %v4257, %v4297
    %v4299 = vpop.f32.mrf.mxu0
    %v4300 = vpop.f32.mrf.mxu0
    %4301 = vdwg.mxu0
    %4302 = vmatprep.subr.bf16.mxu0 0
    %4303 = vmatpush1.bf16.msra.mxu0 %v3937
    %4304 = vmatprep.subr.bf16.mxu0 0
    %4305 = vmatpush1.bf16.msra.mxu0 %v3932
    %4306 = vmatprep.subr.bf16.mxu0 0
    %4307 = vmatpush1.bf16.msra.mxu0 %v3927
    %4308 = vmatprep.subr.bf16.mxu0 0
    %4309 = vmatpush1.bf16.msra.mxu0 %v3922
    %4310 = vmatprep.subr.bf16.mxu0 0
    %4311 = vmatpush1.bf16.msra.mxu0 %v3917
    %4312 = vmatprep.subr.bf16.mxu0 0
    %4313 = vmatpush1.bf16.msra.mxu0 %v3912
    %4314 = vmatprep.subr.bf16.mxu0 0
    %4315 = vmatpush1.bf16.msra.mxu0 %v3907
    %4316 = vmatprep.subr.bf16.mxu0 0
    %4317 = vmatpush1.bf16.msra.mxu0 %v3902
    %4318 = vmatprep.subr.bf16.mxu0 0
    %4319 = vmatpush2.bf16.msra.mxu0 %v3977
    %4320 = vmatprep.subr.bf16.mxu0 0
    %4321 = vmatpush2.bf16.msra.mxu0 %v3972
    %4322 = vmatprep.subr.bf16.mxu0 0
    %4323 = vmatpush2.bf16.msra.mxu0 %v3967
    %4324 = vmatprep.subr.bf16.mxu0 0
    %4325 = vmatpush2.bf16.msra.mxu0 %v3962
    %4326 = vmatprep.subr.bf16.mxu0 0
    %4327 = vmatpush2.bf16.msra.mxu0 %v3957
    %4328 = vmatprep.subr.bf16.mxu0 0
    %4329 = vmatpush2.bf16.msra.mxu0 %v3952
    %4330 = vmatprep.subr.bf16.mxu0 0
    %4331 = vmatpush2.bf16.msra.mxu0 %v3947
    %4332 = vmatprep.subr.bf16.mxu0 0
    %4333 = vmatpush2.bf16.msra.mxu0 %v3942
    %4334 = vmatprep.mubr.bf16.mxu0 %v3338
    %4335 = vmatmul.mubr.bf16.gmra.mxu0 %v3337
    %v4336 = vpop.f32.mrf.mxu0
    %v4337 = vadd.f32 %v3508, %v4336
    %v4338 = vpop.f32.mrf.mxu0
    %v4339 = vpop.f32.mrf.mxu0
    %v4340 = vpop.f32.mrf.mxu0
    %4341 = vdwg.mxu0
    %4342 = vmatprep.subr.bf16.mxu0 0
    %4343 = vmatpush1.bf16.msra.mxu0 %v4017
    %4344 = vmatprep.subr.bf16.mxu0 0
    %4345 = vmatpush1.bf16.msra.mxu0 %v4012
    %4346 = vmatprep.subr.bf16.mxu0 0
    %4347 = vmatpush1.bf16.msra.mxu0 %v4007
    %4348 = vmatprep.subr.bf16.mxu0 0
    %4349 = vmatpush1.bf16.msra.mxu0 %v4002
    %4350 = vmatprep.subr.bf16.mxu0 0
    %4351 = vmatpush1.bf16.msra.mxu0 %v3997
    %4352 = vmatprep.subr.bf16.mxu0 0
    %4353 = vmatpush1.bf16.msra.mxu0 %v3992
    %4354 = vmatprep.subr.bf16.mxu0 0
    %4355 = vmatpush1.bf16.msra.mxu0 %v3987
    %4356 = vmatprep.subr.bf16.mxu0 0
    %4357 = vmatpush1.bf16.msra.mxu0 %v3982
    %4358 = vmatprep.subr.bf16.mxu0 0
    %4359 = vmatpush2.bf16.msra.mxu0 0
    %4360 = vmatprep.subr.bf16.mxu0 0
    %4361 = vmatpush2.bf16.msra.mxu0 0
    %4362 = vmatprep.subr.bf16.mxu0 0
    %4363 = vmatpush2.bf16.msra.mxu0 0
    %4364 = vmatprep.subr.bf16.mxu0 0
    %4365 = vmatpush2.bf16.msra.mxu0 0
    %4366 = vmatprep.subr.bf16.mxu0 0
    %4367 = vmatpush2.bf16.msra.mxu0 0
    %4368 = vmatprep.subr.bf16.mxu0 0
    %4369 = vmatpush2.bf16.msra.mxu0 0
    %4370 = vmatprep.subr.bf16.mxu0 0
    %4371 = vmatpush2.bf16.msra.mxu0 0
    %4372 = vmatprep.subr.bf16.mxu0 0
    %4373 = vmatpush2.bf16.msra.mxu0 0
    %4374 = vmatprep.mubr.bf16.mxu0 0
    %4375 = vmatmul.mubr.bf16.gmra.mxu0 %v3339
    %v4376 = vpop.f32.mrf.mxu0
    %v4377 = vadd.f32 %v4337, %v4376
    %v4378 = vpop.f32.mrf.mxu0
    %v4379 = vpop.f32.mrf.mxu0
    %v4380 = vpop.f32.mrf.mxu0
    %4381 = vdwg.mxu0
    %4382 = vst [vmem:[%s14] sm:$0xff] %v4214
    %4383 = vst [vmem:[%s14 + $0x8] sm:$0xff] %v4216
    %4384 = vst [vmem:[%s14 + $0x10] sm:$0xff] %v4296
    %4385 = vst [vmem:[%s14 + $0x18] sm:$0xff] %v4298
    %4386 = vst [vmem:[%s14 + $0x20] sm:$0xff] %v4377
    // Predicated region
    $region82: #{_lambda_.1} parent=1 // pred_check
      _
    $region83: #{_lambda_.1} parent=1 // pred_check_branch
      %4388 = sbr.rel (0) target = $region85
    $region84: #{_lambda_.1} parent=1 // pred_region
      _
    $region85: #{_lambda_.1} parent=1 // pred_fallthru
      _
    // Predicated region
    $region86: #{_lambda_.1} parent=1 // pred_check
      _
    $region87: #{_lambda_.1} parent=1 // pred_check_branch
      %4390 = sbr.rel (0) target = $region89
    $region88: #{_lambda_.1} parent=1 // pred_region
      _
    $region89: #{_lambda_.1} parent=1 // pred_fallthru
      _
    // Predicated region
    $region90: #{_lambda_.1} parent=1 // pred_check
      _
    $region91: #{_lambda_.1} parent=1 // pred_check_branch
      %4392 = sbr.rel (0) target = $region93
    $region92: #{_lambda_.1} parent=1 // pred_region
      _
    $region93: #{_lambda_.1} parent=1 // pred_fallthru
      _
    // Predicated region
    $region94: #{_lambda_.1} parent=1 // pred_check
      _
    $region95: #{_lambda_.1} parent=1 // pred_check_branch
      %4394 = sbr.rel (0) target = $region97
    $region96: #{_lambda_.1} parent=1 // pred_region
      _
    $region97: #{_lambda_.1} parent=1 // pred_fallthru
      _
    // Predicated region
    $region98: #{_lambda_.1} parent=1 // pred_check
      _
    $region99: #{_lambda_.1} parent=1 // pred_check_branch
      %4396 = sbr.rel (0) target = $region101
    $region100: #{_lambda_.1} parent=1 // pred_region
      _
    $region101: #{_lambda_.1} parent=1 // pred_fallthru
      _
    // Predicated region
    $region102: #{_lambda_.1} parent=1 // pred_check
      _
    $region103: #{_lambda_.1} parent=1 // pred_check_branch
      %4398 = sbr.rel (0) target = $region105
    $region104: #{_lambda_.1} parent=1 // pred_region
      _
    $region105: #{_lambda_.1} parent=1 // pred_fallthru
      _
    %4399 = vsyncpa [#allocation3], 1
    %4400 = vsyncpa [#allocation5], 1
    %4401 = vsyncpa [#allocation8], 1
    %4402 = vsyncpa [#allocation11], 1
    %4403 = vsyncpa [#allocation14], 1

</llo_original>
